<compile_context>
chip_gen: v6e
topology: v6e:2x2x1
jax: 0.10.0
libtpu: 0.0.40
codegen_flags: <defaults>
</compile_context>

<pallas_src>
import jax
import jax.numpy as jnp
from jax.experimental import pallas as pl
from jax.experimental.pallas import tpu as pltpu

IN_FEATURES = 9216
OUT_FEATURES = 128


# ----------------------------- kernels --------------------------------------


def _fc1_relu_kernel(x_ref, w_ref, b_ref, o_ref):
    """Single-shot (full K resident): dot + bias + ReLU, stored directly."""
    x_bf = x_ref[...].astype(jnp.bfloat16)          # in-kernel cast (VPU, hidden under W DMA)
    y = jnp.dot(x_bf, w_ref[...], preferred_element_type=jnp.float32)
    y = y + b_ref[...]                               # bias (1, N) broadcast over rows
    o_ref[...] = jnp.maximum(y, 0.0).astype(o_ref.dtype)
    # Dropout(p=0.5) in eval mode == identity.


def _fc1_partial_kernel(x_ref, w_ref, o_ref):
    """Half-K partial product (one TensorCore's share on v7x)."""
    x_bf = x_ref[...].astype(jnp.bfloat16)
    y = jnp.dot(x_bf, w_ref[...], preferred_element_type=jnp.float32)
    o_ref[...] = y[None].astype(o_ref.dtype)         # (1, tm, N) partial slab


# ----------------------------- wrappers --------------------------------------


def _num_tensorcores_per_chip() -> int:
    """2 on v7x (megacore sharding of 'parallel' grid axes), else 1."""
    try:
        kind = jax.devices()[0].device_kind.lower()
    except Exception:
        return 1
    return 2 if "v7" in kind else 1


def _forward_single_core(x, w_bf, b2d, tm):
    """v5e / v6e: one TC, single K step, bias+ReLU fused in-kernel."""
    B, K = x.shape
    N = w_bf.shape[1]
    cost = pl.CostEstimate(
        flops=2 * B * K * N,
        transcendentals=0,
        bytes_accessed=4 * B * K + 2 * K * N + 4 * N + 4 * B * N,
    )
    return pl.pallas_call(
        _fc1_relu_kernel,
        out_shape=jax.ShapeDtypeStruct((B, N), jnp.float32),
        grid_spec=pltpu.PrefetchScalarGridSpec(
            num_scalar_prefetch=0,
            grid=(B // tm,),                               # M tiling (1 step at toy batch)
            in_specs=[
                pl.BlockSpec((tm, K), lambda i: (i, 0)),   # x tile, f32
                pl.BlockSpec((K, N), lambda i: (0, 0)),    # full W, bf16
                pl.BlockSpec((1, N), lambda i: (0, 0)),    # bias
            ],
            out_specs=pl.BlockSpec((tm, N), lambda i: (i, 0)),
        ),
        compiler_params=pltpu.CompilerParams(
            dimension_semantics=("parallel",),
        ),
        cost_estimate=cost,
    )(x, w_bf, b2d)


def _forward_megacore(x, w_bf, b2d, tm):
    """v7x: 2-way 'parallel' K split -> each TC streams half of W."""
    B, K = x.shape
    N = w_bf.shape[1]
    kh = K // 2
    cost = pl.CostEstimate(
        flops=2 * B * K * N,
        transcendentals=0,
        bytes_accessed=4 * B * K + 2 * K * N + 2 * 4 * B * N,
    )
    partials = pl.pallas_call(
        _fc1_partial_kernel,
        out_shape=jax.ShapeDtypeStruct((2, B, N), jnp.float32),
        grid_spec=pltpu.PrefetchScalarGridSpec(
            num_scalar_prefetch=0,
            grid=(B // tm, 2),                                   # (M tiles, K halves)
            in_specs=[
                pl.BlockSpec((tm, kh), lambda i, k: (i, k)),     # x half-K tile, f32
                pl.BlockSpec((kh, N), lambda i, k: (k, 0)),      # W half, bf16
            ],
            out_specs=pl.BlockSpec((1, tm, N), lambda i, k: (k, i, 0)),
        ),
        compiler_params=pltpu.CompilerParams(
            dimension_semantics=("parallel", "parallel"),
        ),
        cost_estimate=cost,
    )(x, w_bf)
    # Tiny epilogue (fused by XLA under jit): partial sum + bias + ReLU.
    return jnp.maximum(partials[0] + partials[1] + b2d, 0.0)


def net2_forward(x, w_bf, b):
    """x: (B, 9216) f32, w_bf: (9216, 128) bf16 (persisted), b: (128,) -> (B, 128) f32."""
    B, K = x.shape
    Kw, N = w_bf.shape
    assert K == Kw == IN_FEATURES and N == OUT_FEATURES
    assert w_bf.dtype == jnp.bfloat16, "weight must be persisted in bf16 (see _init_params)"
    assert B % 8 == 0, "batch must be a multiple of 8 (TPU sublane tiling)"

    tm = B if B <= 128 else 128          # keep VMEM flat if batch is scaled up
    assert B % tm == 0

    b2d = b.astype(jnp.float32).reshape(1, N)

    if _num_tensorcores_per_chip() >= 2:
        return _forward_megacore(x, w_bf, b2d, tm)
    return _forward_single_core(x, w_bf, b2d, tm)


# ----------------------------- init & test -----------------------------------


def _init_params(key):
    """Deterministic init mimicking nn.Linear default (uniform +-1/sqrt(fan_in)).

    The weight is cast to bf16 ONCE here (outside the hot path) so no per-call
    convert HLO touches the dominant 2.4 MB weight stream.
    """
    kw, kb = jax.random.split(key)
    bound = 1.0 / (IN_FEATURES ** 0.5)
    w = jax.random.uniform(kw, (IN_FEATURES, OUT_FEATURES), jnp.float32, -bound, bound)
    b = jax.random.uniform(kb, (OUT_FEATURES,), jnp.float32, -bound, bound)
    return w.astype(jnp.bfloat16), b


if __name__ == "__main__":
    key = jax.random.PRNGKey(0)
    kx, kp = jax.random.split(key)

    batch = 8  # small batch; feature dim 9216 is fixed by the module
    x = jax.random.normal(kx, (batch, IN_FEATURES), jnp.float32)
    w_bf, b = _init_params(kp)

    fwd = jax.jit(net2_forward)
    out = jax.block_until_ready(fwd(x, w_bf, b))

    # Reference with matching precision (bf16 operands, f32 accumulation);
    # eval-mode dropout == identity.
    ref = jnp.maximum(
        jnp.dot(x.astype(jnp.bfloat16), w_bf, preferred_element_type=jnp.float32) + b,
        0.0,
    )
    assert out.shape == (batch, OUT_FEATURES)
    assert out.dtype == jnp.float32
    assert jnp.allclose(out, ref, atol=1e-2, rtol=1e-2)

    print("KERNEL_OK")
</pallas_src>

<mosaic_0001>
module attributes {stable_mosaic.version = 11 : i64} {
  func.func @_fc1_relu_kernel(%arg0: i32, %arg1: memref<8x9216xf32, #tpu.memory_space<vmem>>, %arg2: memref<9216x128xbf16, #tpu.memory_space<vmem>>, %arg3: memref<1x128xf32, #tpu.memory_space<vmem>>, %arg4: memref<8x128xf32, #tpu.memory_space<vmem>>) attributes {dimension_semantics = [#tpu.dimension_semantics<parallel>], iteration_bounds = array<i64: 1>, scalar_prefetch = 0 : i64, scratch_operands = 0 : i64, tpu.core_type = #tpu.core_type<tc>, window_params = [{transform_indices = @transform_0, window_bounds = array<i64: 8, 9216>}, {pipeline_mode = #tpu.pipeline_mode<synchronous>, transform_indices = @transform_1, window_bounds = array<i64: 9216, 128>}, {pipeline_mode = #tpu.pipeline_mode<synchronous>, transform_indices = @transform_2, window_bounds = array<i64: 1, 128>}, {transform_indices = @transform_3, window_bounds = array<i64: 8, 128>}]} {
    %c0 = arith.constant 0 : index
    %c0_0 = arith.constant 0 : index
    %0 = vector.load %arg1[%c0, %c0_0] : memref<8x9216xf32, #tpu.memory_space<vmem>>, vector<8x9216xf32>
    %1 = arith.truncf %0 : vector<8x9216xf32> to vector<8x9216xbf16>
    %c0_1 = arith.constant 0 : index
    %c0_2 = arith.constant 0 : index
    %2 = vector.load %arg2[%c0_1, %c0_2] : memref<9216x128xbf16, #tpu.memory_space<vmem>>, vector<9216x128xbf16>
    %cst = arith.constant dense<0.000000e+00> : vector<8x128xf32>
    %3 = tpu.matmul %1, %2, %cst {dimension_numbers = #tpu.dot_dimension_numbers<[1], [0], [0], [1], [0, 0, 1, 1], [], []>} : vector<8x9216xbf16>, vector<9216x128xbf16>, vector<8x128xf32> -> vector<8x128xf32>
    %c0_3 = arith.constant 0 : index
    %c0_4 = arith.constant 0 : index
    %4 = vector.load %arg3[%c0_3, %c0_4] : memref<1x128xf32, #tpu.memory_space<vmem>>, vector<1x128xf32>
    %5 = vector.broadcast %4 : vector<1x128xf32> to vector<8x128xf32>
    %6 = arith.addf %3, %5 : vector<8x128xf32>
    %cst_5 = arith.constant 0.000000e+00 : f32
    %7 = vector.broadcast %cst_5 : f32 to vector<8x128xf32>
    %8 = arith.maximumf %6, %7 : vector<8x128xf32>
    %c0_6 = arith.constant 0 : index
    %c0_7 = arith.constant 0 : index
    %9 = vector.load %arg4[%c0_6, %c0_7] : memref<8x128xf32, #tpu.memory_space<vmem>>, vector<8x128xf32>
    tpu.vector_store %arg4[%c0_6, %c0_7], %8 {strides = array<i32>} : memref<8x128xf32, #tpu.memory_space<vmem>>, vector<8x128xf32>,
    return
  }
  func.func @transform_0(%arg0: i32) -> (i32, i32) {
    %c0_i32 = arith.constant 0 : i32
    %c0_i32_0 = arith.constant 0 : i32
    return %arg0, %c0_i32 : i32, i32
  }
  func.func @transform_1(%arg0: i32) -> (i32, i32) {
    %c0_i32 = arith.constant 0 : i32
    %c0_i32_0 = arith.constant 0 : i32
    %c0_i32_1 = arith.constant 0 : i32
    return %c0_i32, %c0_i32_0 : i32, i32
  }
  func.func @transform_2(%arg0: i32) -> (i32, i32) {
    %c0_i32 = arith.constant 0 : i32
    %c0_i32_0 = arith.constant 0 : i32
    %c0_i32_1 = arith.constant 0 : i32
    return %c0_i32, %c0_i32_0 : i32, i32
  }
  func.func @transform_3(%arg0: i32) -> (i32, i32) {
    %c0_i32 = arith.constant 0 : i32
    %c0_i32_0 = arith.constant 0 : i32
    return %arg0, %c0_i32 : i32, i32
  }
}

</mosaic_0001>

<llo_original>
// kernel: net2_forward.1
$region0: #{net2_forward.1}
  #allocation0 [shape = 'u32[]', space=smem, size = 0x4, offset = 0x4, fixed_abs, tag = 'smem constant byte address 0x4 - core index']
  #allocation1 [shape = 'u32[144,128]{1,0:T(1,128)}', space=vmem, size = 0x12000, scoped, tag = 'internal scratch']
  %s0 = inlined_call_operand.hbm [shape: f32[8,9216], index: 0, kind: input, shape index: {}]
  %s1 = inlined_call_operand.hbm [shape: bf16[9216,128], index: 1, kind: input, shape index: {}]
  %s2 = inlined_call_operand.hbm [shape: f32[1,128], index: 2, kind: input, shape index: {}]
  %s3 = inlined_call_operand.hbm [shape: f32[8,128], index: 3, kind: output, shape index: {}]
  %s4 = sld [smem:[#allocation0]]
  $region34: #{net2_forward.1} parent=0
    _
  %s6 = ssub.s32 1, %s4
  %s7 = scalar_select 0, %s6, %s4
  $region1: #{net2_forward.1} parent=0
    #allocation2 [shape = 'u8[294912]{0}', space=vmem, size = 0x48000, scoped, tag = 'input window, operand 0, single buffered']
    #allocation3 [shape = 's32[1]{0}', space=sflag, size = 0x4, scoped, tag = 'scoped memory for net2_forward.1']
    #allocation4 [shape = 's32[1]{0}', space=sflag, size = 0x4, scoped, tag = 'scoped memory for net2_forward.1']
    #allocation5 [shape = 'u8[2359296]{0}', space=vmem, size = 0x240000, scoped, tag = 'input window, operand 1, single buffered']
    #allocation6 [shape = 's32[1]{0}', space=sflag, size = 0x4, scoped, tag = 'scoped memory for net2_forward.1']
    #allocation7 [shape = 'u8[512]{0}', space=vmem, size = 0x400, scoped, tag = 'input window, operand 2, single buffered']
    #allocation8 [shape = 'u8[4096]{0}', space=vmem, size = 0x1000, scoped, tag = 'output window, operand 0, single buffered']
    %8 = vsyncpa [#allocation3], 0
    %9 = vsyncpa [#allocation6], 0
    %10 = vsyncpa [#allocation4], 0
    // Predicated region
    $region2: #{net2_forward.1} parent=1 // pred_check
      _
    $region3: #{net2_forward.1} parent=1 // pred_check_branch
      %12 = sbr.rel (0) target = $region5
    $region4: #{net2_forward.1} parent=1 // pred_region
      %s14 = ssub.s32 9216, 9216
      %15 = vsyncadd [#allocation3], %s14
      %s17 = sshll.u32 [#allocation2], 4
      %s18 = int_to_ptr.vmem [resolvable:$true] %s17
      %20 = dma.hbm_to_vmem [thread:$0]  %s0, 9216, %s18, [#allocation3]
    $region5: #{net2_forward.1} parent=1 // pred_fallthru
      _
    // Predicated region
    $region6: #{net2_forward.1} parent=1 // pred_check
      _
    $region7: #{net2_forward.1} parent=1 // pred_check_branch
      %22 = sbr.rel (0) target = $region9
    $region8: #{net2_forward.1} parent=1 // pred_region
      %s24 = ssub.s32 73728, 73728
      %25 = vsyncadd [#allocation6], %s24
      %s26 = sshll.u32 [#allocation5], 4
      %s27 = int_to_ptr.vmem [resolvable:$true] %s26
      %32 = dma.hbm_to_vmem [thread:$0]  %s1, 73728, %s27, [#allocation6], 64, 64, 4
    $region9: #{net2_forward.1} parent=1 // pred_fallthru
      _
    // Predicated region
    $region10: #{net2_forward.1} parent=1 // pred_check
      _
    $region11: #{net2_forward.1} parent=1 // pred_check_branch
      %34 = sbr.rel (0) target = $region13
    $region12: #{net2_forward.1} parent=1 // pred_region
      %s36 = ssub.s32 16, 16
      %37 = vsyncadd [#allocation6], %s36
      %s39 = sshll.u32 [#allocation7], 4
      %s40 = int_to_ptr.vmem [resolvable:$true] %s39
      %42 = dma.hbm_to_vmem [thread:$0]  %s2, 16, %s40, [#allocation6]
    $region13: #{net2_forward.1} parent=1 // pred_fallthru
      _
    // Predicated region
    $region14: #{net2_forward.1} parent=1 // pred_check
      _
    $region15: #{net2_forward.1} parent=1 // pred_check_branch
      %44 = sbr.rel (0) target = $region17
    $region16: #{net2_forward.1} parent=1 // pred_region
      %45 = dma.done [#allocation3], 9216
    $region17: #{net2_forward.1} parent=1 // pred_fallthru
      _
    // Predicated region
    $region18: #{net2_forward.1} parent=1 // pred_check
      _
    $region19: #{net2_forward.1} parent=1 // pred_check_branch
      %47 = sbr.rel (0) target = $region21
    $region20: #{net2_forward.1} parent=1 // pred_region
      %48 = dma.done [#allocation6], 73728
    $region21: #{net2_forward.1} parent=1 // pred_fallthru
      _
    // Predicated region
    $region22: #{net2_forward.1} parent=1 // pred_check
      _
    $region23: #{net2_forward.1} parent=1 // pred_check_branch
      %50 = sbr.rel (0) target = $region25
    $region24: #{net2_forward.1} parent=1 // pred_region
      %51 = dma.done [#allocation6], 16
    $region25: #{net2_forward.1} parent=1 // pred_fallthru
      _
    %v53 = vld [vmem:[#allocation2] sm:$0xff]
    %v54 = vld [vmem:[#allocation2 + $0x8] sm:$0xff]
    %v55 = vld [vmem:[#allocation2 + $0x10] sm:$0xff]
    %v56 = vld [vmem:[#allocation2 + $0x18] sm:$0xff]
    %v57 = vld [vmem:[#allocation2 + $0x20] sm:$0xff]
    %v58 = vld [vmem:[#allocation2 + $0x28] sm:$0xff]
    %v59 = vld [vmem:[#allocation2 + $0x30] sm:$0xff]
    %v60 = vld [vmem:[#allocation2 + $0x38] sm:$0xff]
    %v61 = vld [vmem:[#allocation2 + $0x40] sm:$0xff]
    %v62 = vld [vmem:[#allocation2 + $0x48] sm:$0xff]
    %v63 = vld [vmem:[#allocation2 + $0x50] sm:$0xff]
    %v64 = vld [vmem:[#allocation2 + $0x58] sm:$0xff]
    %v65 = vld [vmem:[#allocation2 + $0x60] sm:$0xff]
    %v66 = vld [vmem:[#allocation2 + $0x68] sm:$0xff]
    %v67 = vld [vmem:[#allocation2 + $0x70] sm:$0xff]
    %v68 = vld [vmem:[#allocation2 + $0x78] sm:$0xff]
    %v69 = vld [vmem:[#allocation2 + $0x80] sm:$0xff]
    %v70 = vld [vmem:[#allocation2 + $0x88] sm:$0xff]
    %v71 = vld [vmem:[#allocation2 + $0x90] sm:$0xff]
    %v72 = vld [vmem:[#allocation2 + $0x98] sm:$0xff]
    %v73 = vld [vmem:[#allocation2 + $0xa0] sm:$0xff]
    %v74 = vld [vmem:[#allocation2 + $0xa8] sm:$0xff]
    %v75 = vld [vmem:[#allocation2 + $0xb0] sm:$0xff]
    %v76 = vld [vmem:[#allocation2 + $0xb8] sm:$0xff]
    %v77 = vld [vmem:[#allocation2 + $0xc0] sm:$0xff]
    %v78 = vld [vmem:[#allocation2 + $0xc8] sm:$0xff]
    %v79 = vld [vmem:[#allocation2 + $0xd0] sm:$0xff]
    %v80 = vld [vmem:[#allocation2 + $0xd8] sm:$0xff]
    %v81 = vld [vmem:[#allocation2 + $0xe0] sm:$0xff]
    %v82 = vld [vmem:[#allocation2 + $0xe8] sm:$0xff]
    %v83 = vld [vmem:[#allocation2 + $0xf0] sm:$0xff]
    %v84 = vld [vmem:[#allocation2 + $0xf8] sm:$0xff]
    %v85 = vld [vmem:[#allocation2 + $0x100] sm:$0xff]
    %v86 = vld [vmem:[#allocation2 + $0x108] sm:$0xff]
    %v87 = vld [vmem:[#allocation2 + $0x110] sm:$0xff]
    %v88 = vld [vmem:[#allocation2 + $0x118] sm:$0xff]
    %v89 = vld [vmem:[#allocation2 + $0x120] sm:$0xff]
    %v90 = vld [vmem:[#allocation2 + $0x128] sm:$0xff]
    %v91 = vld [vmem:[#allocation2 + $0x130] sm:$0xff]
    %v92 = vld [vmem:[#allocation2 + $0x138] sm:$0xff]
    %v93 = vld [vmem:[#allocation2 + $0x140] sm:$0xff]
    %v94 = vld [vmem:[#allocation2 + $0x148] sm:$0xff]
    %v95 = vld [vmem:[#allocation2 + $0x150] sm:$0xff]
    %v96 = vld [vmem:[#allocation2 + $0x158] sm:$0xff]
    %v97 = vld [vmem:[#allocation2 + $0x160] sm:$0xff]
    %v98 = vld [vmem:[#allocation2 + $0x168] sm:$0xff]
    %v99 = vld [vmem:[#allocation2 + $0x170] sm:$0xff]
    %v100 = vld [vmem:[#allocation2 + $0x178] sm:$0xff]
    %v101 = vld [vmem:[#allocation2 + $0x180] sm:$0xff]
    %v102 = vld [vmem:[#allocation2 + $0x188] sm:$0xff]
    %v103 = vld [vmem:[#allocation2 + $0x190] sm:$0xff]
    %v104 = vld [vmem:[#allocation2 + $0x198] sm:$0xff]
    %v105 = vld [vmem:[#allocation2 + $0x1a0] sm:$0xff]
    %v106 = vld [vmem:[#allocation2 + $0x1a8] sm:$0xff]
    %v107 = vld [vmem:[#allocation2 + $0x1b0] sm:$0xff]
    %v108 = vld [vmem:[#allocation2 + $0x1b8] sm:$0xff]
    %v109 = vld [vmem:[#allocation2 + $0x1c0] sm:$0xff]
    %v110 = vld [vmem:[#allocation2 + $0x1c8] sm:$0xff]
    %v111 = vld [vmem:[#allocation2 + $0x1d0] sm:$0xff]
    %v112 = vld [vmem:[#allocation2 + $0x1d8] sm:$0xff]
    %v113 = vld [vmem:[#allocation2 + $0x1e0] sm:$0xff]
    %v114 = vld [vmem:[#allocation2 + $0x1e8] sm:$0xff]
    %v115 = vld [vmem:[#allocation2 + $0x1f0] sm:$0xff]
    %v116 = vld [vmem:[#allocation2 + $0x1f8] sm:$0xff]
    %v117 = vld [vmem:[#allocation2 + $0x200] sm:$0xff]
    %v118 = vld [vmem:[#allocation2 + $0x208] sm:$0xff]
    %v119 = vld [vmem:[#allocation2 + $0x210] sm:$0xff]
    %v120 = vld [vmem:[#allocation2 + $0x218] sm:$0xff]
    %v121 = vld [vmem:[#allocation2 + $0x220] sm:$0xff]
    %v122 = vld [vmem:[#allocation2 + $0x228] sm:$0xff]
    %v123 = vld [vmem:[#allocation2 + $0x230] sm:$0xff]
    %v124 = vld [vmem:[#allocation2 + $0x238] sm:$0xff]
    %v125 = vpack.c.bf16 %v53, %v53
    %v126 = vpack.c.bf16 %v54, %v54
    %v127 = vpack.c.bf16 %v55, %v55
    %v128 = vpack.c.bf16 %v56, %v56
    %v129 = vpack.c.bf16 %v57, %v57
    %v130 = vpack.c.bf16 %v58, %v58
    %v131 = vpack.c.bf16 %v59, %v59
    %v132 = vpack.c.bf16 %v60, %v60
    %v133 = vpack.c.bf16 %v61, %v61
    %v134 = vpack.c.bf16 %v62, %v62
    %v135 = vpack.c.bf16 %v63, %v63
    %v136 = vpack.c.bf16 %v64, %v64
    %v137 = vpack.c.bf16 %v65, %v65
    %v138 = vpack.c.bf16 %v66, %v66
    %v139 = vpack.c.bf16 %v67, %v67
    %v140 = vpack.c.bf16 %v68, %v68
    %v141 = vpack.c.bf16 %v69, %v69
    %v142 = vpack.c.bf16 %v70, %v70
    %v143 = vpack.c.bf16 %v71, %v71
    %v144 = vpack.c.bf16 %v72, %v72
    %v145 = vpack.c.bf16 %v73, %v73
    %v146 = vpack.c.bf16 %v74, %v74
    %v147 = vpack.c.bf16 %v75, %v75
    %v148 = vpack.c.bf16 %v76, %v76
    %v149 = vpack.c.bf16 %v77, %v77
    %v150 = vpack.c.bf16 %v78, %v78
    %v151 = vpack.c.bf16 %v79, %v79
    %v152 = vpack.c.bf16 %v80, %v80
    %v153 = vpack.c.bf16 %v81, %v81
    %v154 = vpack.c.bf16 %v82, %v82
    %v155 = vpack.c.bf16 %v83, %v83
    %v156 = vpack.c.bf16 %v84, %v84
    %v157 = vpack.c.bf16 %v85, %v85
    %v158 = vpack.c.bf16 %v86, %v86
    %v159 = vpack.c.bf16 %v87, %v87
    %v160 = vpack.c.bf16 %v88, %v88
    %v161 = vpack.c.bf16 %v89, %v89
    %v162 = vpack.c.bf16 %v90, %v90
    %v163 = vpack.c.bf16 %v91, %v91
    %v164 = vpack.c.bf16 %v92, %v92
    %v165 = vpack.c.bf16 %v93, %v93
    %v166 = vpack.c.bf16 %v94, %v94
    %v167 = vpack.c.bf16 %v95, %v95
    %v168 = vpack.c.bf16 %v96, %v96
    %v169 = vpack.c.bf16 %v97, %v97
    %v170 = vpack.c.bf16 %v98, %v98
    %v171 = vpack.c.bf16 %v99, %v99
    %v172 = vpack.c.bf16 %v100, %v100
    %v173 = vpack.c.bf16 %v101, %v101
    %v174 = vpack.c.bf16 %v102, %v102
    %v175 = vpack.c.bf16 %v103, %v103
    %v176 = vpack.c.bf16 %v104, %v104
    %v177 = vpack.c.bf16 %v105, %v105
    %v178 = vpack.c.bf16 %v106, %v106
    %v179 = vpack.c.bf16 %v107, %v107
    %v180 = vpack.c.bf16 %v108, %v108
    %v181 = vpack.c.bf16 %v109, %v109
    %v182 = vpack.c.bf16 %v110, %v110
    %v183 = vpack.c.bf16 %v111, %v111
    %v184 = vpack.c.bf16 %v112, %v112
    %v185 = vpack.c.bf16 %v113, %v113
    %v186 = vpack.c.bf16 %v114, %v114
    %v187 = vpack.c.bf16 %v115, %v115
    %v188 = vpack.c.bf16 %v116, %v116
    %v189 = vpack.c.bf16 %v117, %v117
    %v190 = vpack.c.bf16 %v118, %v118
    %v191 = vpack.c.bf16 %v119, %v119
    %v192 = vpack.c.bf16 %v120, %v120
    %v193 = vpack.c.bf16 %v121, %v121
    %v194 = vpack.c.bf16 %v122, %v122
    %v195 = vpack.c.bf16 %v123, %v123
    %v196 = vpack.c.bf16 %v124, %v124
    %v197 = vld [vmem:[#allocation5] sm:$0xf]
    %v198 = vld [vmem:[#allocation5 + $0x4] sm:$0xf]
    %v199 = vld [vmem:[#allocation5 + $0x8] sm:$0xf]
    %v200 = vld [vmem:[#allocation5 + $0xc] sm:$0xf]
    %v201 = vld [vmem:[#allocation5 + $0x10] sm:$0xf]
    %v202 = vld [vmem:[#allocation5 + $0x14] sm:$0xf]
    %v203 = vld [vmem:[#allocation5 + $0x18] sm:$0xf]
    %v204 = vld [vmem:[#allocation5 + $0x1c] sm:$0xf]
    %v205 = vld [vmem:[#allocation5 + $0x20] sm:$0xf]
    %v206 = vld [vmem:[#allocation5 + $0x24] sm:$0xf]
    %v207 = vld [vmem:[#allocation5 + $0x28] sm:$0xf]
    %v208 = vld [vmem:[#allocation5 + $0x2c] sm:$0xf]
    %v209 = vld [vmem:[#allocation5 + $0x30] sm:$0xf]
    %v210 = vld [vmem:[#allocation5 + $0x34] sm:$0xf]
    %v211 = vld [vmem:[#allocation5 + $0x38] sm:$0xf]
    %v212 = vld [vmem:[#allocation5 + $0x3c] sm:$0xf]
    %v213 = vld [vmem:[#allocation5 + $0x40] sm:$0xf]
    %v214 = vld [vmem:[#allocation5 + $0x44] sm:$0xf]
    %v215 = vld [vmem:[#allocation5 + $0x48] sm:$0xf]
    %v216 = vld [vmem:[#allocation5 + $0x4c] sm:$0xf]
    %v217 = vld [vmem:[#allocation5 + $0x50] sm:$0xf]
    %v218 = vld [vmem:[#allocation5 + $0x54] sm:$0xf]
    %v219 = vld [vmem:[#allocation5 + $0x58] sm:$0xf]
    %v220 = vld [vmem:[#allocation5 + $0x5c] sm:$0xf]
    %v221 = vld [vmem:[#allocation5 + $0x60] sm:$0xf]
    %v222 = vld [vmem:[#allocation5 + $0x64] sm:$0xf]
    %v223 = vld [vmem:[#allocation5 + $0x68] sm:$0xf]
    %v224 = vld [vmem:[#allocation5 + $0x6c] sm:$0xf]
    %v225 = vld [vmem:[#allocation5 + $0x70] sm:$0xf]
    %v226 = vld [vmem:[#allocation5 + $0x74] sm:$0xf]
    %v227 = vld [vmem:[#allocation5 + $0x78] sm:$0xf]
    %v228 = vld [vmem:[#allocation5 + $0x7c] sm:$0xf]
    %v229 = vld [vmem:[#allocation5 + $0x80] sm:$0xf]
    %v230 = vld [vmem:[#allocation5 + $0x84] sm:$0xf]
    %v231 = vld [vmem:[#allocation5 + $0x88] sm:$0xf]
    %v232 = vld [vmem:[#allocation5 + $0x8c] sm:$0xf]
    %v233 = vld [vmem:[#allocation5 + $0x90] sm:$0xf]
    %v234 = vld [vmem:[#allocation5 + $0x94] sm:$0xf]
    %v235 = vld [vmem:[#allocation5 + $0x98] sm:$0xf]
    %v236 = vld [vmem:[#allocation5 + $0x9c] sm:$0xf]
    %v237 = vld [vmem:[#allocation5 + $0xa0] sm:$0xf]
    %v238 = vld [vmem:[#allocation5 + $0xa4] sm:$0xf]
    %v239 = vld [vmem:[#allocation5 + $0xa8] sm:$0xf]
    %v240 = vld [vmem:[#allocation5 + $0xac] sm:$0xf]
    %v241 = vld [vmem:[#allocation5 + $0xb0] sm:$0xf]
    %v242 = vld [vmem:[#allocation5 + $0xb4] sm:$0xf]
    %v243 = vld [vmem:[#allocation5 + $0xb8] sm:$0xf]
    %v244 = vld [vmem:[#allocation5 + $0xbc] sm:$0xf]
    %v245 = vld [vmem:[#allocation5 + $0xc0] sm:$0xf]
    %v246 = vld [vmem:[#allocation5 + $0xc4] sm:$0xf]
    %v247 = vld [vmem:[#allocation5 + $0xc8] sm:$0xf]
    %v248 = vld [vmem:[#allocation5 + $0xcc] sm:$0xf]
    %v249 = vld [vmem:[#allocation5 + $0xd0] sm:$0xf]
    %v250 = vld [vmem:[#allocation5 + $0xd4] sm:$0xf]
    %v251 = vld [vmem:[#allocation5 + $0xd8] sm:$0xf]
    %v252 = vld [vmem:[#allocation5 + $0xdc] sm:$0xf]
    %v253 = vld [vmem:[#allocation5 + $0xe0] sm:$0xf]
    %v254 = vld [vmem:[#allocation5 + $0xe4] sm:$0xf]
    %v255 = vld [vmem:[#allocation5 + $0xe8] sm:$0xf]
    %v256 = vld [vmem:[#allocation5 + $0xec] sm:$0xf]
    %v257 = vld [vmem:[#allocation5 + $0xf0] sm:$0xf]
    %v258 = vld [vmem:[#allocation5 + $0xf4] sm:$0xf]
    %v259 = vld [vmem:[#allocation5 + $0xf8] sm:$0xf]
    %v260 = vld [vmem:[#allocation5 + $0xfc] sm:$0xf]
    %v261 = vld [vmem:[#allocation5 + $0x100] sm:$0xf]
    %v262 = vld [vmem:[#allocation5 + $0x104] sm:$0xf]
    %v263 = vld [vmem:[#allocation5 + $0x108] sm:$0xf]
    %v264 = vld [vmem:[#allocation5 + $0x10c] sm:$0xf]
    %v265 = vld [vmem:[#allocation5 + $0x110] sm:$0xf]
    %v266 = vld [vmem:[#allocation5 + $0x114] sm:$0xf]
    %v267 = vld [vmem:[#allocation5 + $0x118] sm:$0xf]
    %v268 = vld [vmem:[#allocation5 + $0x11c] sm:$0xf]
    %v269 = vld [vmem:[#allocation5 + $0x120] sm:$0xf]
    %v270 = vld [vmem:[#allocation5 + $0x124] sm:$0xf]
    %v271 = vld [vmem:[#allocation5 + $0x128] sm:$0xf]
    %v272 = vld [vmem:[#allocation5 + $0x12c] sm:$0xf]
    %v273 = vld [vmem:[#allocation5 + $0x130] sm:$0xf]
    %v274 = vld [vmem:[#allocation5 + $0x134] sm:$0xf]
    %v275 = vld [vmem:[#allocation5 + $0x138] sm:$0xf]
    %v276 = vld [vmem:[#allocation5 + $0x13c] sm:$0xf]
    %v277 = vld [vmem:[#allocation5 + $0x140] sm:$0xf]
    %v278 = vld [vmem:[#allocation5 + $0x144] sm:$0xf]
    %v279 = vld [vmem:[#allocation5 + $0x148] sm:$0xf]
    %v280 = vld [vmem:[#allocation5 + $0x14c] sm:$0xf]
    %v281 = vld [vmem:[#allocation5 + $0x150] sm:$0xf]
    %v282 = vld [vmem:[#allocation5 + $0x154] sm:$0xf]
    %v283 = vld [vmem:[#allocation5 + $0x158] sm:$0xf]
    %v284 = vld [vmem:[#allocation5 + $0x15c] sm:$0xf]
    %v285 = vld [vmem:[#allocation5 + $0x160] sm:$0xf]
    %v286 = vld [vmem:[#allocation5 + $0x164] sm:$0xf]
    %v287 = vld [vmem:[#allocation5 + $0x168] sm:$0xf]
    %v288 = vld [vmem:[#allocation5 + $0x16c] sm:$0xf]
    %v289 = vld [vmem:[#allocation5 + $0x170] sm:$0xf]
    %v290 = vld [vmem:[#allocation5 + $0x174] sm:$0xf]
    %v291 = vld [vmem:[#allocation5 + $0x178] sm:$0xf]
    %v292 = vld [vmem:[#allocation5 + $0x17c] sm:$0xf]
    %v293 = vld [vmem:[#allocation5 + $0x180] sm:$0xf]
    %v294 = vld [vmem:[#allocation5 + $0x184] sm:$0xf]
    %v295 = vld [vmem:[#allocation5 + $0x188] sm:$0xf]
    %v296 = vld [vmem:[#allocation5 + $0x18c] sm:$0xf]
    %v297 = vld [vmem:[#allocation5 + $0x190] sm:$0xf]
    %v298 = vld [vmem:[#allocation5 + $0x194] sm:$0xf]
    %v299 = vld [vmem:[#allocation5 + $0x198] sm:$0xf]
    %v300 = vld [vmem:[#allocation5 + $0x19c] sm:$0xf]
    %v301 = vld [vmem:[#allocation5 + $0x1a0] sm:$0xf]
    %v302 = vld [vmem:[#allocation5 + $0x1a4] sm:$0xf]
    %v303 = vld [vmem:[#allocation5 + $0x1a8] sm:$0xf]
    %v304 = vld [vmem:[#allocation5 + $0x1ac] sm:$0xf]
    %v305 = vld [vmem:[#allocation5 + $0x1b0] sm:$0xf]
    %v306 = vld [vmem:[#allocation5 + $0x1b4] sm:$0xf]
    %v307 = vld [vmem:[#allocation5 + $0x1b8] sm:$0xf]
    %v308 = vld [vmem:[#allocation5 + $0x1bc] sm:$0xf]
    %v309 = vld [vmem:[#allocation5 + $0x1c0] sm:$0xf]
    %v310 = vld [vmem:[#allocation5 + $0x1c4] sm:$0xf]
    %v311 = vld [vmem:[#allocation5 + $0x1c8] sm:$0xf]
    %v312 = vld [vmem:[#allocation5 + $0x1cc] sm:$0xf]
    %v313 = vld [vmem:[#allocation5 + $0x1d0] sm:$0xf]
    %v314 = vld [vmem:[#allocation5 + $0x1d4] sm:$0xf]
    %v315 = vld [vmem:[#allocation5 + $0x1d8] sm:$0xf]
    %v316 = vld [vmem:[#allocation5 + $0x1dc] sm:$0xf]
    %v317 = vld [vmem:[#allocation5 + $0x1e0] sm:$0xf]
    %v318 = vld [vmem:[#allocation5 + $0x1e4] sm:$0xf]
    %v319 = vld [vmem:[#allocation5 + $0x1e8] sm:$0xf]
    %v320 = vld [vmem:[#allocation5 + $0x1ec] sm:$0xf]
    %v321 = vld [vmem:[#allocation5 + $0x1f0] sm:$0xf]
    %v322 = vld [vmem:[#allocation5 + $0x1f4] sm:$0xf]
    %v323 = vld [vmem:[#allocation5 + $0x1f8] sm:$0xf]
    %v324 = vld [vmem:[#allocation5 + $0x1fc] sm:$0xf]
    %v325 = vld [vmem:[#allocation5 + $0x200] sm:$0xf]
    %v326 = vld [vmem:[#allocation5 + $0x204] sm:$0xf]
    %v327 = vld [vmem:[#allocation5 + $0x208] sm:$0xf]
    %v328 = vld [vmem:[#allocation5 + $0x20c] sm:$0xf]
    %v329 = vld [vmem:[#allocation5 + $0x210] sm:$0xf]
    %v330 = vld [vmem:[#allocation5 + $0x214] sm:$0xf]
    %v331 = vld [vmem:[#allocation5 + $0x218] sm:$0xf]
    %v332 = vld [vmem:[#allocation5 + $0x21c] sm:$0xf]
    %v333 = vld [vmem:[#allocation5 + $0x220] sm:$0xf]
    %v334 = vld [vmem:[#allocation5 + $0x224] sm:$0xf]
    %v335 = vld [vmem:[#allocation5 + $0x228] sm:$0xf]
    %v336 = vld [vmem:[#allocation5 + $0x22c] sm:$0xf]
    %v337 = vld [vmem:[#allocation5 + $0x230] sm:$0xf]
    %v338 = vld [vmem:[#allocation5 + $0x234] sm:$0xf]
    %v339 = vld [vmem:[#allocation5 + $0x238] sm:$0xf]
    %v340 = vld [vmem:[#allocation5 + $0x23c] sm:$0xf]
    %v341 = vld [vmem:[#allocation5 + $0x240] sm:$0xf]
    %v342 = vld [vmem:[#allocation5 + $0x244] sm:$0xf]
    %v343 = vld [vmem:[#allocation5 + $0x248] sm:$0xf]
    %v344 = vld [vmem:[#allocation5 + $0x24c] sm:$0xf]
    %v345 = vld [vmem:[#allocation5 + $0x250] sm:$0xf]
    %v346 = vld [vmem:[#allocation5 + $0x254] sm:$0xf]
    %v347 = vld [vmem:[#allocation5 + $0x258] sm:$0xf]
    %v348 = vld [vmem:[#allocation5 + $0x25c] sm:$0xf]
    %v349 = vld [vmem:[#allocation5 + $0x260] sm:$0xf]
    %v350 = vld [vmem:[#allocation5 + $0x264] sm:$0xf]
    %v351 = vld [vmem:[#allocation5 + $0x268] sm:$0xf]
    %v352 = vld [vmem:[#allocation5 + $0x26c] sm:$0xf]
    %v353 = vld [vmem:[#allocation5 + $0x270] sm:$0xf]
    %v354 = vld [vmem:[#allocation5 + $0x274] sm:$0xf]
    %v355 = vld [vmem:[#allocation5 + $0x278] sm:$0xf]
    %v356 = vld [vmem:[#allocation5 + $0x27c] sm:$0xf]
    %v357 = vld [vmem:[#allocation5 + $0x280] sm:$0xf]
    %v358 = vld [vmem:[#allocation5 + $0x284] sm:$0xf]
    %v359 = vld [vmem:[#allocation5 + $0x288] sm:$0xf]
    %v360 = vld [vmem:[#allocation5 + $0x28c] sm:$0xf]
    %v361 = vld [vmem:[#allocation5 + $0x290] sm:$0xf]
    %v362 = vld [vmem:[#allocation5 + $0x294] sm:$0xf]
    %v363 = vld [vmem:[#allocation5 + $0x298] sm:$0xf]
    %v364 = vld [vmem:[#allocation5 + $0x29c] sm:$0xf]
    %v365 = vld [vmem:[#allocation5 + $0x2a0] sm:$0xf]
    %v366 = vld [vmem:[#allocation5 + $0x2a4] sm:$0xf]
    %v367 = vld [vmem:[#allocation5 + $0x2a8] sm:$0xf]
    %v368 = vld [vmem:[#allocation5 + $0x2ac] sm:$0xf]
    %v369 = vld [vmem:[#allocation5 + $0x2b0] sm:$0xf]
    %v370 = vld [vmem:[#allocation5 + $0x2b4] sm:$0xf]
    %v371 = vld [vmem:[#allocation5 + $0x2b8] sm:$0xf]
    %v372 = vld [vmem:[#allocation5 + $0x2bc] sm:$0xf]
    %v373 = vld [vmem:[#allocation5 + $0x2c0] sm:$0xf]
    %v374 = vld [vmem:[#allocation5 + $0x2c4] sm:$0xf]
    %v375 = vld [vmem:[#allocation5 + $0x2c8] sm:$0xf]
    %v376 = vld [vmem:[#allocation5 + $0x2cc] sm:$0xf]
    %v377 = vld [vmem:[#allocation5 + $0x2d0] sm:$0xf]
    %v378 = vld [vmem:[#allocation5 + $0x2d4] sm:$0xf]
    %v379 = vld [vmem:[#allocation5 + $0x2d8] sm:$0xf]
    %v380 = vld [vmem:[#allocation5 + $0x2dc] sm:$0xf]
    %v381 = vld [vmem:[#allocation5 + $0x2e0] sm:$0xf]
    %v382 = vld [vmem:[#allocation5 + $0x2e4] sm:$0xf]
    %v383 = vld [vmem:[#allocation5 + $0x2e8] sm:$0xf]
    %v384 = vld [vmem:[#allocation5 + $0x2ec] sm:$0xf]
    %v385 = vld [vmem:[#allocation5 + $0x2f0] sm:$0xf]
    %v386 = vld [vmem:[#allocation5 + $0x2f4] sm:$0xf]
    %v387 = vld [vmem:[#allocation5 + $0x2f8] sm:$0xf]
    %v388 = vld [vmem:[#allocation5 + $0x2fc] sm:$0xf]
    %v389 = vld [vmem:[#allocation5 + $0x300] sm:$0xf]
    %v390 = vld [vmem:[#allocation5 + $0x304] sm:$0xf]
    %v391 = vld [vmem:[#allocation5 + $0x308] sm:$0xf]
    %v392 = vld [vmem:[#allocation5 + $0x30c] sm:$0xf]
    %v393 = vld [vmem:[#allocation5 + $0x310] sm:$0xf]
    %v394 = vld [vmem:[#allocation5 + $0x314] sm:$0xf]
    %v395 = vld [vmem:[#allocation5 + $0x318] sm:$0xf]
    %v396 = vld [vmem:[#allocation5 + $0x31c] sm:$0xf]
    %v397 = vld [vmem:[#allocation5 + $0x320] sm:$0xf]
    %v398 = vld [vmem:[#allocation5 + $0x324] sm:$0xf]
    %v399 = vld [vmem:[#allocation5 + $0x328] sm:$0xf]
    %v400 = vld [vmem:[#allocation5 + $0x32c] sm:$0xf]
    %v401 = vld [vmem:[#allocation5 + $0x330] sm:$0xf]
    %v402 = vld [vmem:[#allocation5 + $0x334] sm:$0xf]
    %v403 = vld [vmem:[#allocation5 + $0x338] sm:$0xf]
    %v404 = vld [vmem:[#allocation5 + $0x33c] sm:$0xf]
    %v405 = vld [vmem:[#allocation5 + $0x340] sm:$0xf]
    %v406 = vld [vmem:[#allocation5 + $0x344] sm:$0xf]
    %v407 = vld [vmem:[#allocation5 + $0x348] sm:$0xf]
    %v408 = vld [vmem:[#allocation5 + $0x34c] sm:$0xf]
    %v409 = vld [vmem:[#allocation5 + $0x350] sm:$0xf]
    %v410 = vld [vmem:[#allocation5 + $0x354] sm:$0xf]
    %v411 = vld [vmem:[#allocation5 + $0x358] sm:$0xf]
    %v412 = vld [vmem:[#allocation5 + $0x35c] sm:$0xf]
    %v413 = vld [vmem:[#allocation5 + $0x360] sm:$0xf]
    %v414 = vld [vmem:[#allocation5 + $0x364] sm:$0xf]
    %v415 = vld [vmem:[#allocation5 + $0x368] sm:$0xf]
    %v416 = vld [vmem:[#allocation5 + $0x36c] sm:$0xf]
    %v417 = vld [vmem:[#allocation5 + $0x370] sm:$0xf]
    %v418 = vld [vmem:[#allocation5 + $0x374] sm:$0xf]
    %v419 = vld [vmem:[#allocation5 + $0x378] sm:$0xf]
    %v420 = vld [vmem:[#allocation5 + $0x37c] sm:$0xf]
    %v421 = vld [vmem:[#allocation5 + $0x380] sm:$0xf]
    %v422 = vld [vmem:[#allocation5 + $0x384] sm:$0xf]
    %v423 = vld [vmem:[#allocation5 + $0x388] sm:$0xf]
    %v424 = vld [vmem:[#allocation5 + $0x38c] sm:$0xf]
    %v425 = vld [vmem:[#allocation5 + $0x390] sm:$0xf]
    %v426 = vld [vmem:[#allocation5 + $0x394] sm:$0xf]
    %v427 = vld [vmem:[#allocation5 + $0x398] sm:$0xf]
    %v428 = vld [vmem:[#allocation5 + $0x39c] sm:$0xf]
    %v429 = vld [vmem:[#allocation5 + $0x3a0] sm:$0xf]
    %v430 = vld [vmem:[#allocation5 + $0x3a4] sm:$0xf]
    %v431 = vld [vmem:[#allocation5 + $0x3a8] sm:$0xf]
    %v432 = vld [vmem:[#allocation5 + $0x3ac] sm:$0xf]
    %v433 = vld [vmem:[#allocation5 + $0x3b0] sm:$0xf]
    %v434 = vld [vmem:[#allocation5 + $0x3b4] sm:$0xf]
    %v435 = vld [vmem:[#allocation5 + $0x3b8] sm:$0xf]
    %v436 = vld [vmem:[#allocation5 + $0x3bc] sm:$0xf]
    %v437 = vld [vmem:[#allocation5 + $0x3c0] sm:$0xf]
    %v438 = vld [vmem:[#allocation5 + $0x3c4] sm:$0xf]
    %v439 = vld [vmem:[#allocation5 + $0x3c8] sm:$0xf]
    %v440 = vld [vmem:[#allocation5 + $0x3cc] sm:$0xf]
    %v441 = vld [vmem:[#allocation5 + $0x3d0] sm:$0xf]
    %v442 = vld [vmem:[#allocation5 + $0x3d4] sm:$0xf]
    %v443 = vld [vmem:[#allocation5 + $0x3d8] sm:$0xf]
    %v444 = vld [vmem:[#allocation5 + $0x3dc] sm:$0xf]
    %v445 = vld [vmem:[#allocation5 + $0x3e0] sm:$0xf]
    %v446 = vld [vmem:[#allocation5 + $0x3e4] sm:$0xf]
    %v447 = vld [vmem:[#allocation5 + $0x3e8] sm:$0xf]
    %v448 = vld [vmem:[#allocation5 + $0x3ec] sm:$0xf]
    %v449 = vld [vmem:[#allocation5 + $0x3f0] sm:$0xf]
    %v450 = vld [vmem:[#allocation5 + $0x3f4] sm:$0xf]
    %v451 = vld [vmem:[#allocation5 + $0x3f8] sm:$0xf]
    %v452 = vld [vmem:[#allocation5 + $0x3fc] sm:$0xf]
    %v453 = vld [vmem:[#allocation5 + $0x400] sm:$0xf]
    %v454 = vld [vmem:[#allocation5 + $0x404] sm:$0xf]
    %v455 = vld [vmem:[#allocation5 + $0x408] sm:$0xf]
    %v456 = vld [vmem:[#allocation5 + $0x40c] sm:$0xf]
    %v457 = vld [vmem:[#allocation5 + $0x410] sm:$0xf]
    %v458 = vld [vmem:[#allocation5 + $0x414] sm:$0xf]
    %v459 = vld [vmem:[#allocation5 + $0x418] sm:$0xf]
    %v460 = vld [vmem:[#allocation5 + $0x41c] sm:$0xf]
    %v461 = vld [vmem:[#allocation5 + $0x420] sm:$0xf]
    %v462 = vld [vmem:[#allocation5 + $0x424] sm:$0xf]
    %v463 = vld [vmem:[#allocation5 + $0x428] sm:$0xf]
    %v464 = vld [vmem:[#allocation5 + $0x42c] sm:$0xf]
    %v465 = vld [vmem:[#allocation5 + $0x430] sm:$0xf]
    %v466 = vld [vmem:[#allocation5 + $0x434] sm:$0xf]
    %v467 = vld [vmem:[#allocation5 + $0x438] sm:$0xf]
    %v468 = vld [vmem:[#allocation5 + $0x43c] sm:$0xf]
    %v469 = vld [vmem:[#allocation5 + $0x440] sm:$0xf]
    %v470 = vld [vmem:[#allocation5 + $0x444] sm:$0xf]
    %v471 = vld [vmem:[#allocation5 + $0x448] sm:$0xf]
    %v472 = vld [vmem:[#allocation5 + $0x44c] sm:$0xf]
    %v473 = vld [vmem:[#allocation5 + $0x450] sm:$0xf]
    %v474 = vld [vmem:[#allocation5 + $0x454] sm:$0xf]
    %v475 = vld [vmem:[#allocation5 + $0x458] sm:$0xf]
    %v476 = vld [vmem:[#allocation5 + $0x45c] sm:$0xf]
    %v477 = vld [vmem:[#allocation5 + $0x460] sm:$0xf]
    %v478 = vld [vmem:[#allocation5 + $0x464] sm:$0xf]
    %v479 = vld [vmem:[#allocation5 + $0x468] sm:$0xf]
    %v480 = vld [vmem:[#allocation5 + $0x46c] sm:$0xf]
    %v481 = vld [vmem:[#allocation5 + $0x470] sm:$0xf]
    %v482 = vld [vmem:[#allocation5 + $0x474] sm:$0xf]
    %v483 = vld [vmem:[#allocation5 + $0x478] sm:$0xf]
    %v484 = vld [vmem:[#allocation5 + $0x47c] sm:$0xf]
    %v485 = vld [vmem:[#allocation5 + $0x480] sm:$0xf]
    %v486 = vld [vmem:[#allocation5 + $0x484] sm:$0xf]
    %v487 = vld [vmem:[#allocation5 + $0x488] sm:$0xf]
    %v488 = vld [vmem:[#allocation5 + $0x48c] sm:$0xf]
    %v489 = vld [vmem:[#allocation5 + $0x490] sm:$0xf]
    %v490 = vld [vmem:[#allocation5 + $0x494] sm:$0xf]
    %v491 = vld [vmem:[#allocation5 + $0x498] sm:$0xf]
    %v492 = vld [vmem:[#allocation5 + $0x49c] sm:$0xf]
    %v493 = vld [vmem:[#allocation5 + $0x4a0] sm:$0xf]
    %v494 = vld [vmem:[#allocation5 + $0x4a4] sm:$0xf]
    %v495 = vld [vmem:[#allocation5 + $0x4a8] sm:$0xf]
    %v496 = vld [vmem:[#allocation5 + $0x4ac] sm:$0xf]
    %v497 = vld [vmem:[#allocation5 + $0x4b0] sm:$0xf]
    %v498 = vld [vmem:[#allocation5 + $0x4b4] sm:$0xf]
    %v499 = vld [vmem:[#allocation5 + $0x4b8] sm:$0xf]
    %v500 = vld [vmem:[#allocation5 + $0x4bc] sm:$0xf]
    %v501 = vld [vmem:[#allocation5 + $0x4c0] sm:$0xf]
    %v502 = vld [vmem:[#allocation5 + $0x4c4] sm:$0xf]
    %v503 = vld [vmem:[#allocation5 + $0x4c8] sm:$0xf]
    %v504 = vld [vmem:[#allocation5 + $0x4cc] sm:$0xf]
    %v505 = vld [vmem:[#allocation5 + $0x4d0] sm:$0xf]
    %v506 = vld [vmem:[#allocation5 + $0x4d4] sm:$0xf]
    %v507 = vld [vmem:[#allocation5 + $0x4d8] sm:$0xf]
    %v508 = vld [vmem:[#allocation5 + $0x4dc] sm:$0xf]
    %v509 = vld [vmem:[#allocation5 + $0x4e0] sm:$0xf]
    %v510 = vld [vmem:[#allocation5 + $0x4e4] sm:$0xf]
    %v511 = vld [vmem:[#allocation5 + $0x4e8] sm:$0xf]
    %v512 = vld [vmem:[#allocation5 + $0x4ec] sm:$0xf]
    %v513 = vld [vmem:[#allocation5 + $0x4f0] sm:$0xf]
    %v514 = vld [vmem:[#allocation5 + $0x4f4] sm:$0xf]
    %v515 = vld [vmem:[#allocation5 + $0x4f8] sm:$0xf]
    %v516 = vld [vmem:[#allocation5 + $0x4fc] sm:$0xf]
    %v517 = vld [vmem:[#allocation5 + $0x500] sm:$0xf]
    %v518 = vld [vmem:[#allocation5 + $0x504] sm:$0xf]
    %v519 = vld [vmem:[#allocation5 + $0x508] sm:$0xf]
    %v520 = vld [vmem:[#allocation5 + $0x50c] sm:$0xf]
    %v521 = vld [vmem:[#allocation5 + $0x510] sm:$0xf]
    %v522 = vld [vmem:[#allocation5 + $0x514] sm:$0xf]
    %v523 = vld [vmem:[#allocation5 + $0x518] sm:$0xf]
    %v524 = vld [vmem:[#allocation5 + $0x51c] sm:$0xf]
    %v525 = vld [vmem:[#allocation5 + $0x520] sm:$0xf]
    %v526 = vld [vmem:[#allocation5 + $0x524] sm:$0xf]
    %v527 = vld [vmem:[#allocation5 + $0x528] sm:$0xf]
    %v528 = vld [vmem:[#allocation5 + $0x52c] sm:$0xf]
    %v529 = vld [vmem:[#allocation5 + $0x530] sm:$0xf]
    %v530 = vld [vmem:[#allocation5 + $0x534] sm:$0xf]
    %v531 = vld [vmem:[#allocation5 + $0x538] sm:$0xf]
    %v532 = vld [vmem:[#allocation5 + $0x53c] sm:$0xf]
    %v533 = vld [vmem:[#allocation5 + $0x540] sm:$0xf]
    %v534 = vld [vmem:[#allocation5 + $0x544] sm:$0xf]
    %v535 = vld [vmem:[#allocation5 + $0x548] sm:$0xf]
    %v536 = vld [vmem:[#allocation5 + $0x54c] sm:$0xf]
    %v537 = vld [vmem:[#allocation5 + $0x550] sm:$0xf]
    %v538 = vld [vmem:[#allocation5 + $0x554] sm:$0xf]
    %v539 = vld [vmem:[#allocation5 + $0x558] sm:$0xf]
    %v540 = vld [vmem:[#allocation5 + $0x55c] sm:$0xf]
    %v541 = vld [vmem:[#allocation5 + $0x560] sm:$0xf]
    %v542 = vld [vmem:[#allocation5 + $0x564] sm:$0xf]
    %v543 = vld [vmem:[#allocation5 + $0x568] sm:$0xf]
    %v544 = vld [vmem:[#allocation5 + $0x56c] sm:$0xf]
    %v545 = vld [vmem:[#allocation5 + $0x570] sm:$0xf]
    %v546 = vld [vmem:[#allocation5 + $0x574] sm:$0xf]
    %v547 = vld [vmem:[#allocation5 + $0x578] sm:$0xf]
    %v548 = vld [vmem:[#allocation5 + $0x57c] sm:$0xf]
    %v549 = vld [vmem:[#allocation5 + $0x580] sm:$0xf]
    %v550 = vld [vmem:[#allocation5 + $0x584] sm:$0xf]
    %v551 = vld [vmem:[#allocation5 + $0x588] sm:$0xf]
    %v552 = vld [vmem:[#allocation5 + $0x58c] sm:$0xf]
    %v553 = vld [vmem:[#allocation5 + $0x590] sm:$0xf]
    %v554 = vld [vmem:[#allocation5 + $0x594] sm:$0xf]
    %v555 = vld [vmem:[#allocation5 + $0x598] sm:$0xf]
    %v556 = vld [vmem:[#allocation5 + $0x59c] sm:$0xf]
    %v557 = vld [vmem:[#allocation5 + $0x5a0] sm:$0xf]
    %v558 = vld [vmem:[#allocation5 + $0x5a4] sm:$0xf]
    %v559 = vld [vmem:[#allocation5 + $0x5a8] sm:$0xf]
    %v560 = vld [vmem:[#allocation5 + $0x5ac] sm:$0xf]
    %v561 = vld [vmem:[#allocation5 + $0x5b0] sm:$0xf]
    %v562 = vld [vmem:[#allocation5 + $0x5b4] sm:$0xf]
    %v563 = vld [vmem:[#allocation5 + $0x5b8] sm:$0xf]
    %v564 = vld [vmem:[#allocation5 + $0x5bc] sm:$0xf]
    %v565 = vld [vmem:[#allocation5 + $0x5c0] sm:$0xf]
    %v566 = vld [vmem:[#allocation5 + $0x5c4] sm:$0xf]
    %v567 = vld [vmem:[#allocation5 + $0x5c8] sm:$0xf]
    %v568 = vld [vmem:[#allocation5 + $0x5cc] sm:$0xf]
    %v569 = vld [vmem:[#allocation5 + $0x5d0] sm:$0xf]
    %v570 = vld [vmem:[#allocation5 + $0x5d4] sm:$0xf]
    %v571 = vld [vmem:[#allocation5 + $0x5d8] sm:$0xf]
    %v572 = vld [vmem:[#allocation5 + $0x5dc] sm:$0xf]
    %v573 = vld [vmem:[#allocation5 + $0x5e0] sm:$0xf]
    %v574 = vld [vmem:[#allocation5 + $0x5e4] sm:$0xf]
    %v575 = vld [vmem:[#allocation5 + $0x5e8] sm:$0xf]
    %v576 = vld [vmem:[#allocation5 + $0x5ec] sm:$0xf]
    %v577 = vld [vmem:[#allocation5 + $0x5f0] sm:$0xf]
    %v578 = vld [vmem:[#allocation5 + $0x5f4] sm:$0xf]
    %v579 = vld [vmem:[#allocation5 + $0x5f8] sm:$0xf]
    %v580 = vld [vmem:[#allocation5 + $0x5fc] sm:$0xf]
    %v581 = vld [vmem:[#allocation5 + $0x600] sm:$0xf]
    %v582 = vld [vmem:[#allocation5 + $0x604] sm:$0xf]
    %v583 = vld [vmem:[#allocation5 + $0x608] sm:$0xf]
    %v584 = vld [vmem:[#allocation5 + $0x60c] sm:$0xf]
    %v585 = vld [vmem:[#allocation5 + $0x610] sm:$0xf]
    %v586 = vld [vmem:[#allocation5 + $0x614] sm:$0xf]
    %v587 = vld [vmem:[#allocation5 + $0x618] sm:$0xf]
    %v588 = vld [vmem:[#allocation5 + $0x61c] sm:$0xf]
    %v589 = vld [vmem:[#allocation5 + $0x620] sm:$0xf]
    %v590 = vld [vmem:[#allocation5 + $0x624] sm:$0xf]
    %v591 = vld [vmem:[#allocation5 + $0x628] sm:$0xf]
    %v592 = vld [vmem:[#allocation5 + $0x62c] sm:$0xf]
    %v593 = vld [vmem:[#allocation5 + $0x630] sm:$0xf]
    %v594 = vld [vmem:[#allocation5 + $0x634] sm:$0xf]
    %v595 = vld [vmem:[#allocation5 + $0x638] sm:$0xf]
    %v596 = vld [vmem:[#allocation5 + $0x63c] sm:$0xf]
    %v597 = vld [vmem:[#allocation5 + $0x640] sm:$0xf]
    %v598 = vld [vmem:[#allocation5 + $0x644] sm:$0xf]
    %v599 = vld [vmem:[#allocation5 + $0x648] sm:$0xf]
    %v600 = vld [vmem:[#allocation5 + $0x64c] sm:$0xf]
    %v601 = vld [vmem:[#allocation5 + $0x650] sm:$0xf]
    %v602 = vld [vmem:[#allocation5 + $0x654] sm:$0xf]
    %v603 = vld [vmem:[#allocation5 + $0x658] sm:$0xf]
    %v604 = vld [vmem:[#allocation5 + $0x65c] sm:$0xf]
    %v605 = vld [vmem:[#allocation5 + $0x660] sm:$0xf]
    %v606 = vld [vmem:[#allocation5 + $0x664] sm:$0xf]
    %v607 = vld [vmem:[#allocation5 + $0x668] sm:$0xf]
    %v608 = vld [vmem:[#allocation5 + $0x66c] sm:$0xf]
    %v609 = vld [vmem:[#allocation5 + $0x670] sm:$0xf]
    %v610 = vld [vmem:[#allocation5 + $0x674] sm:$0xf]
    %v611 = vld [vmem:[#allocation5 + $0x678] sm:$0xf]
    %v612 = vld [vmem:[#allocation5 + $0x67c] sm:$0xf]
    %v613 = vld [vmem:[#allocation5 + $0x680] sm:$0xf]
    %v614 = vld [vmem:[#allocation5 + $0x684] sm:$0xf]
    %v615 = vld [vmem:[#allocation5 + $0x688] sm:$0xf]
    %v616 = vld [vmem:[#allocation5 + $0x68c] sm:$0xf]
    %v617 = vld [vmem:[#allocation5 + $0x690] sm:$0xf]
    %v618 = vld [vmem:[#allocation5 + $0x694] sm:$0xf]
    %v619 = vld [vmem:[#allocation5 + $0x698] sm:$0xf]
    %v620 = vld [vmem:[#allocation5 + $0x69c] sm:$0xf]
    %v621 = vld [vmem:[#allocation5 + $0x6a0] sm:$0xf]
    %v622 = vld [vmem:[#allocation5 + $0x6a4] sm:$0xf]
    %v623 = vld [vmem:[#allocation5 + $0x6a8] sm:$0xf]
    %v624 = vld [vmem:[#allocation5 + $0x6ac] sm:$0xf]
    %v625 = vld [vmem:[#allocation5 + $0x6b0] sm:$0xf]
    %v626 = vld [vmem:[#allocation5 + $0x6b4] sm:$0xf]
    %v627 = vld [vmem:[#allocation5 + $0x6b8] sm:$0xf]
    %v628 = vld [vmem:[#allocation5 + $0x6bc] sm:$0xf]
    %v629 = vld [vmem:[#allocation5 + $0x6c0] sm:$0xf]
    %v630 = vld [vmem:[#allocation5 + $0x6c4] sm:$0xf]
    %v631 = vld [vmem:[#allocation5 + $0x6c8] sm:$0xf]
    %v632 = vld [vmem:[#allocation5 + $0x6cc] sm:$0xf]
    %v633 = vld [vmem:[#allocation5 + $0x6d0] sm:$0xf]
    %v634 = vld [vmem:[#allocation5 + $0x6d4] sm:$0xf]
    %v635 = vld [vmem:[#allocation5 + $0x6d8] sm:$0xf]
    %v636 = vld [vmem:[#allocation5 + $0x6dc] sm:$0xf]
    %v637 = vld [vmem:[#allocation5 + $0x6e0] sm:$0xf]
    %v638 = vld [vmem:[#allocation5 + $0x6e4] sm:$0xf]
    %v639 = vld [vmem:[#allocation5 + $0x6e8] sm:$0xf]
    %v640 = vld [vmem:[#allocation5 + $0x6ec] sm:$0xf]
    %v641 = vld [vmem:[#allocation5 + $0x6f0] sm:$0xf]
    %v642 = vld [vmem:[#allocation5 + $0x6f4] sm:$0xf]
    %v643 = vld [vmem:[#allocation5 + $0x6f8] sm:$0xf]
    %v644 = vld [vmem:[#allocation5 + $0x6fc] sm:$0xf]
    %v645 = vld [vmem:[#allocation5 + $0x700] sm:$0xf]
    %v646 = vld [vmem:[#allocation5 + $0x704] sm:$0xf]
    %v647 = vld [vmem:[#allocation5 + $0x708] sm:$0xf]
    %v648 = vld [vmem:[#allocation5 + $0x70c] sm:$0xf]
    %v649 = vld [vmem:[#allocation5 + $0x710] sm:$0xf]
    %v650 = vld [vmem:[#allocation5 + $0x714] sm:$0xf]
    %v651 = vld [vmem:[#allocation5 + $0x718] sm:$0xf]
    %v652 = vld [vmem:[#allocation5 + $0x71c] sm:$0xf]
    %v653 = vld [vmem:[#allocation5 + $0x720] sm:$0xf]
    %v654 = vld [vmem:[#allocation5 + $0x724] sm:$0xf]
    %v655 = vld [vmem:[#allocation5 + $0x728] sm:$0xf]
    %v656 = vld [vmem:[#allocation5 + $0x72c] sm:$0xf]
    %v657 = vld [vmem:[#allocation5 + $0x730] sm:$0xf]
    %v658 = vld [vmem:[#allocation5 + $0x734] sm:$0xf]
    %v659 = vld [vmem:[#allocation5 + $0x738] sm:$0xf]
    %v660 = vld [vmem:[#allocation5 + $0x73c] sm:$0xf]
    %v661 = vld [vmem:[#allocation5 + $0x740] sm:$0xf]
    %v662 = vld [vmem:[#allocation5 + $0x744] sm:$0xf]
    %v663 = vld [vmem:[#allocation5 + $0x748] sm:$0xf]
    %v664 = vld [vmem:[#allocation5 + $0x74c] sm:$0xf]
    %v665 = vld [vmem:[#allocation5 + $0x750] sm:$0xf]
    %v666 = vld [vmem:[#allocation5 + $0x754] sm:$0xf]
    %v667 = vld [vmem:[#allocation5 + $0x758] sm:$0xf]
    %v668 = vld [vmem:[#allocation5 + $0x75c] sm:$0xf]
    %v669 = vld [vmem:[#allocation5 + $0x760] sm:$0xf]
    %v670 = vld [vmem:[#allocation5 + $0x764] sm:$0xf]
    %v671 = vld [vmem:[#allocation5 + $0x768] sm:$0xf]
    %v672 = vld [vmem:[#allocation5 + $0x76c] sm:$0xf]
    %v673 = vld [vmem:[#allocation5 + $0x770] sm:$0xf]
    %v674 = vld [vmem:[#allocation5 + $0x774] sm:$0xf]
    %v675 = vld [vmem:[#allocation5 + $0x778] sm:$0xf]
    %v676 = vld [vmem:[#allocation5 + $0x77c] sm:$0xf]
    %v677 = vld [vmem:[#allocation5 + $0x780] sm:$0xf]
    %v678 = vld [vmem:[#allocation5 + $0x784] sm:$0xf]
    %v679 = vld [vmem:[#allocation5 + $0x788] sm:$0xf]
    %v680 = vld [vmem:[#allocation5 + $0x78c] sm:$0xf]
    %v681 = vld [vmem:[#allocation5 + $0x790] sm:$0xf]
    %v682 = vld [vmem:[#allocation5 + $0x794] sm:$0xf]
    %v683 = vld [vmem:[#allocation5 + $0x798] sm:$0xf]
    %v684 = vld [vmem:[#allocation5 + $0x79c] sm:$0xf]
    %v685 = vld [vmem:[#allocation5 + $0x7a0] sm:$0xf]
    %v686 = vld [vmem:[#allocation5 + $0x7a4] sm:$0xf]
    %v687 = vld [vmem:[#allocation5 + $0x7a8] sm:$0xf]
    %v688 = vld [vmem:[#allocation5 + $0x7ac] sm:$0xf]
    %v689 = vld [vmem:[#allocation5 + $0x7b0] sm:$0xf]
    %v690 = vld [vmem:[#allocation5 + $0x7b4] sm:$0xf]
    %v691 = vld [vmem:[#allocation5 + $0x7b8] sm:$0xf]
    %v692 = vld [vmem:[#allocation5 + $0x7bc] sm:$0xf]
    %v693 = vld [vmem:[#allocation5 + $0x7c0] sm:$0xf]
    %v694 = vld [vmem:[#allocation5 + $0x7c4] sm:$0xf]
    %v695 = vld [vmem:[#allocation5 + $0x7c8] sm:$0xf]
    %v696 = vld [vmem:[#allocation5 + $0x7cc] sm:$0xf]
    %v697 = vld [vmem:[#allocation5 + $0x7d0] sm:$0xf]
    %v698 = vld [vmem:[#allocation5 + $0x7d4] sm:$0xf]
    %v699 = vld [vmem:[#allocation5 + $0x7d8] sm:$0xf]
    %v700 = vld [vmem:[#allocation5 + $0x7dc] sm:$0xf]
    %v701 = vld [vmem:[#allocation5 + $0x7e0] sm:$0xf]
    %v702 = vld [vmem:[#allocation5 + $0x7e4] sm:$0xf]
    %v703 = vld [vmem:[#allocation5 + $0x7e8] sm:$0xf]
    %v704 = vld [vmem:[#allocation5 + $0x7ec] sm:$0xf]
    %v705 = vld [vmem:[#allocation5 + $0x7f0] sm:$0xf]
    %v706 = vld [vmem:[#allocation5 + $0x7f4] sm:$0xf]
    %v707 = vld [vmem:[#allocation5 + $0x7f8] sm:$0xf]
    %v708 = vld [vmem:[#allocation5 + $0x7fc] sm:$0xf]
    %v709 = vld [vmem:[#allocation5 + $0x800] sm:$0xf]
    %v710 = vld [vmem:[#allocation5 + $0x804] sm:$0xf]
    %v711 = vld [vmem:[#allocation5 + $0x808] sm:$0xf]
    %v712 = vld [vmem:[#allocation5 + $0x80c] sm:$0xf]
    %v713 = vld [vmem:[#allocation5 + $0x810] sm:$0xf]
    %v714 = vld [vmem:[#allocation5 + $0x814] sm:$0xf]
    %v715 = vld [vmem:[#allocation5 + $0x818] sm:$0xf]
    %v716 = vld [vmem:[#allocation5 + $0x81c] sm:$0xf]
    %v717 = vld [vmem:[#allocation5 + $0x820] sm:$0xf]
    %v718 = vld [vmem:[#allocation5 + $0x824] sm:$0xf]
    %v719 = vld [vmem:[#allocation5 + $0x828] sm:$0xf]
    %v720 = vld [vmem:[#allocation5 + $0x82c] sm:$0xf]
    %v721 = vld [vmem:[#allocation5 + $0x830] sm:$0xf]
    %v722 = vld [vmem:[#allocation5 + $0x834] sm:$0xf]
    %v723 = vld [vmem:[#allocation5 + $0x838] sm:$0xf]
    %v724 = vld [vmem:[#allocation5 + $0x83c] sm:$0xf]
    %v725 = vld [vmem:[#allocation5 + $0x840] sm:$0xf]
    %v726 = vld [vmem:[#allocation5 + $0x844] sm:$0xf]
    %v727 = vld [vmem:[#allocation5 + $0x848] sm:$0xf]
    %v728 = vld [vmem:[#allocation5 + $0x84c] sm:$0xf]
    %v729 = vld [vmem:[#allocation5 + $0x850] sm:$0xf]
    %v730 = vld [vmem:[#allocation5 + $0x854] sm:$0xf]
    %v731 = vld [vmem:[#allocation5 + $0x858] sm:$0xf]
    %v732 = vld [vmem:[#allocation5 + $0x85c] sm:$0xf]
    %v733 = vld [vmem:[#allocation5 + $0x860] sm:$0xf]
    %v734 = vld [vmem:[#allocation5 + $0x864] sm:$0xf]
    %v735 = vld [vmem:[#allocation5 + $0x868] sm:$0xf]
    %v736 = vld [vmem:[#allocation5 + $0x86c] sm:$0xf]
    %v737 = vld [vmem:[#allocation5 + $0x870] sm:$0xf]
    %v738 = vld [vmem:[#allocation5 + $0x874] sm:$0xf]
    %v739 = vld [vmem:[#allocation5 + $0x878] sm:$0xf]
    %v740 = vld [vmem:[#allocation5 + $0x87c] sm:$0xf]
    %v741 = vld [vmem:[#allocation5 + $0x880] sm:$0xf]
    %v742 = vld [vmem:[#allocation5 + $0x884] sm:$0xf]
    %v743 = vld [vmem:[#allocation5 + $0x888] sm:$0xf]
    %v744 = vld [vmem:[#allocation5 + $0x88c] sm:$0xf]
    %v745 = vld [vmem:[#allocation5 + $0x890] sm:$0xf]
    %v746 = vld [vmem:[#allocation5 + $0x894] sm:$0xf]
    %v747 = vld [vmem:[#allocation5 + $0x898] sm:$0xf]
    %v748 = vld [vmem:[#allocation5 + $0x89c] sm:$0xf]
    %v749 = vld [vmem:[#allocation5 + $0x8a0] sm:$0xf]
    %v750 = vld [vmem:[#allocation5 + $0x8a4] sm:$0xf]
    %v751 = vld [vmem:[#allocation5 + $0x8a8] sm:$0xf]
    %v752 = vld [vmem:[#allocation5 + $0x8ac] sm:$0xf]
    %v753 = vld [vmem:[#allocation5 + $0x8b0] sm:$0xf]
    %v754 = vld [vmem:[#allocation5 + $0x8b4] sm:$0xf]
    %v755 = vld [vmem:[#allocation5 + $0x8b8] sm:$0xf]
    %v756 = vld [vmem:[#allocation5 + $0x8bc] sm:$0xf]
    %v757 = vld [vmem:[#allocation5 + $0x8c0] sm:$0xf]
    %v758 = vld [vmem:[#allocation5 + $0x8c4] sm:$0xf]
    %v759 = vld [vmem:[#allocation5 + $0x8c8] sm:$0xf]
    %v760 = vld [vmem:[#allocation5 + $0x8cc] sm:$0xf]
    %v761 = vld [vmem:[#allocation5 + $0x8d0] sm:$0xf]
    %v762 = vld [vmem:[#allocation5 + $0x8d4] sm:$0xf]
    %v763 = vld [vmem:[#allocation5 + $0x8d8] sm:$0xf]
    %v764 = vld [vmem:[#allocation5 + $0x8dc] sm:$0xf]
    %v765 = vld [vmem:[#allocation5 + $0x8e0] sm:$0xf]
    %v766 = vld [vmem:[#allocation5 + $0x8e4] sm:$0xf]
    %v767 = vld [vmem:[#allocation5 + $0x8e8] sm:$0xf]
    %v768 = vld [vmem:[#allocation5 + $0x8ec] sm:$0xf]
    %v769 = vld [vmem:[#allocation5 + $0x8f0] sm:$0xf]
    %v770 = vld [vmem:[#allocation5 + $0x8f4] sm:$0xf]
    %v771 = vld [vmem:[#allocation5 + $0x8f8] sm:$0xf]
    %v772 = vld [vmem:[#allocation5 + $0x8fc] sm:$0xf]
    %v773 = vld [vmem:[#allocation5 + $0x900] sm:$0xf]
    %v774 = vld [vmem:[#allocation5 + $0x904] sm:$0xf]
    %v775 = vld [vmem:[#allocation5 + $0x908] sm:$0xf]
    %v776 = vld [vmem:[#allocation5 + $0x90c] sm:$0xf]
    %v777 = vld [vmem:[#allocation5 + $0x910] sm:$0xf]
    %v778 = vld [vmem:[#allocation5 + $0x914] sm:$0xf]
    %v779 = vld [vmem:[#allocation5 + $0x918] sm:$0xf]
    %v780 = vld [vmem:[#allocation5 + $0x91c] sm:$0xf]
    %v781 = vld [vmem:[#allocation5 + $0x920] sm:$0xf]
    %v782 = vld [vmem:[#allocation5 + $0x924] sm:$0xf]
    %v783 = vld [vmem:[#allocation5 + $0x928] sm:$0xf]
    %v784 = vld [vmem:[#allocation5 + $0x92c] sm:$0xf]
    %v785 = vld [vmem:[#allocation5 + $0x930] sm:$0xf]
    %v786 = vld [vmem:[#allocation5 + $0x934] sm:$0xf]
    %v787 = vld [vmem:[#allocation5 + $0x938] sm:$0xf]
    %v788 = vld [vmem:[#allocation5 + $0x93c] sm:$0xf]
    %v789 = vld [vmem:[#allocation5 + $0x940] sm:$0xf]
    %v790 = vld [vmem:[#allocation5 + $0x944] sm:$0xf]
    %v791 = vld [vmem:[#allocation5 + $0x948] sm:$0xf]
    %v792 = vld [vmem:[#allocation5 + $0x94c] sm:$0xf]
    %v793 = vld [vmem:[#allocation5 + $0x950] sm:$0xf]
    %v794 = vld [vmem:[#allocation5 + $0x954] sm:$0xf]
    %v795 = vld [vmem:[#allocation5 + $0x958] sm:$0xf]
    %v796 = vld [vmem:[#allocation5 + $0x95c] sm:$0xf]
    %v797 = vld [vmem:[#allocation5 + $0x960] sm:$0xf]
    %v798 = vld [vmem:[#allocation5 + $0x964] sm:$0xf]
    %v799 = vld [vmem:[#allocation5 + $0x968] sm:$0xf]
    %v800 = vld [vmem:[#allocation5 + $0x96c] sm:$0xf]
    %v801 = vld [vmem:[#allocation5 + $0x970] sm:$0xf]
    %v802 = vld [vmem:[#allocation5 + $0x974] sm:$0xf]
    %v803 = vld [vmem:[#allocation5 + $0x978] sm:$0xf]
    %v804 = vld [vmem:[#allocation5 + $0x97c] sm:$0xf]
    %v805 = vld [vmem:[#allocation5 + $0x980] sm:$0xf]
    %v806 = vld [vmem:[#allocation5 + $0x984] sm:$0xf]
    %v807 = vld [vmem:[#allocation5 + $0x988] sm:$0xf]
    %v808 = vld [vmem:[#allocation5 + $0x98c] sm:$0xf]
    %v809 = vld [vmem:[#allocation5 + $0x990] sm:$0xf]
    %v810 = vld [vmem:[#allocation5 + $0x994] sm:$0xf]
    %v811 = vld [vmem:[#allocation5 + $0x998] sm:$0xf]
    %v812 = vld [vmem:[#allocation5 + $0x99c] sm:$0xf]
    %v813 = vld [vmem:[#allocation5 + $0x9a0] sm:$0xf]
    %v814 = vld [vmem:[#allocation5 + $0x9a4] sm:$0xf]
    %v815 = vld [vmem:[#allocation5 + $0x9a8] sm:$0xf]
    %v816 = vld [vmem:[#allocation5 + $0x9ac] sm:$0xf]
    %v817 = vld [vmem:[#allocation5 + $0x9b0] sm:$0xf]
    %v818 = vld [vmem:[#allocation5 + $0x9b4] sm:$0xf]
    %v819 = vld [vmem:[#allocation5 + $0x9b8] sm:$0xf]
    %v820 = vld [vmem:[#allocation5 + $0x9bc] sm:$0xf]
    %v821 = vld [vmem:[#allocation5 + $0x9c0] sm:$0xf]
    %v822 = vld [vmem:[#allocation5 + $0x9c4] sm:$0xf]
    %v823 = vld [vmem:[#allocation5 + $0x9c8] sm:$0xf]
    %v824 = vld [vmem:[#allocation5 + $0x9cc] sm:$0xf]
    %v825 = vld [vmem:[#allocation5 + $0x9d0] sm:$0xf]
    %v826 = vld [vmem:[#allocation5 + $0x9d4] sm:$0xf]
    %v827 = vld [vmem:[#allocation5 + $0x9d8] sm:$0xf]
    %v828 = vld [vmem:[#allocation5 + $0x9dc] sm:$0xf]
    %v829 = vld [vmem:[#allocation5 + $0x9e0] sm:$0xf]
    %v830 = vld [vmem:[#allocation5 + $0x9e4] sm:$0xf]
    %v831 = vld [vmem:[#allocation5 + $0x9e8] sm:$0xf]
    %v832 = vld [vmem:[#allocation5 + $0x9ec] sm:$0xf]
    %v833 = vld [vmem:[#allocation5 + $0x9f0] sm:$0xf]
    %v834 = vld [vmem:[#allocation5 + $0x9f4] sm:$0xf]
    %v835 = vld [vmem:[#allocation5 + $0x9f8] sm:$0xf]
    %v836 = vld [vmem:[#allocation5 + $0x9fc] sm:$0xf]
    %v837 = vld [vmem:[#allocation5 + $0xa00] sm:$0xf]
    %v838 = vld [vmem:[#allocation5 + $0xa04] sm:$0xf]
    %v839 = vld [vmem:[#allocation5 + $0xa08] sm:$0xf]
    %v840 = vld [vmem:[#allocation5 + $0xa0c] sm:$0xf]
    %v841 = vld [vmem:[#allocation5 + $0xa10] sm:$0xf]
    %v842 = vld [vmem:[#allocation5 + $0xa14] sm:$0xf]
    %v843 = vld [vmem:[#allocation5 + $0xa18] sm:$0xf]
    %v844 = vld [vmem:[#allocation5 + $0xa1c] sm:$0xf]
    %v845 = vld [vmem:[#allocation5 + $0xa20] sm:$0xf]
    %v846 = vld [vmem:[#allocation5 + $0xa24] sm:$0xf]
    %v847 = vld [vmem:[#allocation5 + $0xa28] sm:$0xf]
    %v848 = vld [vmem:[#allocation5 + $0xa2c] sm:$0xf]
    %v849 = vld [vmem:[#allocation5 + $0xa30] sm:$0xf]
    %v850 = vld [vmem:[#allocation5 + $0xa34] sm:$0xf]
    %v851 = vld [vmem:[#allocation5 + $0xa38] sm:$0xf]
    %v852 = vld [vmem:[#allocation5 + $0xa3c] sm:$0xf]
    %v853 = vld [vmem:[#allocation5 + $0xa40] sm:$0xf]
    %v854 = vld [vmem:[#allocation5 + $0xa44] sm:$0xf]
    %v855 = vld [vmem:[#allocation5 + $0xa48] sm:$0xf]
    %v856 = vld [vmem:[#allocation5 + $0xa4c] sm:$0xf]
    %v857 = vld [vmem:[#allocation5 + $0xa50] sm:$0xf]
    %v858 = vld [vmem:[#allocation5 + $0xa54] sm:$0xf]
    %v859 = vld [vmem:[#allocation5 + $0xa58] sm:$0xf]
    %v860 = vld [vmem:[#allocation5 + $0xa5c] sm:$0xf]
    %v861 = vld [vmem:[#allocation5 + $0xa60] sm:$0xf]
    %v862 = vld [vmem:[#allocation5 + $0xa64] sm:$0xf]
    %v863 = vld [vmem:[#allocation5 + $0xa68] sm:$0xf]
    %v864 = vld [vmem:[#allocation5 + $0xa6c] sm:$0xf]
    %v865 = vld [vmem:[#allocation5 + $0xa70] sm:$0xf]
    %v866 = vld [vmem:[#allocation5 + $0xa74] sm:$0xf]
    %v867 = vld [vmem:[#allocation5 + $0xa78] sm:$0xf]
    %v868 = vld [vmem:[#allocation5 + $0xa7c] sm:$0xf]
    %v869 = vld [vmem:[#allocation5 + $0xa80] sm:$0xf]
    %v870 = vld [vmem:[#allocation5 + $0xa84] sm:$0xf]
    %v871 = vld [vmem:[#allocation5 + $0xa88] sm:$0xf]
    %v872 = vld [vmem:[#allocation5 + $0xa8c] sm:$0xf]
    %v873 = vld [vmem:[#allocation5 + $0xa90] sm:$0xf]
    %v874 = vld [vmem:[#allocation5 + $0xa94] sm:$0xf]
    %v875 = vld [vmem:[#allocation5 + $0xa98] sm:$0xf]
    %v876 = vld [vmem:[#allocation5 + $0xa9c] sm:$0xf]
    %v877 = vld [vmem:[#allocation5 + $0xaa0] sm:$0xf]
    %v878 = vld [vmem:[#allocation5 + $0xaa4] sm:$0xf]
    %v879 = vld [vmem:[#allocation5 + $0xaa8] sm:$0xf]
    %v880 = vld [vmem:[#allocation5 + $0xaac] sm:$0xf]
    %v881 = vld [vmem:[#allocation5 + $0xab0] sm:$0xf]
    %v882 = vld [vmem:[#allocation5 + $0xab4] sm:$0xf]
    %v883 = vld [vmem:[#allocation5 + $0xab8] sm:$0xf]
    %v884 = vld [vmem:[#allocation5 + $0xabc] sm:$0xf]
    %v885 = vld [vmem:[#allocation5 + $0xac0] sm:$0xf]
    %v886 = vld [vmem:[#allocation5 + $0xac4] sm:$0xf]
    %v887 = vld [vmem:[#allocation5 + $0xac8] sm:$0xf]
    %v888 = vld [vmem:[#allocation5 + $0xacc] sm:$0xf]
    %v889 = vld [vmem:[#allocation5 + $0xad0] sm:$0xf]
    %v890 = vld [vmem:[#allocation5 + $0xad4] sm:$0xf]
    %v891 = vld [vmem:[#allocation5 + $0xad8] sm:$0xf]
    %v892 = vld [vmem:[#allocation5 + $0xadc] sm:$0xf]
    %v893 = vld [vmem:[#allocation5 + $0xae0] sm:$0xf]
    %v894 = vld [vmem:[#allocation5 + $0xae4] sm:$0xf]
    %v895 = vld [vmem:[#allocation5 + $0xae8] sm:$0xf]
    %v896 = vld [vmem:[#allocation5 + $0xaec] sm:$0xf]
    %v897 = vld [vmem:[#allocation5 + $0xaf0] sm:$0xf]
    %v898 = vld [vmem:[#allocation5 + $0xaf4] sm:$0xf]
    %v899 = vld [vmem:[#allocation5 + $0xaf8] sm:$0xf]
    %v900 = vld [vmem:[#allocation5 + $0xafc] sm:$0xf]
    %v901 = vld [vmem:[#allocation5 + $0xb00] sm:$0xf]
    %v902 = vld [vmem:[#allocation5 + $0xb04] sm:$0xf]
    %v903 = vld [vmem:[#allocation5 + $0xb08] sm:$0xf]
    %v904 = vld [vmem:[#allocation5 + $0xb0c] sm:$0xf]
    %v905 = vld [vmem:[#allocation5 + $0xb10] sm:$0xf]
    %v906 = vld [vmem:[#allocation5 + $0xb14] sm:$0xf]
    %v907 = vld [vmem:[#allocation5 + $0xb18] sm:$0xf]
    %v908 = vld [vmem:[#allocation5 + $0xb1c] sm:$0xf]
    %v909 = vld [vmem:[#allocation5 + $0xb20] sm:$0xf]
    %v910 = vld [vmem:[#allocation5 + $0xb24] sm:$0xf]
    %v911 = vld [vmem:[#allocation5 + $0xb28] sm:$0xf]
    %v912 = vld [vmem:[#allocation5 + $0xb2c] sm:$0xf]
    %v913 = vld [vmem:[#allocation5 + $0xb30] sm:$0xf]
    %v914 = vld [vmem:[#allocation5 + $0xb34] sm:$0xf]
    %v915 = vld [vmem:[#allocation5 + $0xb38] sm:$0xf]
    %v916 = vld [vmem:[#allocation5 + $0xb3c] sm:$0xf]
    %v917 = vld [vmem:[#allocation5 + $0xb40] sm:$0xf]
    %v918 = vld [vmem:[#allocation5 + $0xb44] sm:$0xf]
    %v919 = vld [vmem:[#allocation5 + $0xb48] sm:$0xf]
    %v920 = vld [vmem:[#allocation5 + $0xb4c] sm:$0xf]
    %v921 = vld [vmem:[#allocation5 + $0xb50] sm:$0xf]
    %v922 = vld [vmem:[#allocation5 + $0xb54] sm:$0xf]
    %v923 = vld [vmem:[#allocation5 + $0xb58] sm:$0xf]
    %v924 = vld [vmem:[#allocation5 + $0xb5c] sm:$0xf]
    %v925 = vld [vmem:[#allocation5 + $0xb60] sm:$0xf]
    %v926 = vld [vmem:[#allocation5 + $0xb64] sm:$0xf]
    %v927 = vld [vmem:[#allocation5 + $0xb68] sm:$0xf]
    %v928 = vld [vmem:[#allocation5 + $0xb6c] sm:$0xf]
    %v929 = vld [vmem:[#allocation5 + $0xb70] sm:$0xf]
    %v930 = vld [vmem:[#allocation5 + $0xb74] sm:$0xf]
    %v931 = vld [vmem:[#allocation5 + $0xb78] sm:$0xf]
    %v932 = vld [vmem:[#allocation5 + $0xb7c] sm:$0xf]
    %v933 = vld [vmem:[#allocation5 + $0xb80] sm:$0xf]
    %v934 = vld [vmem:[#allocation5 + $0xb84] sm:$0xf]
    %v935 = vld [vmem:[#allocation5 + $0xb88] sm:$0xf]
    %v936 = vld [vmem:[#allocation5 + $0xb8c] sm:$0xf]
    %v937 = vld [vmem:[#allocation5 + $0xb90] sm:$0xf]
    %v938 = vld [vmem:[#allocation5 + $0xb94] sm:$0xf]
    %v939 = vld [vmem:[#allocation5 + $0xb98] sm:$0xf]
    %v940 = vld [vmem:[#allocation5 + $0xb9c] sm:$0xf]
    %v941 = vld [vmem:[#allocation5 + $0xba0] sm:$0xf]
    %v942 = vld [vmem:[#allocation5 + $0xba4] sm:$0xf]
    %v943 = vld [vmem:[#allocation5 + $0xba8] sm:$0xf]
    %v944 = vld [vmem:[#allocation5 + $0xbac] sm:$0xf]
    %v945 = vld [vmem:[#allocation5 + $0xbb0] sm:$0xf]
    %v946 = vld [vmem:[#allocation5 + $0xbb4] sm:$0xf]
    %v947 = vld [vmem:[#allocation5 + $0xbb8] sm:$0xf]
    %v948 = vld [vmem:[#allocation5 + $0xbbc] sm:$0xf]
    %v949 = vld [vmem:[#allocation5 + $0xbc0] sm:$0xf]
    %v950 = vld [vmem:[#allocation5 + $0xbc4] sm:$0xf]
    %v951 = vld [vmem:[#allocation5 + $0xbc8] sm:$0xf]
    %v952 = vld [vmem:[#allocation5 + $0xbcc] sm:$0xf]
    %v953 = vld [vmem:[#allocation5 + $0xbd0] sm:$0xf]
    %v954 = vld [vmem:[#allocation5 + $0xbd4] sm:$0xf]
    %v955 = vld [vmem:[#allocation5 + $0xbd8] sm:$0xf]
    %v956 = vld [vmem:[#allocation5 + $0xbdc] sm:$0xf]
    %v957 = vld [vmem:[#allocation5 + $0xbe0] sm:$0xf]
    %v958 = vld [vmem:[#allocation5 + $0xbe4] sm:$0xf]
    %v959 = vld [vmem:[#allocation5 + $0xbe8] sm:$0xf]
    %v960 = vld [vmem:[#allocation5 + $0xbec] sm:$0xf]
    %v961 = vld [vmem:[#allocation5 + $0xbf0] sm:$0xf]
    %v962 = vld [vmem:[#allocation5 + $0xbf4] sm:$0xf]
    %v963 = vld [vmem:[#allocation5 + $0xbf8] sm:$0xf]
    %v964 = vld [vmem:[#allocation5 + $0xbfc] sm:$0xf]
    %v965 = vld [vmem:[#allocation5 + $0xc00] sm:$0xf]
    %v966 = vld [vmem:[#allocation5 + $0xc04] sm:$0xf]
    %v967 = vld [vmem:[#allocation5 + $0xc08] sm:$0xf]
    %v968 = vld [vmem:[#allocation5 + $0xc0c] sm:$0xf]
    %v969 = vld [vmem:[#allocation5 + $0xc10] sm:$0xf]
    %v970 = vld [vmem:[#allocation5 + $0xc14] sm:$0xf]
    %v971 = vld [vmem:[#allocation5 + $0xc18] sm:$0xf]
    %v972 = vld [vmem:[#allocation5 + $0xc1c] sm:$0xf]
    %v973 = vld [vmem:[#allocation5 + $0xc20] sm:$0xf]
    %v974 = vld [vmem:[#allocation5 + $0xc24] sm:$0xf]
    %v975 = vld [vmem:[#allocation5 + $0xc28] sm:$0xf]
    %v976 = vld [vmem:[#allocation5 + $0xc2c] sm:$0xf]
    %v977 = vld [vmem:[#allocation5 + $0xc30] sm:$0xf]
    %v978 = vld [vmem:[#allocation5 + $0xc34] sm:$0xf]
    %v979 = vld [vmem:[#allocation5 + $0xc38] sm:$0xf]
    %v980 = vld [vmem:[#allocation5 + $0xc3c] sm:$0xf]
    %v981 = vld [vmem:[#allocation5 + $0xc40] sm:$0xf]
    %v982 = vld [vmem:[#allocation5 + $0xc44] sm:$0xf]
    %v983 = vld [vmem:[#allocation5 + $0xc48] sm:$0xf]
    %v984 = vld [vmem:[#allocation5 + $0xc4c] sm:$0xf]
    %v985 = vld [vmem:[#allocation5 + $0xc50] sm:$0xf]
    %v986 = vld [vmem:[#allocation5 + $0xc54] sm:$0xf]
    %v987 = vld [vmem:[#allocation5 + $0xc58] sm:$0xf]
    %v988 = vld [vmem:[#allocation5 + $0xc5c] sm:$0xf]
    %v989 = vld [vmem:[#allocation5 + $0xc60] sm:$0xf]
    %v990 = vld [vmem:[#allocation5 + $0xc64] sm:$0xf]
    %v991 = vld [vmem:[#allocation5 + $0xc68] sm:$0xf]
    %v992 = vld [vmem:[#allocation5 + $0xc6c] sm:$0xf]
    %v993 = vld [vmem:[#allocation5 + $0xc70] sm:$0xf]
    %v994 = vld [vmem:[#allocation5 + $0xc74] sm:$0xf]
    %v995 = vld [vmem:[#allocation5 + $0xc78] sm:$0xf]
    %v996 = vld [vmem:[#allocation5 + $0xc7c] sm:$0xf]
    %v997 = vld [vmem:[#allocation5 + $0xc80] sm:$0xf]
    %v998 = vld [vmem:[#allocation5 + $0xc84] sm:$0xf]
    %v999 = vld [vmem:[#allocation5 + $0xc88] sm:$0xf]
    %v1000 = vld [vmem:[#allocation5 + $0xc8c] sm:$0xf]
    %v1001 = vld [vmem:[#allocation5 + $0xc90] sm:$0xf]
    %v1002 = vld [vmem:[#allocation5 + $0xc94] sm:$0xf]
    %v1003 = vld [vmem:[#allocation5 + $0xc98] sm:$0xf]
    %v1004 = vld [vmem:[#allocation5 + $0xc9c] sm:$0xf]
    %v1005 = vld [vmem:[#allocation5 + $0xca0] sm:$0xf]
    %v1006 = vld [vmem:[#allocation5 + $0xca4] sm:$0xf]
    %v1007 = vld [vmem:[#allocation5 + $0xca8] sm:$0xf]
    %v1008 = vld [vmem:[#allocation5 + $0xcac] sm:$0xf]
    %v1009 = vld [vmem:[#allocation5 + $0xcb0] sm:$0xf]
    %v1010 = vld [vmem:[#allocation5 + $0xcb4] sm:$0xf]
    %v1011 = vld [vmem:[#allocation5 + $0xcb8] sm:$0xf]
    %v1012 = vld [vmem:[#allocation5 + $0xcbc] sm:$0xf]
    %v1013 = vld [vmem:[#allocation5 + $0xcc0] sm:$0xf]
    %v1014 = vld [vmem:[#allocation5 + $0xcc4] sm:$0xf]
    %v1015 = vld [vmem:[#allocation5 + $0xcc8] sm:$0xf]
    %v1016 = vld [vmem:[#allocation5 + $0xccc] sm:$0xf]
    %v1017 = vld [vmem:[#allocation5 + $0xcd0] sm:$0xf]
    %v1018 = vld [vmem:[#allocation5 + $0xcd4] sm:$0xf]
    %v1019 = vld [vmem:[#allocation5 + $0xcd8] sm:$0xf]
    %v1020 = vld [vmem:[#allocation5 + $0xcdc] sm:$0xf]
    %v1021 = vld [vmem:[#allocation5 + $0xce0] sm:$0xf]
    %v1022 = vld [vmem:[#allocation5 + $0xce4] sm:$0xf]
    %v1023 = vld [vmem:[#allocation5 + $0xce8] sm:$0xf]
    %v1024 = vld [vmem:[#allocation5 + $0xcec] sm:$0xf]
    %v1025 = vld [vmem:[#allocation5 + $0xcf0] sm:$0xf]
    %v1026 = vld [vmem:[#allocation5 + $0xcf4] sm:$0xf]
    %v1027 = vld [vmem:[#allocation5 + $0xcf8] sm:$0xf]
    %v1028 = vld [vmem:[#allocation5 + $0xcfc] sm:$0xf]
    %v1029 = vld [vmem:[#allocation5 + $0xd00] sm:$0xf]
    %v1030 = vld [vmem:[#allocation5 + $0xd04] sm:$0xf]
    %v1031 = vld [vmem:[#allocation5 + $0xd08] sm:$0xf]
    %v1032 = vld [vmem:[#allocation5 + $0xd0c] sm:$0xf]
    %v1033 = vld [vmem:[#allocation5 + $0xd10] sm:$0xf]
    %v1034 = vld [vmem:[#allocation5 + $0xd14] sm:$0xf]
    %v1035 = vld [vmem:[#allocation5 + $0xd18] sm:$0xf]
    %v1036 = vld [vmem:[#allocation5 + $0xd1c] sm:$0xf]
    %v1037 = vld [vmem:[#allocation5 + $0xd20] sm:$0xf]
    %v1038 = vld [vmem:[#allocation5 + $0xd24] sm:$0xf]
    %v1039 = vld [vmem:[#allocation5 + $0xd28] sm:$0xf]
    %v1040 = vld [vmem:[#allocation5 + $0xd2c] sm:$0xf]
    %v1041 = vld [vmem:[#allocation5 + $0xd30] sm:$0xf]
    %v1042 = vld [vmem:[#allocation5 + $0xd34] sm:$0xf]
    %v1043 = vld [vmem:[#allocation5 + $0xd38] sm:$0xf]
    %v1044 = vld [vmem:[#allocation5 + $0xd3c] sm:$0xf]
    %v1045 = vld [vmem:[#allocation5 + $0xd40] sm:$0xf]
    %v1046 = vld [vmem:[#allocation5 + $0xd44] sm:$0xf]
    %v1047 = vld [vmem:[#allocation5 + $0xd48] sm:$0xf]
    %v1048 = vld [vmem:[#allocation5 + $0xd4c] sm:$0xf]
    %v1049 = vld [vmem:[#allocation5 + $0xd50] sm:$0xf]
    %v1050 = vld [vmem:[#allocation5 + $0xd54] sm:$0xf]
    %v1051 = vld [vmem:[#allocation5 + $0xd58] sm:$0xf]
    %v1052 = vld [vmem:[#allocation5 + $0xd5c] sm:$0xf]
    %v1053 = vld [vmem:[#allocation5 + $0xd60] sm:$0xf]
    %v1054 = vld [vmem:[#allocation5 + $0xd64] sm:$0xf]
    %v1055 = vld [vmem:[#allocation5 + $0xd68] sm:$0xf]
    %v1056 = vld [vmem:[#allocation5 + $0xd6c] sm:$0xf]
    %v1057 = vld [vmem:[#allocation5 + $0xd70] sm:$0xf]
    %v1058 = vld [vmem:[#allocation5 + $0xd74] sm:$0xf]
    %v1059 = vld [vmem:[#allocation5 + $0xd78] sm:$0xf]
    %v1060 = vld [vmem:[#allocation5 + $0xd7c] sm:$0xf]
    %v1061 = vld [vmem:[#allocation5 + $0xd80] sm:$0xf]
    %v1062 = vld [vmem:[#allocation5 + $0xd84] sm:$0xf]
    %v1063 = vld [vmem:[#allocation5 + $0xd88] sm:$0xf]
    %v1064 = vld [vmem:[#allocation5 + $0xd8c] sm:$0xf]
    %v1065 = vld [vmem:[#allocation5 + $0xd90] sm:$0xf]
    %v1066 = vld [vmem:[#allocation5 + $0xd94] sm:$0xf]
    %v1067 = vld [vmem:[#allocation5 + $0xd98] sm:$0xf]
    %v1068 = vld [vmem:[#allocation5 + $0xd9c] sm:$0xf]
    %v1069 = vld [vmem:[#allocation5 + $0xda0] sm:$0xf]
    %v1070 = vld [vmem:[#allocation5 + $0xda4] sm:$0xf]
    %v1071 = vld [vmem:[#allocation5 + $0xda8] sm:$0xf]
    %v1072 = vld [vmem:[#allocation5 + $0xdac] sm:$0xf]
    %v1073 = vld [vmem:[#allocation5 + $0xdb0] sm:$0xf]
    %v1074 = vld [vmem:[#allocation5 + $0xdb4] sm:$0xf]
    %v1075 = vld [vmem:[#allocation5 + $0xdb8] sm:$0xf]
    %v1076 = vld [vmem:[#allocation5 + $0xdbc] sm:$0xf]
    %v1077 = vld [vmem:[#allocation5 + $0xdc0] sm:$0xf]
    %v1078 = vld [vmem:[#allocation5 + $0xdc4] sm:$0xf]
    %v1079 = vld [vmem:[#allocation5 + $0xdc8] sm:$0xf]
    %v1080 = vld [vmem:[#allocation5 + $0xdcc] sm:$0xf]
    %v1081 = vld [vmem:[#allocation5 + $0xdd0] sm:$0xf]
    %v1082 = vld [vmem:[#allocation5 + $0xdd4] sm:$0xf]
    %v1083 = vld [vmem:[#allocation5 + $0xdd8] sm:$0xf]
    %v1084 = vld [vmem:[#allocation5 + $0xddc] sm:$0xf]
    %v1085 = vld [vmem:[#allocation5 + $0xde0] sm:$0xf]
    %v1086 = vld [vmem:[#allocation5 + $0xde4] sm:$0xf]
    %v1087 = vld [vmem:[#allocation5 + $0xde8] sm:$0xf]
    %v1088 = vld [vmem:[#allocation5 + $0xdec] sm:$0xf]
    %v1089 = vld [vmem:[#allocation5 + $0xdf0] sm:$0xf]
    %v1090 = vld [vmem:[#allocation5 + $0xdf4] sm:$0xf]
    %v1091 = vld [vmem:[#allocation5 + $0xdf8] sm:$0xf]
    %v1092 = vld [vmem:[#allocation5 + $0xdfc] sm:$0xf]
    %v1093 = vld [vmem:[#allocation5 + $0xe00] sm:$0xf]
    %v1094 = vld [vmem:[#allocation5 + $0xe04] sm:$0xf]
    %v1095 = vld [vmem:[#allocation5 + $0xe08] sm:$0xf]
    %v1096 = vld [vmem:[#allocation5 + $0xe0c] sm:$0xf]
    %v1097 = vld [vmem:[#allocation5 + $0xe10] sm:$0xf]
    %v1098 = vld [vmem:[#allocation5 + $0xe14] sm:$0xf]
    %v1099 = vld [vmem:[#allocation5 + $0xe18] sm:$0xf]
    %v1100 = vld [vmem:[#allocation5 + $0xe1c] sm:$0xf]
    %v1101 = vld [vmem:[#allocation5 + $0xe20] sm:$0xf]
    %v1102 = vld [vmem:[#allocation5 + $0xe24] sm:$0xf]
    %v1103 = vld [vmem:[#allocation5 + $0xe28] sm:$0xf]
    %v1104 = vld [vmem:[#allocation5 + $0xe2c] sm:$0xf]
    %v1105 = vld [vmem:[#allocation5 + $0xe30] sm:$0xf]
    %v1106 = vld [vmem:[#allocation5 + $0xe34] sm:$0xf]
    %v1107 = vld [vmem:[#allocation5 + $0xe38] sm:$0xf]
    %v1108 = vld [vmem:[#allocation5 + $0xe3c] sm:$0xf]
    %v1109 = vld [vmem:[#allocation5 + $0xe40] sm:$0xf]
    %v1110 = vld [vmem:[#allocation5 + $0xe44] sm:$0xf]
    %v1111 = vld [vmem:[#allocation5 + $0xe48] sm:$0xf]
    %v1112 = vld [vmem:[#allocation5 + $0xe4c] sm:$0xf]
    %v1113 = vld [vmem:[#allocation5 + $0xe50] sm:$0xf]
    %v1114 = vld [vmem:[#allocation5 + $0xe54] sm:$0xf]
    %v1115 = vld [vmem:[#allocation5 + $0xe58] sm:$0xf]
    %v1116 = vld [vmem:[#allocation5 + $0xe5c] sm:$0xf]
    %v1117 = vld [vmem:[#allocation5 + $0xe60] sm:$0xf]
    %v1118 = vld [vmem:[#allocation5 + $0xe64] sm:$0xf]
    %v1119 = vld [vmem:[#allocation5 + $0xe68] sm:$0xf]
    %v1120 = vld [vmem:[#allocation5 + $0xe6c] sm:$0xf]
    %v1121 = vld [vmem:[#allocation5 + $0xe70] sm:$0xf]
    %v1122 = vld [vmem:[#allocation5 + $0xe74] sm:$0xf]
    %v1123 = vld [vmem:[#allocation5 + $0xe78] sm:$0xf]
    %v1124 = vld [vmem:[#allocation5 + $0xe7c] sm:$0xf]
    %v1125 = vld [vmem:[#allocation5 + $0xe80] sm:$0xf]
    %v1126 = vld [vmem:[#allocation5 + $0xe84] sm:$0xf]
    %v1127 = vld [vmem:[#allocation5 + $0xe88] sm:$0xf]
    %v1128 = vld [vmem:[#allocation5 + $0xe8c] sm:$0xf]
    %v1129 = vld [vmem:[#allocation5 + $0xe90] sm:$0xf]
    %v1130 = vld [vmem:[#allocation5 + $0xe94] sm:$0xf]
    %v1131 = vld [vmem:[#allocation5 + $0xe98] sm:$0xf]
    %v1132 = vld [vmem:[#allocation5 + $0xe9c] sm:$0xf]
    %v1133 = vld [vmem:[#allocation5 + $0xea0] sm:$0xf]
    %v1134 = vld [vmem:[#allocation5 + $0xea4] sm:$0xf]
    %v1135 = vld [vmem:[#allocation5 + $0xea8] sm:$0xf]
    %v1136 = vld [vmem:[#allocation5 + $0xeac] sm:$0xf]
    %v1137 = vld [vmem:[#allocation5 + $0xeb0] sm:$0xf]
    %v1138 = vld [vmem:[#allocation5 + $0xeb4] sm:$0xf]
    %v1139 = vld [vmem:[#allocation5 + $0xeb8] sm:$0xf]
    %v1140 = vld [vmem:[#allocation5 + $0xebc] sm:$0xf]
    %v1141 = vld [vmem:[#allocation5 + $0xec0] sm:$0xf]
    %v1142 = vld [vmem:[#allocation5 + $0xec4] sm:$0xf]
    %v1143 = vld [vmem:[#allocation5 + $0xec8] sm:$0xf]
    %v1144 = vld [vmem:[#allocation5 + $0xecc] sm:$0xf]
    %v1145 = vld [vmem:[#allocation5 + $0xed0] sm:$0xf]
    %v1146 = vld [vmem:[#allocation5 + $0xed4] sm:$0xf]
    %v1147 = vld [vmem:[#allocation5 + $0xed8] sm:$0xf]
    %v1148 = vld [vmem:[#allocation5 + $0xedc] sm:$0xf]
    %v1149 = vld [vmem:[#allocation5 + $0xee0] sm:$0xf]
    %v1150 = vld [vmem:[#allocation5 + $0xee4] sm:$0xf]
    %v1151 = vld [vmem:[#allocation5 + $0xee8] sm:$0xf]
    %v1152 = vld [vmem:[#allocation5 + $0xeec] sm:$0xf]
    %v1153 = vld [vmem:[#allocation5 + $0xef0] sm:$0xf]
    %v1154 = vld [vmem:[#allocation5 + $0xef4] sm:$0xf]
    %v1155 = vld [vmem:[#allocation5 + $0xef8] sm:$0xf]
    %v1156 = vld [vmem:[#allocation5 + $0xefc] sm:$0xf]
    %v1157 = vld [vmem:[#allocation5 + $0xf00] sm:$0xf]
    %v1158 = vld [vmem:[#allocation5 + $0xf04] sm:$0xf]
    %v1159 = vld [vmem:[#allocation5 + $0xf08] sm:$0xf]
    %v1160 = vld [vmem:[#allocation5 + $0xf0c] sm:$0xf]
    %v1161 = vld [vmem:[#allocation5 + $0xf10] sm:$0xf]
    %v1162 = vld [vmem:[#allocation5 + $0xf14] sm:$0xf]
    %v1163 = vld [vmem:[#allocation5 + $0xf18] sm:$0xf]
    %v1164 = vld [vmem:[#allocation5 + $0xf1c] sm:$0xf]
    %v1165 = vld [vmem:[#allocation5 + $0xf20] sm:$0xf]
    %v1166 = vld [vmem:[#allocation5 + $0xf24] sm:$0xf]
    %v1167 = vld [vmem:[#allocation5 + $0xf28] sm:$0xf]
    %v1168 = vld [vmem:[#allocation5 + $0xf2c] sm:$0xf]
    %v1169 = vld [vmem:[#allocation5 + $0xf30] sm:$0xf]
    %v1170 = vld [vmem:[#allocation5 + $0xf34] sm:$0xf]
    %v1171 = vld [vmem:[#allocation5 + $0xf38] sm:$0xf]
    %v1172 = vld [vmem:[#allocation5 + $0xf3c] sm:$0xf]
    %v1173 = vld [vmem:[#allocation5 + $0xf40] sm:$0xf]
    %v1174 = vld [vmem:[#allocation5 + $0xf44] sm:$0xf]
    %v1175 = vld [vmem:[#allocation5 + $0xf48] sm:$0xf]
    %v1176 = vld [vmem:[#allocation5 + $0xf4c] sm:$0xf]
    %v1177 = vld [vmem:[#allocation5 + $0xf50] sm:$0xf]
    %v1178 = vld [vmem:[#allocation5 + $0xf54] sm:$0xf]
    %v1179 = vld [vmem:[#allocation5 + $0xf58] sm:$0xf]
    %v1180 = vld [vmem:[#allocation5 + $0xf5c] sm:$0xf]
    %v1181 = vld [vmem:[#allocation5 + $0xf60] sm:$0xf]
    %v1182 = vld [vmem:[#allocation5 + $0xf64] sm:$0xf]
    %v1183 = vld [vmem:[#allocation5 + $0xf68] sm:$0xf]
    %v1184 = vld [vmem:[#allocation5 + $0xf6c] sm:$0xf]
    %v1185 = vld [vmem:[#allocation5 + $0xf70] sm:$0xf]
    %v1186 = vld [vmem:[#allocation5 + $0xf74] sm:$0xf]
    %v1187 = vld [vmem:[#allocation5 + $0xf78] sm:$0xf]
    %v1188 = vld [vmem:[#allocation5 + $0xf7c] sm:$0xf]
    %v1189 = vld [vmem:[#allocation5 + $0xf80] sm:$0xf]
    %v1190 = vld [vmem:[#allocation5 + $0xf84] sm:$0xf]
    %v1191 = vld [vmem:[#allocation5 + $0xf88] sm:$0xf]
    %v1192 = vld [vmem:[#allocation5 + $0xf8c] sm:$0xf]
    %v1193 = vld [vmem:[#allocation5 + $0xf90] sm:$0xf]
    %v1194 = vld [vmem:[#allocation5 + $0xf94] sm:$0xf]
    %v1195 = vld [vmem:[#allocation5 + $0xf98] sm:$0xf]
    %v1196 = vld [vmem:[#allocation5 + $0xf9c] sm:$0xf]
    %v1197 = vld [vmem:[#allocation5 + $0xfa0] sm:$0xf]
    %v1198 = vld [vmem:[#allocation5 + $0xfa4] sm:$0xf]
    %v1199 = vld [vmem:[#allocation5 + $0xfa8] sm:$0xf]
    %v1200 = vld [vmem:[#allocation5 + $0xfac] sm:$0xf]
    %v1201 = vld [vmem:[#allocation5 + $0xfb0] sm:$0xf]
    %v1202 = vld [vmem:[#allocation5 + $0xfb4] sm:$0xf]
    %v1203 = vld [vmem:[#allocation5 + $0xfb8] sm:$0xf]
    %v1204 = vld [vmem:[#allocation5 + $0xfbc] sm:$0xf]
    %v1205 = vld [vmem:[#allocation5 + $0xfc0] sm:$0xf]
    %v1206 = vld [vmem:[#allocation5 + $0xfc4] sm:$0xf]
    %v1207 = vld [vmem:[#allocation5 + $0xfc8] sm:$0xf]
    %v1208 = vld [vmem:[#allocation5 + $0xfcc] sm:$0xf]
    %v1209 = vld [vmem:[#allocation5 + $0xfd0] sm:$0xf]
    %v1210 = vld [vmem:[#allocation5 + $0xfd4] sm:$0xf]
    %v1211 = vld [vmem:[#allocation5 + $0xfd8] sm:$0xf]
    %v1212 = vld [vmem:[#allocation5 + $0xfdc] sm:$0xf]
    %v1213 = vld [vmem:[#allocation5 + $0xfe0] sm:$0xf]
    %v1214 = vld [vmem:[#allocation5 + $0xfe4] sm:$0xf]
    %v1215 = vld [vmem:[#allocation5 + $0xfe8] sm:$0xf]
    %v1216 = vld [vmem:[#allocation5 + $0xfec] sm:$0xf]
    %v1217 = vld [vmem:[#allocation5 + $0xff0] sm:$0xf]
    %v1218 = vld [vmem:[#allocation5 + $0xff4] sm:$0xf]
    %v1219 = vld [vmem:[#allocation5 + $0xff8] sm:$0xf]
    %v1220 = vld [vmem:[#allocation5 + $0xffc] sm:$0xf]
    %v1221 = vld [vmem:[#allocation5 + $0x1000] sm:$0xf]
    %v1222 = vld [vmem:[#allocation5 + $0x1004] sm:$0xf]
    %v1223 = vld [vmem:[#allocation5 + $0x1008] sm:$0xf]
    %v1224 = vld [vmem:[#allocation5 + $0x100c] sm:$0xf]
    %v1225 = vld [vmem:[#allocation5 + $0x1010] sm:$0xf]
    %v1226 = vld [vmem:[#allocation5 + $0x1014] sm:$0xf]
    %v1227 = vld [vmem:[#allocation5 + $0x1018] sm:$0xf]
    %v1228 = vld [vmem:[#allocation5 + $0x101c] sm:$0xf]
    %v1229 = vld [vmem:[#allocation5 + $0x1020] sm:$0xf]
    %v1230 = vld [vmem:[#allocation5 + $0x1024] sm:$0xf]
    %v1231 = vld [vmem:[#allocation5 + $0x1028] sm:$0xf]
    %v1232 = vld [vmem:[#allocation5 + $0x102c] sm:$0xf]
    %v1233 = vld [vmem:[#allocation5 + $0x1030] sm:$0xf]
    %v1234 = vld [vmem:[#allocation5 + $0x1034] sm:$0xf]
    %v1235 = vld [vmem:[#allocation5 + $0x1038] sm:$0xf]
    %v1236 = vld [vmem:[#allocation5 + $0x103c] sm:$0xf]
    %v1237 = vld [vmem:[#allocation5 + $0x1040] sm:$0xf]
    %v1238 = vld [vmem:[#allocation5 + $0x1044] sm:$0xf]
    %v1239 = vld [vmem:[#allocation5 + $0x1048] sm:$0xf]
    %v1240 = vld [vmem:[#allocation5 + $0x104c] sm:$0xf]
    %v1241 = vld [vmem:[#allocation5 + $0x1050] sm:$0xf]
    %v1242 = vld [vmem:[#allocation5 + $0x1054] sm:$0xf]
    %v1243 = vld [vmem:[#allocation5 + $0x1058] sm:$0xf]
    %v1244 = vld [vmem:[#allocation5 + $0x105c] sm:$0xf]
    %v1245 = vld [vmem:[#allocation5 + $0x1060] sm:$0xf]
    %v1246 = vld [vmem:[#allocation5 + $0x1064] sm:$0xf]
    %v1247 = vld [vmem:[#allocation5 + $0x1068] sm:$0xf]
    %v1248 = vld [vmem:[#allocation5 + $0x106c] sm:$0xf]
    %v1249 = vld [vmem:[#allocation5 + $0x1070] sm:$0xf]
    %v1250 = vld [vmem:[#allocation5 + $0x1074] sm:$0xf]
    %v1251 = vld [vmem:[#allocation5 + $0x1078] sm:$0xf]
    %v1252 = vld [vmem:[#allocation5 + $0x107c] sm:$0xf]
    %v1253 = vld [vmem:[#allocation5 + $0x1080] sm:$0xf]
    %v1254 = vld [vmem:[#allocation5 + $0x1084] sm:$0xf]
    %v1255 = vld [vmem:[#allocation5 + $0x1088] sm:$0xf]
    %v1256 = vld [vmem:[#allocation5 + $0x108c] sm:$0xf]
    %v1257 = vld [vmem:[#allocation5 + $0x1090] sm:$0xf]
    %v1258 = vld [vmem:[#allocation5 + $0x1094] sm:$0xf]
    %v1259 = vld [vmem:[#allocation5 + $0x1098] sm:$0xf]
    %v1260 = vld [vmem:[#allocation5 + $0x109c] sm:$0xf]
    %v1261 = vld [vmem:[#allocation5 + $0x10a0] sm:$0xf]
    %v1262 = vld [vmem:[#allocation5 + $0x10a4] sm:$0xf]
    %v1263 = vld [vmem:[#allocation5 + $0x10a8] sm:$0xf]
    %v1264 = vld [vmem:[#allocation5 + $0x10ac] sm:$0xf]
    %v1265 = vld [vmem:[#allocation5 + $0x10b0] sm:$0xf]
    %v1266 = vld [vmem:[#allocation5 + $0x10b4] sm:$0xf]
    %v1267 = vld [vmem:[#allocation5 + $0x10b8] sm:$0xf]
    %v1268 = vld [vmem:[#allocation5 + $0x10bc] sm:$0xf]
    %v1269 = vld [vmem:[#allocation5 + $0x10c0] sm:$0xf]
    %v1270 = vld [vmem:[#allocation5 + $0x10c4] sm:$0xf]
    %v1271 = vld [vmem:[#allocation5 + $0x10c8] sm:$0xf]
    %v1272 = vld [vmem:[#allocation5 + $0x10cc] sm:$0xf]
    %v1273 = vld [vmem:[#allocation5 + $0x10d0] sm:$0xf]
    %v1274 = vld [vmem:[#allocation5 + $0x10d4] sm:$0xf]
    %v1275 = vld [vmem:[#allocation5 + $0x10d8] sm:$0xf]
    %v1276 = vld [vmem:[#allocation5 + $0x10dc] sm:$0xf]
    %v1277 = vld [vmem:[#allocation5 + $0x10e0] sm:$0xf]
    %v1278 = vld [vmem:[#allocation5 + $0x10e4] sm:$0xf]
    %v1279 = vld [vmem:[#allocation5 + $0x10e8] sm:$0xf]
    %v1280 = vld [vmem:[#allocation5 + $0x10ec] sm:$0xf]
    %v1281 = vld [vmem:[#allocation5 + $0x10f0] sm:$0xf]
    %v1282 = vld [vmem:[#allocation5 + $0x10f4] sm:$0xf]
    %v1283 = vld [vmem:[#allocation5 + $0x10f8] sm:$0xf]
    %v1284 = vld [vmem:[#allocation5 + $0x10fc] sm:$0xf]
    %v1285 = vld [vmem:[#allocation5 + $0x1100] sm:$0xf]
    %v1286 = vld [vmem:[#allocation5 + $0x1104] sm:$0xf]
    %v1287 = vld [vmem:[#allocation5 + $0x1108] sm:$0xf]
    %v1288 = vld [vmem:[#allocation5 + $0x110c] sm:$0xf]
    %v1289 = vld [vmem:[#allocation5 + $0x1110] sm:$0xf]
    %v1290 = vld [vmem:[#allocation5 + $0x1114] sm:$0xf]
    %v1291 = vld [vmem:[#allocation5 + $0x1118] sm:$0xf]
    %v1292 = vld [vmem:[#allocation5 + $0x111c] sm:$0xf]
    %v1293 = vld [vmem:[#allocation5 + $0x1120] sm:$0xf]
    %v1294 = vld [vmem:[#allocation5 + $0x1124] sm:$0xf]
    %v1295 = vld [vmem:[#allocation5 + $0x1128] sm:$0xf]
    %v1296 = vld [vmem:[#allocation5 + $0x112c] sm:$0xf]
    %v1297 = vld [vmem:[#allocation5 + $0x1130] sm:$0xf]
    %v1298 = vld [vmem:[#allocation5 + $0x1134] sm:$0xf]
    %v1299 = vld [vmem:[#allocation5 + $0x1138] sm:$0xf]
    %v1300 = vld [vmem:[#allocation5 + $0x113c] sm:$0xf]
    %v1301 = vld [vmem:[#allocation5 + $0x1140] sm:$0xf]
    %v1302 = vld [vmem:[#allocation5 + $0x1144] sm:$0xf]
    %v1303 = vld [vmem:[#allocation5 + $0x1148] sm:$0xf]
    %v1304 = vld [vmem:[#allocation5 + $0x114c] sm:$0xf]
    %v1305 = vld [vmem:[#allocation5 + $0x1150] sm:$0xf]
    %v1306 = vld [vmem:[#allocation5 + $0x1154] sm:$0xf]
    %v1307 = vld [vmem:[#allocation5 + $0x1158] sm:$0xf]
    %v1308 = vld [vmem:[#allocation5 + $0x115c] sm:$0xf]
    %v1309 = vld [vmem:[#allocation5 + $0x1160] sm:$0xf]
    %v1310 = vld [vmem:[#allocation5 + $0x1164] sm:$0xf]
    %v1311 = vld [vmem:[#allocation5 + $0x1168] sm:$0xf]
    %v1312 = vld [vmem:[#allocation5 + $0x116c] sm:$0xf]
    %v1313 = vld [vmem:[#allocation5 + $0x1170] sm:$0xf]
    %v1314 = vld [vmem:[#allocation5 + $0x1174] sm:$0xf]
    %v1315 = vld [vmem:[#allocation5 + $0x1178] sm:$0xf]
    %v1316 = vld [vmem:[#allocation5 + $0x117c] sm:$0xf]
    %v1317 = vld [vmem:[#allocation5 + $0x1180] sm:$0xf]
    %v1318 = vld [vmem:[#allocation5 + $0x1184] sm:$0xf]
    %v1319 = vld [vmem:[#allocation5 + $0x1188] sm:$0xf]
    %v1320 = vld [vmem:[#allocation5 + $0x118c] sm:$0xf]
    %v1321 = vld [vmem:[#allocation5 + $0x1190] sm:$0xf]
    %v1322 = vld [vmem:[#allocation5 + $0x1194] sm:$0xf]
    %v1323 = vld [vmem:[#allocation5 + $0x1198] sm:$0xf]
    %v1324 = vld [vmem:[#allocation5 + $0x119c] sm:$0xf]
    %v1325 = vld [vmem:[#allocation5 + $0x11a0] sm:$0xf]
    %v1326 = vld [vmem:[#allocation5 + $0x11a4] sm:$0xf]
    %v1327 = vld [vmem:[#allocation5 + $0x11a8] sm:$0xf]
    %v1328 = vld [vmem:[#allocation5 + $0x11ac] sm:$0xf]
    %v1329 = vld [vmem:[#allocation5 + $0x11b0] sm:$0xf]
    %v1330 = vld [vmem:[#allocation5 + $0x11b4] sm:$0xf]
    %v1331 = vld [vmem:[#allocation5 + $0x11b8] sm:$0xf]
    %v1332 = vld [vmem:[#allocation5 + $0x11bc] sm:$0xf]
    %v1333 = vld [vmem:[#allocation5 + $0x11c0] sm:$0xf]
    %v1334 = vld [vmem:[#allocation5 + $0x11c4] sm:$0xf]
    %v1335 = vld [vmem:[#allocation5 + $0x11c8] sm:$0xf]
    %v1336 = vld [vmem:[#allocation5 + $0x11cc] sm:$0xf]
    %v1337 = vld [vmem:[#allocation5 + $0x11d0] sm:$0xf]
    %v1338 = vld [vmem:[#allocation5 + $0x11d4] sm:$0xf]
    %v1339 = vld [vmem:[#allocation5 + $0x11d8] sm:$0xf]
    %v1340 = vld [vmem:[#allocation5 + $0x11dc] sm:$0xf]
    %v1341 = vld [vmem:[#allocation5 + $0x11e0] sm:$0xf]
    %v1342 = vld [vmem:[#allocation5 + $0x11e4] sm:$0xf]
    %v1343 = vld [vmem:[#allocation5 + $0x11e8] sm:$0xf]
    %v1344 = vld [vmem:[#allocation5 + $0x11ec] sm:$0xf]
    %v1345 = vld [vmem:[#allocation5 + $0x11f0] sm:$0xf]
    %v1346 = vld [vmem:[#allocation5 + $0x11f4] sm:$0xf]
    %v1347 = vld [vmem:[#allocation5 + $0x11f8] sm:$0xf]
    %v1348 = vld [vmem:[#allocation5 + $0x11fc] sm:$0xf]
    %v1349 = vld [vmem:[#allocation7] sm:$0x1]
    %v1351 = vlaneseq
    %v1352 = vshrl.u32 %v1351, 7
    %v1353 = vsub.s32 0, %v1352
    %v1354 = vrot.slane %v1349, %v1353
    %v2508 = vunpack.c.l.b16 %v197
    %v2509 = vunpack.c.l.b16 %v198
    %v2510 = vunpack.c.l.b16 %v199
    %v2511 = vunpack.c.l.b16 %v200
    %v2512 = vunpack.c.l.b16 %v201
    %v2513 = vunpack.c.l.b16 %v202
    %v2514 = vunpack.c.l.b16 %v203
    %v2515 = vunpack.c.l.b16 %v204
    %v2516 = vunpack.c.l.b16 %v205
    %v2517 = vunpack.c.l.b16 %v206
    %v2518 = vunpack.c.l.b16 %v207
    %v2519 = vunpack.c.l.b16 %v208
    %v2520 = vunpack.c.l.b16 %v209
    %v2521 = vunpack.c.l.b16 %v210
    %v2522 = vunpack.c.l.b16 %v211
    %v2523 = vunpack.c.l.b16 %v212
    %v2524 = vunpack.c.l.b16 %v213
    %v2525 = vunpack.c.l.b16 %v214
    %v2526 = vunpack.c.l.b16 %v215
    %v2527 = vunpack.c.l.b16 %v216
    %v2528 = vunpack.c.l.b16 %v217
    %v2529 = vunpack.c.l.b16 %v218
    %v2530 = vunpack.c.l.b16 %v219
    %v2531 = vunpack.c.l.b16 %v220
    %v2532 = vunpack.c.l.b16 %v221
    %v2533 = vunpack.c.l.b16 %v222
    %v2534 = vunpack.c.l.b16 %v223
    %v2535 = vunpack.c.l.b16 %v224
    %v2536 = vunpack.c.l.b16 %v225
    %v2537 = vunpack.c.l.b16 %v226
    %v2538 = vunpack.c.l.b16 %v227
    %v2539 = vunpack.c.l.b16 %v228
    %v2540 = vunpack.c.l.b16 %v229
    %v2541 = vunpack.c.l.b16 %v230
    %v2542 = vunpack.c.l.b16 %v231
    %v2543 = vunpack.c.l.b16 %v232
    %v2544 = vunpack.c.l.b16 %v233
    %v2545 = vunpack.c.l.b16 %v234
    %v2546 = vunpack.c.l.b16 %v235
    %v2547 = vunpack.c.l.b16 %v236
    %v2548 = vunpack.c.l.b16 %v237
    %v2549 = vunpack.c.l.b16 %v238
    %v2550 = vunpack.c.l.b16 %v239
    %v2551 = vunpack.c.l.b16 %v240
    %v2552 = vunpack.c.l.b16 %v241
    %v2553 = vunpack.c.l.b16 %v242
    %v2554 = vunpack.c.l.b16 %v243
    %v2555 = vunpack.c.l.b16 %v244
    %v2556 = vunpack.c.l.b16 %v245
    %v2557 = vunpack.c.l.b16 %v246
    %v2558 = vunpack.c.l.b16 %v247
    %v2559 = vunpack.c.l.b16 %v248
    %v2560 = vunpack.c.l.b16 %v249
    %v2561 = vunpack.c.l.b16 %v250
    %v2562 = vunpack.c.l.b16 %v251
    %v2563 = vunpack.c.l.b16 %v252
    %v2564 = vunpack.c.l.b16 %v253
    %v2565 = vunpack.c.l.b16 %v254
    %v2566 = vunpack.c.l.b16 %v255
    %v2567 = vunpack.c.l.b16 %v256
    %v2568 = vunpack.c.l.b16 %v257
    %v2569 = vunpack.c.l.b16 %v258
    %v2570 = vunpack.c.l.b16 %v259
    %v2571 = vunpack.c.l.b16 %v260
    %v2572 = vunpack.c.l.b16 %v261
    %v2573 = vunpack.c.l.b16 %v262
    %v2574 = vunpack.c.l.b16 %v263
    %v2575 = vunpack.c.l.b16 %v264
    %v2576 = vunpack.c.l.b16 %v265
    %v2577 = vunpack.c.l.b16 %v266
    %v2578 = vunpack.c.l.b16 %v267
    %v2579 = vunpack.c.l.b16 %v268
    %v2580 = vunpack.c.l.b16 %v269
    %v2581 = vunpack.c.l.b16 %v270
    %v2582 = vunpack.c.l.b16 %v271
    %v2583 = vunpack.c.l.b16 %v272
    %v2584 = vunpack.c.l.b16 %v273
    %v2585 = vunpack.c.l.b16 %v274
    %v2586 = vunpack.c.l.b16 %v275
    %v2587 = vunpack.c.l.b16 %v276
    %v2588 = vunpack.c.l.b16 %v277
    %v2589 = vunpack.c.l.b16 %v278
    %v2590 = vunpack.c.l.b16 %v279
    %v2591 = vunpack.c.l.b16 %v280
    %v2592 = vunpack.c.l.b16 %v281
    %v2593 = vunpack.c.l.b16 %v282
    %v2594 = vunpack.c.l.b16 %v283
    %v2595 = vunpack.c.l.b16 %v284
    %v2596 = vunpack.c.l.b16 %v285
    %v2597 = vunpack.c.l.b16 %v286
    %v2598 = vunpack.c.l.b16 %v287
    %v2599 = vunpack.c.l.b16 %v288
    %v2600 = vunpack.c.l.b16 %v289
    %v2601 = vunpack.c.l.b16 %v290
    %v2602 = vunpack.c.l.b16 %v291
    %v2603 = vunpack.c.l.b16 %v292
    %v2604 = vunpack.c.l.b16 %v293
    %v2605 = vunpack.c.l.b16 %v294
    %v2606 = vunpack.c.l.b16 %v295
    %v2607 = vunpack.c.l.b16 %v296
    %v2608 = vunpack.c.l.b16 %v297
    %v2609 = vunpack.c.l.b16 %v298
    %v2610 = vunpack.c.l.b16 %v299
    %v2611 = vunpack.c.l.b16 %v300
    %v2612 = vunpack.c.l.b16 %v301
    %v2613 = vunpack.c.l.b16 %v302
    %v2614 = vunpack.c.l.b16 %v303
    %v2615 = vunpack.c.l.b16 %v304
    %v2616 = vunpack.c.l.b16 %v305
    %v2617 = vunpack.c.l.b16 %v306
    %v2618 = vunpack.c.l.b16 %v307
    %v2619 = vunpack.c.l.b16 %v308
    %v2620 = vunpack.c.l.b16 %v309
    %v2621 = vunpack.c.l.b16 %v310
    %v2622 = vunpack.c.l.b16 %v311
    %v2623 = vunpack.c.l.b16 %v312
    %v2624 = vunpack.c.l.b16 %v313
    %v2625 = vunpack.c.l.b16 %v314
    %v2626 = vunpack.c.l.b16 %v315
    %v2627 = vunpack.c.l.b16 %v316
    %v2628 = vunpack.c.l.b16 %v317
    %v2629 = vunpack.c.l.b16 %v318
    %v2630 = vunpack.c.l.b16 %v319
    %v2631 = vunpack.c.l.b16 %v320
    %v2632 = vunpack.c.l.b16 %v321
    %v2633 = vunpack.c.l.b16 %v322
    %v2634 = vunpack.c.l.b16 %v323
    %v2635 = vunpack.c.l.b16 %v324
    %v2636 = vunpack.c.l.b16 %v325
    %v2637 = vunpack.c.l.b16 %v326
    %v2638 = vunpack.c.l.b16 %v327
    %v2639 = vunpack.c.l.b16 %v328
    %v2640 = vunpack.c.l.b16 %v329
    %v2641 = vunpack.c.l.b16 %v330
    %v2642 = vunpack.c.l.b16 %v331
    %v2643 = vunpack.c.l.b16 %v332
    %v2644 = vunpack.c.l.b16 %v333
    %v2645 = vunpack.c.l.b16 %v334
    %v2646 = vunpack.c.l.b16 %v335
    %v2647 = vunpack.c.l.b16 %v336
    %v2648 = vunpack.c.l.b16 %v337
    %v2649 = vunpack.c.l.b16 %v338
    %v2650 = vunpack.c.l.b16 %v339
    %v2651 = vunpack.c.l.b16 %v340
    %v2652 = vunpack.c.l.b16 %v341
    %v2653 = vunpack.c.l.b16 %v342
    %v2654 = vunpack.c.l.b16 %v343
    %v2655 = vunpack.c.l.b16 %v344
    %v2656 = vunpack.c.l.b16 %v345
    %v2657 = vunpack.c.l.b16 %v346
    %v2658 = vunpack.c.l.b16 %v347
    %v2659 = vunpack.c.l.b16 %v348
    %v2660 = vunpack.c.l.b16 %v349
    %v2661 = vunpack.c.l.b16 %v350
    %v2662 = vunpack.c.l.b16 %v351
    %v2663 = vunpack.c.l.b16 %v352
    %v2664 = vunpack.c.l.b16 %v353
    %v2665 = vunpack.c.l.b16 %v354
    %v2666 = vunpack.c.l.b16 %v355
    %v2667 = vunpack.c.l.b16 %v356
    %v2668 = vunpack.c.l.b16 %v357
    %v2669 = vunpack.c.l.b16 %v358
    %v2670 = vunpack.c.l.b16 %v359
    %v2671 = vunpack.c.l.b16 %v360
    %v2672 = vunpack.c.l.b16 %v361
    %v2673 = vunpack.c.l.b16 %v362
    %v2674 = vunpack.c.l.b16 %v363
    %v2675 = vunpack.c.l.b16 %v364
    %v2676 = vunpack.c.l.b16 %v365
    %v2677 = vunpack.c.l.b16 %v366
    %v2678 = vunpack.c.l.b16 %v367
    %v2679 = vunpack.c.l.b16 %v368
    %v2680 = vunpack.c.l.b16 %v369
    %v2681 = vunpack.c.l.b16 %v370
    %v2682 = vunpack.c.l.b16 %v371
    %v2683 = vunpack.c.l.b16 %v372
    %v2684 = vunpack.c.l.b16 %v373
    %v2685 = vunpack.c.l.b16 %v374
    %v2686 = vunpack.c.l.b16 %v375
    %v2687 = vunpack.c.l.b16 %v376
    %v2688 = vunpack.c.l.b16 %v377
    %v2689 = vunpack.c.l.b16 %v378
    %v2690 = vunpack.c.l.b16 %v379
    %v2691 = vunpack.c.l.b16 %v380
    %v2692 = vunpack.c.l.b16 %v381
    %v2693 = vunpack.c.l.b16 %v382
    %v2694 = vunpack.c.l.b16 %v383
    %v2695 = vunpack.c.l.b16 %v384
    %v2696 = vunpack.c.l.b16 %v385
    %v2697 = vunpack.c.l.b16 %v386
    %v2698 = vunpack.c.l.b16 %v387
    %v2699 = vunpack.c.l.b16 %v388
    %v2700 = vunpack.c.l.b16 %v389
    %v2701 = vunpack.c.l.b16 %v390
    %v2702 = vunpack.c.l.b16 %v391
    %v2703 = vunpack.c.l.b16 %v392
    %v2704 = vunpack.c.l.b16 %v393
    %v2705 = vunpack.c.l.b16 %v394
    %v2706 = vunpack.c.l.b16 %v395
    %v2707 = vunpack.c.l.b16 %v396
    %v2708 = vunpack.c.l.b16 %v397
    %v2709 = vunpack.c.l.b16 %v398
    %v2710 = vunpack.c.l.b16 %v399
    %v2711 = vunpack.c.l.b16 %v400
    %v2712 = vunpack.c.l.b16 %v401
    %v2713 = vunpack.c.l.b16 %v402
    %v2714 = vunpack.c.l.b16 %v403
    %v2715 = vunpack.c.l.b16 %v404
    %v2716 = vunpack.c.l.b16 %v405
    %v2717 = vunpack.c.l.b16 %v406
    %v2718 = vunpack.c.l.b16 %v407
    %v2719 = vunpack.c.l.b16 %v408
    %v2720 = vunpack.c.l.b16 %v409
    %v2721 = vunpack.c.l.b16 %v410
    %v2722 = vunpack.c.l.b16 %v411
    %v2723 = vunpack.c.l.b16 %v412
    %v2724 = vunpack.c.l.b16 %v413
    %v2725 = vunpack.c.l.b16 %v414
    %v2726 = vunpack.c.l.b16 %v415
    %v2727 = vunpack.c.l.b16 %v416
    %v2728 = vunpack.c.l.b16 %v417
    %v2729 = vunpack.c.l.b16 %v418
    %v2730 = vunpack.c.l.b16 %v419
    %v2731 = vunpack.c.l.b16 %v420
    %v2732 = vunpack.c.l.b16 %v421
    %v2733 = vunpack.c.l.b16 %v422
    %v2734 = vunpack.c.l.b16 %v423
    %v2735 = vunpack.c.l.b16 %v424
    %v2736 = vunpack.c.l.b16 %v425
    %v2737 = vunpack.c.l.b16 %v426
    %v2738 = vunpack.c.l.b16 %v427
    %v2739 = vunpack.c.l.b16 %v428
    %v2740 = vunpack.c.l.b16 %v429
    %v2741 = vunpack.c.l.b16 %v430
    %v2742 = vunpack.c.l.b16 %v431
    %v2743 = vunpack.c.l.b16 %v432
    %v2744 = vunpack.c.l.b16 %v433
    %v2745 = vunpack.c.l.b16 %v434
    %v2746 = vunpack.c.l.b16 %v435
    %v2747 = vunpack.c.l.b16 %v436
    %v2748 = vunpack.c.l.b16 %v437
    %v2749 = vunpack.c.l.b16 %v438
    %v2750 = vunpack.c.l.b16 %v439
    %v2751 = vunpack.c.l.b16 %v440
    %v2752 = vunpack.c.l.b16 %v441
    %v2753 = vunpack.c.l.b16 %v442
    %v2754 = vunpack.c.l.b16 %v443
    %v2755 = vunpack.c.l.b16 %v444
    %v2756 = vunpack.c.l.b16 %v445
    %v2757 = vunpack.c.l.b16 %v446
    %v2758 = vunpack.c.l.b16 %v447
    %v2759 = vunpack.c.l.b16 %v448
    %v2760 = vunpack.c.l.b16 %v449
    %v2761 = vunpack.c.l.b16 %v450
    %v2762 = vunpack.c.l.b16 %v451
    %v2763 = vunpack.c.l.b16 %v452
    %v2764 = vunpack.c.l.b16 %v453
    %v2765 = vunpack.c.l.b16 %v454
    %v2766 = vunpack.c.l.b16 %v455
    %v2767 = vunpack.c.l.b16 %v456
    %v2768 = vunpack.c.l.b16 %v457
    %v2769 = vunpack.c.l.b16 %v458
    %v2770 = vunpack.c.l.b16 %v459
    %v2771 = vunpack.c.l.b16 %v460
    %v2772 = vunpack.c.l.b16 %v461
    %v2773 = vunpack.c.l.b16 %v462
    %v2774 = vunpack.c.l.b16 %v463
    %v2775 = vunpack.c.l.b16 %v464
    %v2776 = vunpack.c.l.b16 %v465
    %v2777 = vunpack.c.l.b16 %v466
    %v2778 = vunpack.c.l.b16 %v467
    %v2779 = vunpack.c.l.b16 %v468
    %v2780 = vunpack.c.l.b16 %v469
    %v2781 = vunpack.c.l.b16 %v470
    %v2782 = vunpack.c.l.b16 %v471
    %v2783 = vunpack.c.l.b16 %v472
    %v2784 = vunpack.c.l.b16 %v473
    %v2785 = vunpack.c.l.b16 %v474
    %v2786 = vunpack.c.l.b16 %v475
    %v2787 = vunpack.c.l.b16 %v476
    %v2788 = vunpack.c.l.b16 %v477
    %v2789 = vunpack.c.l.b16 %v478
    %v2790 = vunpack.c.l.b16 %v479
    %v2791 = vunpack.c.l.b16 %v480
    %v2792 = vunpack.c.l.b16 %v481
    %v2793 = vunpack.c.l.b16 %v482
    %v2794 = vunpack.c.l.b16 %v483
    %v2795 = vunpack.c.l.b16 %v484
    %v2796 = vunpack.c.l.b16 %v485
    %v2797 = vunpack.c.l.b16 %v486
    %v2798 = vunpack.c.l.b16 %v487
    %v2799 = vunpack.c.l.b16 %v488
    %v2800 = vunpack.c.l.b16 %v489
    %v2801 = vunpack.c.l.b16 %v490
    %v2802 = vunpack.c.l.b16 %v491
    %v2803 = vunpack.c.l.b16 %v492
    %v2804 = vunpack.c.l.b16 %v493
    %v2805 = vunpack.c.l.b16 %v494
    %v2806 = vunpack.c.l.b16 %v495
    %v2807 = vunpack.c.l.b16 %v496
    %v2808 = vunpack.c.l.b16 %v497
    %v2809 = vunpack.c.l.b16 %v498
    %v2810 = vunpack.c.l.b16 %v499
    %v2811 = vunpack.c.l.b16 %v500
    %v2812 = vunpack.c.l.b16 %v501
    %v2813 = vunpack.c.l.b16 %v502
    %v2814 = vunpack.c.l.b16 %v503
    %v2815 = vunpack.c.l.b16 %v504
    %v2816 = vunpack.c.l.b16 %v505
    %v2817 = vunpack.c.l.b16 %v506
    %v2818 = vunpack.c.l.b16 %v507
    %v2819 = vunpack.c.l.b16 %v508
    %v2820 = vunpack.c.l.b16 %v509
    %v2821 = vunpack.c.l.b16 %v510
    %v2822 = vunpack.c.l.b16 %v511
    %v2823 = vunpack.c.l.b16 %v512
    %v2824 = vunpack.c.l.b16 %v513
    %v2825 = vunpack.c.l.b16 %v514
    %v2826 = vunpack.c.l.b16 %v515
    %v2827 = vunpack.c.l.b16 %v516
    %v2828 = vunpack.c.l.b16 %v517
    %v2829 = vunpack.c.l.b16 %v518
    %v2830 = vunpack.c.l.b16 %v519
    %v2831 = vunpack.c.l.b16 %v520
    %v2832 = vunpack.c.l.b16 %v521
    %v2833 = vunpack.c.l.b16 %v522
    %v2834 = vunpack.c.l.b16 %v523
    %v2835 = vunpack.c.l.b16 %v524
    %v2836 = vunpack.c.l.b16 %v525
    %v2837 = vunpack.c.l.b16 %v526
    %v2838 = vunpack.c.l.b16 %v527
    %v2839 = vunpack.c.l.b16 %v528
    %v2840 = vunpack.c.l.b16 %v529
    %v2841 = vunpack.c.l.b16 %v530
    %v2842 = vunpack.c.l.b16 %v531
    %v2843 = vunpack.c.l.b16 %v532
    %v2844 = vunpack.c.l.b16 %v533
    %v2845 = vunpack.c.l.b16 %v534
    %v2846 = vunpack.c.l.b16 %v535
    %v2847 = vunpack.c.l.b16 %v536
    %v2848 = vunpack.c.l.b16 %v537
    %v2849 = vunpack.c.l.b16 %v538
    %v2850 = vunpack.c.l.b16 %v539
    %v2851 = vunpack.c.l.b16 %v540
    %v2852 = vunpack.c.l.b16 %v541
    %v2853 = vunpack.c.l.b16 %v542
    %v2854 = vunpack.c.l.b16 %v543
    %v2855 = vunpack.c.l.b16 %v544
    %v2856 = vunpack.c.l.b16 %v545
    %v2857 = vunpack.c.l.b16 %v546
    %v2858 = vunpack.c.l.b16 %v547
    %v2859 = vunpack.c.l.b16 %v548
    %v2860 = vunpack.c.l.b16 %v549
    %v2861 = vunpack.c.l.b16 %v550
    %v2862 = vunpack.c.l.b16 %v551
    %v2863 = vunpack.c.l.b16 %v552
    %v2864 = vunpack.c.l.b16 %v553
    %v2865 = vunpack.c.l.b16 %v554
    %v2866 = vunpack.c.l.b16 %v555
    %v2867 = vunpack.c.l.b16 %v556
    %v2868 = vunpack.c.l.b16 %v557
    %v2869 = vunpack.c.l.b16 %v558
    %v2870 = vunpack.c.l.b16 %v559
    %v2871 = vunpack.c.l.b16 %v560
    %v2872 = vunpack.c.l.b16 %v561
    %v2873 = vunpack.c.l.b16 %v562
    %v2874 = vunpack.c.l.b16 %v563
    %v2875 = vunpack.c.l.b16 %v564
    %v2876 = vunpack.c.l.b16 %v565
    %v2877 = vunpack.c.l.b16 %v566
    %v2878 = vunpack.c.l.b16 %v567
    %v2879 = vunpack.c.l.b16 %v568
    %v2880 = vunpack.c.l.b16 %v569
    %v2881 = vunpack.c.l.b16 %v570
    %v2882 = vunpack.c.l.b16 %v571
    %v2883 = vunpack.c.l.b16 %v572
    %v2884 = vunpack.c.l.b16 %v573
    %v2885 = vunpack.c.l.b16 %v574
    %v2886 = vunpack.c.l.b16 %v575
    %v2887 = vunpack.c.l.b16 %v576
    %v2888 = vunpack.c.l.b16 %v577
    %v2889 = vunpack.c.l.b16 %v578
    %v2890 = vunpack.c.l.b16 %v579
    %v2891 = vunpack.c.l.b16 %v580
    %v2892 = vunpack.c.l.b16 %v581
    %v2893 = vunpack.c.l.b16 %v582
    %v2894 = vunpack.c.l.b16 %v583
    %v2895 = vunpack.c.l.b16 %v584
    %v2896 = vunpack.c.l.b16 %v585
    %v2897 = vunpack.c.l.b16 %v586
    %v2898 = vunpack.c.l.b16 %v587
    %v2899 = vunpack.c.l.b16 %v588
    %v2900 = vunpack.c.l.b16 %v589
    %v2901 = vunpack.c.l.b16 %v590
    %v2902 = vunpack.c.l.b16 %v591
    %v2903 = vunpack.c.l.b16 %v592
    %v2904 = vunpack.c.l.b16 %v593
    %v2905 = vunpack.c.l.b16 %v594
    %v2906 = vunpack.c.l.b16 %v595
    %v2907 = vunpack.c.l.b16 %v596
    %v2908 = vunpack.c.l.b16 %v597
    %v2909 = vunpack.c.l.b16 %v598
    %v2910 = vunpack.c.l.b16 %v599
    %v2911 = vunpack.c.l.b16 %v600
    %v2912 = vunpack.c.l.b16 %v601
    %v2913 = vunpack.c.l.b16 %v602
    %v2914 = vunpack.c.l.b16 %v603
    %v2915 = vunpack.c.l.b16 %v604
    %v2916 = vunpack.c.l.b16 %v605
    %v2917 = vunpack.c.l.b16 %v606
    %v2918 = vunpack.c.l.b16 %v607
    %v2919 = vunpack.c.l.b16 %v608
    %v2920 = vunpack.c.l.b16 %v609
    %v2921 = vunpack.c.l.b16 %v610
    %v2922 = vunpack.c.l.b16 %v611
    %v2923 = vunpack.c.l.b16 %v612
    %v2924 = vunpack.c.l.b16 %v613
    %v2925 = vunpack.c.l.b16 %v614
    %v2926 = vunpack.c.l.b16 %v615
    %v2927 = vunpack.c.l.b16 %v616
    %v2928 = vunpack.c.l.b16 %v617
    %v2929 = vunpack.c.l.b16 %v618
    %v2930 = vunpack.c.l.b16 %v619
    %v2931 = vunpack.c.l.b16 %v620
    %v2932 = vunpack.c.l.b16 %v621
    %v2933 = vunpack.c.l.b16 %v622
    %v2934 = vunpack.c.l.b16 %v623
    %v2935 = vunpack.c.l.b16 %v624
    %v2936 = vunpack.c.l.b16 %v625
    %v2937 = vunpack.c.l.b16 %v626
    %v2938 = vunpack.c.l.b16 %v627
    %v2939 = vunpack.c.l.b16 %v628
    %v2940 = vunpack.c.l.b16 %v629
    %v2941 = vunpack.c.l.b16 %v630
    %v2942 = vunpack.c.l.b16 %v631
    %v2943 = vunpack.c.l.b16 %v632
    %v2944 = vunpack.c.l.b16 %v633
    %v2945 = vunpack.c.l.b16 %v634
    %v2946 = vunpack.c.l.b16 %v635
    %v2947 = vunpack.c.l.b16 %v636
    %v2948 = vunpack.c.l.b16 %v637
    %v2949 = vunpack.c.l.b16 %v638
    %v2950 = vunpack.c.l.b16 %v639
    %v2951 = vunpack.c.l.b16 %v640
    %v2952 = vunpack.c.l.b16 %v641
    %v2953 = vunpack.c.l.b16 %v642
    %v2954 = vunpack.c.l.b16 %v643
    %v2955 = vunpack.c.l.b16 %v644
    %v2956 = vunpack.c.l.b16 %v645
    %v2957 = vunpack.c.l.b16 %v646
    %v2958 = vunpack.c.l.b16 %v647
    %v2959 = vunpack.c.l.b16 %v648
    %v2960 = vunpack.c.l.b16 %v649
    %v2961 = vunpack.c.l.b16 %v650
    %v2962 = vunpack.c.l.b16 %v651
    %v2963 = vunpack.c.l.b16 %v652
    %v2964 = vunpack.c.l.b16 %v653
    %v2965 = vunpack.c.l.b16 %v654
    %v2966 = vunpack.c.l.b16 %v655
    %v2967 = vunpack.c.l.b16 %v656
    %v2968 = vunpack.c.l.b16 %v657
    %v2969 = vunpack.c.l.b16 %v658
    %v2970 = vunpack.c.l.b16 %v659
    %v2971 = vunpack.c.l.b16 %v660
    %v2972 = vunpack.c.l.b16 %v661
    %v2973 = vunpack.c.l.b16 %v662
    %v2974 = vunpack.c.l.b16 %v663
    %v2975 = vunpack.c.l.b16 %v664
    %v2976 = vunpack.c.l.b16 %v665
    %v2977 = vunpack.c.l.b16 %v666
    %v2978 = vunpack.c.l.b16 %v667
    %v2979 = vunpack.c.l.b16 %v668
    %v2980 = vunpack.c.l.b16 %v669
    %v2981 = vunpack.c.l.b16 %v670
    %v2982 = vunpack.c.l.b16 %v671
    %v2983 = vunpack.c.l.b16 %v672
    %v2984 = vunpack.c.l.b16 %v673
    %v2985 = vunpack.c.l.b16 %v674
    %v2986 = vunpack.c.l.b16 %v675
    %v2987 = vunpack.c.l.b16 %v676
    %v2988 = vunpack.c.l.b16 %v677
    %v2989 = vunpack.c.l.b16 %v678
    %v2990 = vunpack.c.l.b16 %v679
    %v2991 = vunpack.c.l.b16 %v680
    %v2992 = vunpack.c.l.b16 %v681
    %v2993 = vunpack.c.l.b16 %v682
    %v2994 = vunpack.c.l.b16 %v683
    %v2995 = vunpack.c.l.b16 %v684
    %v2996 = vunpack.c.l.b16 %v685
    %v2997 = vunpack.c.l.b16 %v686
    %v2998 = vunpack.c.l.b16 %v687
    %v2999 = vunpack.c.l.b16 %v688
    %v3000 = vunpack.c.l.b16 %v689
    %v3001 = vunpack.c.l.b16 %v690
    %v3002 = vunpack.c.l.b16 %v691
    %v3003 = vunpack.c.l.b16 %v692
    %v3004 = vunpack.c.l.b16 %v693
    %v3005 = vunpack.c.l.b16 %v694
    %v3006 = vunpack.c.l.b16 %v695
    %v3007 = vunpack.c.l.b16 %v696
    %v3008 = vunpack.c.l.b16 %v697
    %v3009 = vunpack.c.l.b16 %v698
    %v3010 = vunpack.c.l.b16 %v699
    %v3011 = vunpack.c.l.b16 %v700
    %v3012 = vunpack.c.l.b16 %v701
    %v3013 = vunpack.c.l.b16 %v702
    %v3014 = vunpack.c.l.b16 %v703
    %v3015 = vunpack.c.l.b16 %v704
    %v3016 = vunpack.c.l.b16 %v705
    %v3017 = vunpack.c.l.b16 %v706
    %v3018 = vunpack.c.l.b16 %v707
    %v3019 = vunpack.c.l.b16 %v708
    %v3020 = vunpack.c.l.b16 %v709
    %v3021 = vunpack.c.l.b16 %v710
    %v3022 = vunpack.c.l.b16 %v711
    %v3023 = vunpack.c.l.b16 %v712
    %v3024 = vunpack.c.l.b16 %v713
    %v3025 = vunpack.c.l.b16 %v714
    %v3026 = vunpack.c.l.b16 %v715
    %v3027 = vunpack.c.l.b16 %v716
    %v3028 = vunpack.c.l.b16 %v717
    %v3029 = vunpack.c.l.b16 %v718
    %v3030 = vunpack.c.l.b16 %v719
    %v3031 = vunpack.c.l.b16 %v720
    %v3032 = vunpack.c.l.b16 %v721
    %v3033 = vunpack.c.l.b16 %v722
    %v3034 = vunpack.c.l.b16 %v723
    %v3035 = vunpack.c.l.b16 %v724
    %v3036 = vunpack.c.l.b16 %v725
    %v3037 = vunpack.c.l.b16 %v726
    %v3038 = vunpack.c.l.b16 %v727
    %v3039 = vunpack.c.l.b16 %v728
    %v3040 = vunpack.c.l.b16 %v729
    %v3041 = vunpack.c.l.b16 %v730
    %v3042 = vunpack.c.l.b16 %v731
    %v3043 = vunpack.c.l.b16 %v732
    %v3044 = vunpack.c.l.b16 %v733
    %v3045 = vunpack.c.l.b16 %v734
    %v3046 = vunpack.c.l.b16 %v735
    %v3047 = vunpack.c.l.b16 %v736
    %v3048 = vunpack.c.l.b16 %v737
    %v3049 = vunpack.c.l.b16 %v738
    %v3050 = vunpack.c.l.b16 %v739
    %v3051 = vunpack.c.l.b16 %v740
    %v3052 = vunpack.c.l.b16 %v741
    %v3053 = vunpack.c.l.b16 %v742
    %v3054 = vunpack.c.l.b16 %v743
    %v3055 = vunpack.c.l.b16 %v744
    %v3056 = vunpack.c.l.b16 %v745
    %v3057 = vunpack.c.l.b16 %v746
    %v3058 = vunpack.c.l.b16 %v747
    %v3059 = vunpack.c.l.b16 %v748
    %v3060 = vunpack.c.l.b16 %v749
    %v3061 = vunpack.c.l.b16 %v750
    %v3062 = vunpack.c.l.b16 %v751
    %v3063 = vunpack.c.l.b16 %v752
    %v3064 = vunpack.c.l.b16 %v753
    %v3065 = vunpack.c.l.b16 %v754
    %v3066 = vunpack.c.l.b16 %v755
    %v3067 = vunpack.c.l.b16 %v756
    %v3068 = vunpack.c.l.b16 %v757
    %v3069 = vunpack.c.l.b16 %v758
    %v3070 = vunpack.c.l.b16 %v759
    %v3071 = vunpack.c.l.b16 %v760
    %v3072 = vunpack.c.l.b16 %v761
    %v3073 = vunpack.c.l.b16 %v762
    %v3074 = vunpack.c.l.b16 %v763
    %v3075 = vunpack.c.l.b16 %v764
    %v3076 = vunpack.c.l.b16 %v765
    %v3077 = vunpack.c.l.b16 %v766
    %v3078 = vunpack.c.l.b16 %v767
    %v3079 = vunpack.c.l.b16 %v768
    %v3080 = vunpack.c.l.b16 %v769
    %v3081 = vunpack.c.l.b16 %v770
    %v3082 = vunpack.c.l.b16 %v771
    %v3083 = vunpack.c.l.b16 %v772
    %v3084 = vunpack.c.l.b16 %v773
    %v3085 = vunpack.c.l.b16 %v774
    %v3086 = vunpack.c.l.b16 %v775
    %v3087 = vunpack.c.l.b16 %v776
    %v3088 = vunpack.c.l.b16 %v777
    %v3089 = vunpack.c.l.b16 %v778
    %v3090 = vunpack.c.l.b16 %v779
    %v3091 = vunpack.c.l.b16 %v780
    %v3092 = vunpack.c.l.b16 %v781
    %v3093 = vunpack.c.l.b16 %v782
    %v3094 = vunpack.c.l.b16 %v783
    %v3095 = vunpack.c.l.b16 %v784
    %v3096 = vunpack.c.l.b16 %v785
    %v3097 = vunpack.c.l.b16 %v786
    %v3098 = vunpack.c.l.b16 %v787
    %v3099 = vunpack.c.l.b16 %v788
    %v3100 = vunpack.c.l.b16 %v789
    %v3101 = vunpack.c.l.b16 %v790
    %v3102 = vunpack.c.l.b16 %v791
    %v3103 = vunpack.c.l.b16 %v792
    %v3104 = vunpack.c.l.b16 %v793
    %v3105 = vunpack.c.l.b16 %v794
    %v3106 = vunpack.c.l.b16 %v795
    %v3107 = vunpack.c.l.b16 %v796
    %v3108 = vunpack.c.l.b16 %v797
    %v3109 = vunpack.c.l.b16 %v798
    %v3110 = vunpack.c.l.b16 %v799
    %v3111 = vunpack.c.l.b16 %v800
    %v3112 = vunpack.c.l.b16 %v801
    %v3113 = vunpack.c.l.b16 %v802
    %v3114 = vunpack.c.l.b16 %v803
    %v3115 = vunpack.c.l.b16 %v804
    %v3116 = vunpack.c.l.b16 %v805
    %v3117 = vunpack.c.l.b16 %v806
    %v3118 = vunpack.c.l.b16 %v807
    %v3119 = vunpack.c.l.b16 %v808
    %v3120 = vunpack.c.l.b16 %v809
    %v3121 = vunpack.c.l.b16 %v810
    %v3122 = vunpack.c.l.b16 %v811
    %v3123 = vunpack.c.l.b16 %v812
    %v3124 = vunpack.c.l.b16 %v813
    %v3125 = vunpack.c.l.b16 %v814
    %v3126 = vunpack.c.l.b16 %v815
    %v3127 = vunpack.c.l.b16 %v816
    %v3128 = vunpack.c.l.b16 %v817
    %v3129 = vunpack.c.l.b16 %v818
    %v3130 = vunpack.c.l.b16 %v819
    %v3131 = vunpack.c.l.b16 %v820
    %v3132 = vunpack.c.l.b16 %v821
    %v3133 = vunpack.c.l.b16 %v822
    %v3134 = vunpack.c.l.b16 %v823
    %v3135 = vunpack.c.l.b16 %v824
    %v3136 = vunpack.c.l.b16 %v825
    %v3137 = vunpack.c.l.b16 %v826
    %v3138 = vunpack.c.l.b16 %v827
    %v3139 = vunpack.c.l.b16 %v828
    %v3140 = vunpack.c.l.b16 %v829
    %v3141 = vunpack.c.l.b16 %v830
    %v3142 = vunpack.c.l.b16 %v831
    %v3143 = vunpack.c.l.b16 %v832
    %v3144 = vunpack.c.l.b16 %v833
    %v3145 = vunpack.c.l.b16 %v834
    %v3146 = vunpack.c.l.b16 %v835
    %v3147 = vunpack.c.l.b16 %v836
    %v3148 = vunpack.c.l.b16 %v837
    %v3149 = vunpack.c.l.b16 %v838
    %v3150 = vunpack.c.l.b16 %v839
    %v3151 = vunpack.c.l.b16 %v840
    %v3152 = vunpack.c.l.b16 %v841
    %v3153 = vunpack.c.l.b16 %v842
    %v3154 = vunpack.c.l.b16 %v843
    %v3155 = vunpack.c.l.b16 %v844
    %v3156 = vunpack.c.l.b16 %v845
    %v3157 = vunpack.c.l.b16 %v846
    %v3158 = vunpack.c.l.b16 %v847
    %v3159 = vunpack.c.l.b16 %v848
    %v3160 = vunpack.c.l.b16 %v849
    %v3161 = vunpack.c.l.b16 %v850
    %v3162 = vunpack.c.l.b16 %v851
    %v3163 = vunpack.c.l.b16 %v852
    %v3164 = vunpack.c.l.b16 %v853
    %v3165 = vunpack.c.l.b16 %v854
    %v3166 = vunpack.c.l.b16 %v855
    %v3167 = vunpack.c.l.b16 %v856
    %v3168 = vunpack.c.l.b16 %v857
    %v3169 = vunpack.c.l.b16 %v858
    %v3170 = vunpack.c.l.b16 %v859
    %v3171 = vunpack.c.l.b16 %v860
    %v3172 = vunpack.c.l.b16 %v861
    %v3173 = vunpack.c.l.b16 %v862
    %v3174 = vunpack.c.l.b16 %v863
    %v3175 = vunpack.c.l.b16 %v864
    %v3176 = vunpack.c.l.b16 %v865
    %v3177 = vunpack.c.l.b16 %v866
    %v3178 = vunpack.c.l.b16 %v867
    %v3179 = vunpack.c.l.b16 %v868
    %v3180 = vunpack.c.l.b16 %v869
    %v3181 = vunpack.c.l.b16 %v870
    %v3182 = vunpack.c.l.b16 %v871
    %v3183 = vunpack.c.l.b16 %v872
    %v3184 = vunpack.c.l.b16 %v873
    %v3185 = vunpack.c.l.b16 %v874
    %v3186 = vunpack.c.l.b16 %v875
    %v3187 = vunpack.c.l.b16 %v876
    %v3188 = vunpack.c.l.b16 %v877
    %v3189 = vunpack.c.l.b16 %v878
    %v3190 = vunpack.c.l.b16 %v879
    %v3191 = vunpack.c.l.b16 %v880
    %v3192 = vunpack.c.l.b16 %v881
    %v3193 = vunpack.c.l.b16 %v882
    %v3194 = vunpack.c.l.b16 %v883
    %v3195 = vunpack.c.l.b16 %v884
    %v3196 = vunpack.c.l.b16 %v885
    %v3197 = vunpack.c.l.b16 %v886
    %v3198 = vunpack.c.l.b16 %v887
    %v3199 = vunpack.c.l.b16 %v888
    %v3200 = vunpack.c.l.b16 %v889
    %v3201 = vunpack.c.l.b16 %v890
    %v3202 = vunpack.c.l.b16 %v891
    %v3203 = vunpack.c.l.b16 %v892
    %v3204 = vunpack.c.l.b16 %v893
    %v3205 = vunpack.c.l.b16 %v894
    %v3206 = vunpack.c.l.b16 %v895
    %v3207 = vunpack.c.l.b16 %v896
    %v3208 = vunpack.c.l.b16 %v897
    %v3209 = vunpack.c.l.b16 %v898
    %v3210 = vunpack.c.l.b16 %v899
    %v3211 = vunpack.c.l.b16 %v900
    %v3212 = vunpack.c.l.b16 %v901
    %v3213 = vunpack.c.l.b16 %v902
    %v3214 = vunpack.c.l.b16 %v903
    %v3215 = vunpack.c.l.b16 %v904
    %v3216 = vunpack.c.l.b16 %v905
    %v3217 = vunpack.c.l.b16 %v906
    %v3218 = vunpack.c.l.b16 %v907
    %v3219 = vunpack.c.l.b16 %v908
    %v3220 = vunpack.c.l.b16 %v909
    %v3221 = vunpack.c.l.b16 %v910
    %v3222 = vunpack.c.l.b16 %v911
    %v3223 = vunpack.c.l.b16 %v912
    %v3224 = vunpack.c.l.b16 %v913
    %v3225 = vunpack.c.l.b16 %v914
    %v3226 = vunpack.c.l.b16 %v915
    %v3227 = vunpack.c.l.b16 %v916
    %v3228 = vunpack.c.l.b16 %v917
    %v3229 = vunpack.c.l.b16 %v918
    %v3230 = vunpack.c.l.b16 %v919
    %v3231 = vunpack.c.l.b16 %v920
    %v3232 = vunpack.c.l.b16 %v921
    %v3233 = vunpack.c.l.b16 %v922
    %v3234 = vunpack.c.l.b16 %v923
    %v3235 = vunpack.c.l.b16 %v924
    %v3236 = vunpack.c.l.b16 %v925
    %v3237 = vunpack.c.l.b16 %v926
    %v3238 = vunpack.c.l.b16 %v927
    %v3239 = vunpack.c.l.b16 %v928
    %v3240 = vunpack.c.l.b16 %v929
    %v3241 = vunpack.c.l.b16 %v930
    %v3242 = vunpack.c.l.b16 %v931
    %v3243 = vunpack.c.l.b16 %v932
    %v3244 = vunpack.c.l.b16 %v933
    %v3245 = vunpack.c.l.b16 %v934
    %v3246 = vunpack.c.l.b16 %v935
    %v3247 = vunpack.c.l.b16 %v936
    %v3248 = vunpack.c.l.b16 %v937
    %v3249 = vunpack.c.l.b16 %v938
    %v3250 = vunpack.c.l.b16 %v939
    %v3251 = vunpack.c.l.b16 %v940
    %v3252 = vunpack.c.l.b16 %v941
    %v3253 = vunpack.c.l.b16 %v942
    %v3254 = vunpack.c.l.b16 %v943
    %v3255 = vunpack.c.l.b16 %v944
    %v3256 = vunpack.c.l.b16 %v945
    %v3257 = vunpack.c.l.b16 %v946
    %v3258 = vunpack.c.l.b16 %v947
    %v3259 = vunpack.c.l.b16 %v948
    %v3260 = vunpack.c.l.b16 %v949
    %v3261 = vunpack.c.l.b16 %v950
    %v3262 = vunpack.c.l.b16 %v951
    %v3263 = vunpack.c.l.b16 %v952
    %v3264 = vunpack.c.l.b16 %v953
    %v3265 = vunpack.c.l.b16 %v954
    %v3266 = vunpack.c.l.b16 %v955
    %v3267 = vunpack.c.l.b16 %v956
    %v3268 = vunpack.c.l.b16 %v957
    %v3269 = vunpack.c.l.b16 %v958
    %v3270 = vunpack.c.l.b16 %v959
    %v3271 = vunpack.c.l.b16 %v960
    %v3272 = vunpack.c.l.b16 %v961
    %v3273 = vunpack.c.l.b16 %v962
    %v3274 = vunpack.c.l.b16 %v963
    %v3275 = vunpack.c.l.b16 %v964
    %v3276 = vunpack.c.l.b16 %v965
    %v3277 = vunpack.c.l.b16 %v966
    %v3278 = vunpack.c.l.b16 %v967
    %v3279 = vunpack.c.l.b16 %v968
    %v3280 = vunpack.c.l.b16 %v969
    %v3281 = vunpack.c.l.b16 %v970
    %v3282 = vunpack.c.l.b16 %v971
    %v3283 = vunpack.c.l.b16 %v972
    %v3284 = vunpack.c.l.b16 %v973
    %v3285 = vunpack.c.l.b16 %v974
    %v3286 = vunpack.c.l.b16 %v975
    %v3287 = vunpack.c.l.b16 %v976
    %v3288 = vunpack.c.l.b16 %v977
    %v3289 = vunpack.c.l.b16 %v978
    %v3290 = vunpack.c.l.b16 %v979
    %v3291 = vunpack.c.l.b16 %v980
    %v3292 = vunpack.c.l.b16 %v981
    %v3293 = vunpack.c.l.b16 %v982
    %v3294 = vunpack.c.l.b16 %v983
    %v3295 = vunpack.c.l.b16 %v984
    %v3296 = vunpack.c.l.b16 %v985
    %v3297 = vunpack.c.l.b16 %v986
    %v3298 = vunpack.c.l.b16 %v987
    %v3299 = vunpack.c.l.b16 %v988
    %v3300 = vunpack.c.l.b16 %v989
    %v3301 = vunpack.c.l.b16 %v990
    %v3302 = vunpack.c.l.b16 %v991
    %v3303 = vunpack.c.l.b16 %v992
    %v3304 = vunpack.c.l.b16 %v993
    %v3305 = vunpack.c.l.b16 %v994
    %v3306 = vunpack.c.l.b16 %v995
    %v3307 = vunpack.c.l.b16 %v996
    %v3308 = vunpack.c.l.b16 %v997
    %v3309 = vunpack.c.l.b16 %v998
    %v3310 = vunpack.c.l.b16 %v999
    %v3311 = vunpack.c.l.b16 %v1000
    %v3312 = vunpack.c.l.b16 %v1001
    %v3313 = vunpack.c.l.b16 %v1002
    %v3314 = vunpack.c.l.b16 %v1003
    %v3315 = vunpack.c.l.b16 %v1004
    %v3316 = vunpack.c.l.b16 %v1005
    %v3317 = vunpack.c.l.b16 %v1006
    %v3318 = vunpack.c.l.b16 %v1007
    %v3319 = vunpack.c.l.b16 %v1008
    %v3320 = vunpack.c.l.b16 %v1009
    %v3321 = vunpack.c.l.b16 %v1010
    %v3322 = vunpack.c.l.b16 %v1011
    %v3323 = vunpack.c.l.b16 %v1012
    %v3324 = vunpack.c.l.b16 %v1013
    %v3325 = vunpack.c.l.b16 %v1014
    %v3326 = vunpack.c.l.b16 %v1015
    %v3327 = vunpack.c.l.b16 %v1016
    %v3328 = vunpack.c.l.b16 %v1017
    %v3329 = vunpack.c.l.b16 %v1018
    %v3330 = vunpack.c.l.b16 %v1019
    %v3331 = vunpack.c.l.b16 %v1020
    %v3332 = vunpack.c.l.b16 %v1021
    %v3333 = vunpack.c.l.b16 %v1022
    %v3334 = vunpack.c.l.b16 %v1023
    %v3335 = vunpack.c.l.b16 %v1024
    %v3336 = vunpack.c.l.b16 %v1025
    %v3337 = vunpack.c.l.b16 %v1026
    %v3338 = vunpack.c.l.b16 %v1027
    %v3339 = vunpack.c.l.b16 %v1028
    %v3340 = vunpack.c.l.b16 %v1029
    %v3341 = vunpack.c.l.b16 %v1030
    %v3342 = vunpack.c.l.b16 %v1031
    %v3343 = vunpack.c.l.b16 %v1032
    %v3344 = vunpack.c.l.b16 %v1033
    %v3345 = vunpack.c.l.b16 %v1034
    %v3346 = vunpack.c.l.b16 %v1035
    %v3347 = vunpack.c.l.b16 %v1036
    %v3348 = vunpack.c.l.b16 %v1037
    %v3349 = vunpack.c.l.b16 %v1038
    %v3350 = vunpack.c.l.b16 %v1039
    %v3351 = vunpack.c.l.b16 %v1040
    %v3352 = vunpack.c.l.b16 %v1041
    %v3353 = vunpack.c.l.b16 %v1042
    %v3354 = vunpack.c.l.b16 %v1043
    %v3355 = vunpack.c.l.b16 %v1044
    %v3356 = vunpack.c.l.b16 %v1045
    %v3357 = vunpack.c.l.b16 %v1046
    %v3358 = vunpack.c.l.b16 %v1047
    %v3359 = vunpack.c.l.b16 %v1048
    %v3360 = vunpack.c.l.b16 %v1049
    %v3361 = vunpack.c.l.b16 %v1050
    %v3362 = vunpack.c.l.b16 %v1051
    %v3363 = vunpack.c.l.b16 %v1052
    %v3364 = vunpack.c.l.b16 %v1053
    %v3365 = vunpack.c.l.b16 %v1054
    %v3366 = vunpack.c.l.b16 %v1055
    %v3367 = vunpack.c.l.b16 %v1056
    %v3368 = vunpack.c.l.b16 %v1057
    %v3369 = vunpack.c.l.b16 %v1058
    %v3370 = vunpack.c.l.b16 %v1059
    %v3371 = vunpack.c.l.b16 %v1060
    %v3372 = vunpack.c.l.b16 %v1061
    %v3373 = vunpack.c.l.b16 %v1062
    %v3374 = vunpack.c.l.b16 %v1063
    %v3375 = vunpack.c.l.b16 %v1064
    %v3376 = vunpack.c.l.b16 %v1065
    %v3377 = vunpack.c.l.b16 %v1066
    %v3378 = vunpack.c.l.b16 %v1067
    %v3379 = vunpack.c.l.b16 %v1068
    %v3380 = vunpack.c.l.b16 %v1069
    %v3381 = vunpack.c.l.b16 %v1070
    %v3382 = vunpack.c.l.b16 %v1071
    %v3383 = vunpack.c.l.b16 %v1072
    %v3384 = vunpack.c.l.b16 %v1073
    %v3385 = vunpack.c.l.b16 %v1074
    %v3386 = vunpack.c.l.b16 %v1075
    %v3387 = vunpack.c.l.b16 %v1076
    %v3388 = vunpack.c.l.b16 %v1077
    %v3389 = vunpack.c.l.b16 %v1078
    %v3390 = vunpack.c.l.b16 %v1079
    %v3391 = vunpack.c.l.b16 %v1080
    %v3392 = vunpack.c.l.b16 %v1081
    %v3393 = vunpack.c.l.b16 %v1082
    %v3394 = vunpack.c.l.b16 %v1083
    %v3395 = vunpack.c.l.b16 %v1084
    %v3396 = vunpack.c.l.b16 %v1085
    %v3397 = vunpack.c.l.b16 %v1086
    %v3398 = vunpack.c.l.b16 %v1087
    %v3399 = vunpack.c.l.b16 %v1088
    %v3400 = vunpack.c.l.b16 %v1089
    %v3401 = vunpack.c.l.b16 %v1090
    %v3402 = vunpack.c.l.b16 %v1091
    %v3403 = vunpack.c.l.b16 %v1092
    %v3404 = vunpack.c.l.b16 %v1093
    %v3405 = vunpack.c.l.b16 %v1094
    %v3406 = vunpack.c.l.b16 %v1095
    %v3407 = vunpack.c.l.b16 %v1096
    %v3408 = vunpack.c.l.b16 %v1097
    %v3409 = vunpack.c.l.b16 %v1098
    %v3410 = vunpack.c.l.b16 %v1099
    %v3411 = vunpack.c.l.b16 %v1100
    %v3412 = vunpack.c.l.b16 %v1101
    %v3413 = vunpack.c.l.b16 %v1102
    %v3414 = vunpack.c.l.b16 %v1103
    %v3415 = vunpack.c.l.b16 %v1104
    %v3416 = vunpack.c.l.b16 %v1105
    %v3417 = vunpack.c.l.b16 %v1106
    %v3418 = vunpack.c.l.b16 %v1107
    %v3419 = vunpack.c.l.b16 %v1108
    %v3420 = vunpack.c.l.b16 %v1109
    %v3421 = vunpack.c.l.b16 %v1110
    %v3422 = vunpack.c.l.b16 %v1111
    %v3423 = vunpack.c.l.b16 %v1112
    %v3424 = vunpack.c.l.b16 %v1113
    %v3425 = vunpack.c.l.b16 %v1114
    %v3426 = vunpack.c.l.b16 %v1115
    %v3427 = vunpack.c.l.b16 %v1116
    %v3428 = vunpack.c.l.b16 %v1117
    %v3429 = vunpack.c.l.b16 %v1118
    %v3430 = vunpack.c.l.b16 %v1119
    %v3431 = vunpack.c.l.b16 %v1120
    %v3432 = vunpack.c.l.b16 %v1121
    %v3433 = vunpack.c.l.b16 %v1122
    %v3434 = vunpack.c.l.b16 %v1123
    %v3435 = vunpack.c.l.b16 %v1124
    %v3436 = vunpack.c.l.b16 %v1125
    %v3437 = vunpack.c.l.b16 %v1126
    %v3438 = vunpack.c.l.b16 %v1127
    %v3439 = vunpack.c.l.b16 %v1128
    %v3440 = vunpack.c.l.b16 %v1129
    %v3441 = vunpack.c.l.b16 %v1130
    %v3442 = vunpack.c.l.b16 %v1131
    %v3443 = vunpack.c.l.b16 %v1132
    %v3444 = vunpack.c.l.b16 %v1133
    %v3445 = vunpack.c.l.b16 %v1134
    %v3446 = vunpack.c.l.b16 %v1135
    %v3447 = vunpack.c.l.b16 %v1136
    %v3448 = vunpack.c.l.b16 %v1137
    %v3449 = vunpack.c.l.b16 %v1138
    %v3450 = vunpack.c.l.b16 %v1139
    %v3451 = vunpack.c.l.b16 %v1140
    %v3452 = vunpack.c.l.b16 %v1141
    %v3453 = vunpack.c.l.b16 %v1142
    %v3454 = vunpack.c.l.b16 %v1143
    %v3455 = vunpack.c.l.b16 %v1144
    %v3456 = vunpack.c.l.b16 %v1145
    %v3457 = vunpack.c.l.b16 %v1146
    %v3458 = vunpack.c.l.b16 %v1147
    %v3459 = vunpack.c.l.b16 %v1148
    %v3460 = vunpack.c.l.b16 %v1149
    %v3461 = vunpack.c.l.b16 %v1150
    %v3462 = vunpack.c.l.b16 %v1151
    %v3463 = vunpack.c.l.b16 %v1152
    %v3464 = vunpack.c.l.b16 %v1153
    %v3465 = vunpack.c.l.b16 %v1154
    %v3466 = vunpack.c.l.b16 %v1155
    %v3467 = vunpack.c.l.b16 %v1156
    %v3468 = vunpack.c.l.b16 %v1157
    %v3469 = vunpack.c.l.b16 %v1158
    %v3470 = vunpack.c.l.b16 %v1159
    %v3471 = vunpack.c.l.b16 %v1160
    %v3472 = vunpack.c.l.b16 %v1161
    %v3473 = vunpack.c.l.b16 %v1162
    %v3474 = vunpack.c.l.b16 %v1163
    %v3475 = vunpack.c.l.b16 %v1164
    %v3476 = vunpack.c.l.b16 %v1165
    %v3477 = vunpack.c.l.b16 %v1166
    %v3478 = vunpack.c.l.b16 %v1167
    %v3479 = vunpack.c.l.b16 %v1168
    %v3480 = vunpack.c.l.b16 %v1169
    %v3481 = vunpack.c.l.b16 %v1170
    %v3482 = vunpack.c.l.b16 %v1171
    %v3483 = vunpack.c.l.b16 %v1172
    %v3484 = vunpack.c.l.b16 %v1173
    %v3485 = vunpack.c.l.b16 %v1174
    %v3486 = vunpack.c.l.b16 %v1175
    %v3487 = vunpack.c.l.b16 %v1176
    %v3488 = vunpack.c.l.b16 %v1177
    %v3489 = vunpack.c.l.b16 %v1178
    %v3490 = vunpack.c.l.b16 %v1179
    %v3491 = vunpack.c.l.b16 %v1180
    %v3492 = vunpack.c.l.b16 %v1181
    %v3493 = vunpack.c.l.b16 %v1182
    %v3494 = vunpack.c.l.b16 %v1183
    %v3495 = vunpack.c.l.b16 %v1184
    %v3496 = vunpack.c.l.b16 %v1185
    %v3497 = vunpack.c.l.b16 %v1186
    %v3498 = vunpack.c.l.b16 %v1187
    %v3499 = vunpack.c.l.b16 %v1188
    %v3500 = vunpack.c.l.b16 %v1189
    %v3501 = vunpack.c.l.b16 %v1190
    %v3502 = vunpack.c.l.b16 %v1191
    %v3503 = vunpack.c.l.b16 %v1192
    %v3504 = vunpack.c.l.b16 %v1193
    %v3505 = vunpack.c.l.b16 %v1194
    %v3506 = vunpack.c.l.b16 %v1195
    %v3507 = vunpack.c.l.b16 %v1196
    %v3508 = vunpack.c.l.b16 %v1197
    %v3509 = vunpack.c.l.b16 %v1198
    %v3510 = vunpack.c.l.b16 %v1199
    %v3511 = vunpack.c.l.b16 %v1200
    %v3512 = vunpack.c.l.b16 %v1201
    %v3513 = vunpack.c.l.b16 %v1202
    %v3514 = vunpack.c.l.b16 %v1203
    %v3515 = vunpack.c.l.b16 %v1204
    %v3516 = vunpack.c.l.b16 %v1205
    %v3517 = vunpack.c.l.b16 %v1206
    %v3518 = vunpack.c.l.b16 %v1207
    %v3519 = vunpack.c.l.b16 %v1208
    %v3520 = vunpack.c.l.b16 %v1209
    %v3521 = vunpack.c.l.b16 %v1210
    %v3522 = vunpack.c.l.b16 %v1211
    %v3523 = vunpack.c.l.b16 %v1212
    %v3524 = vunpack.c.l.b16 %v1213
    %v3525 = vunpack.c.l.b16 %v1214
    %v3526 = vunpack.c.l.b16 %v1215
    %v3527 = vunpack.c.l.b16 %v1216
    %v3528 = vunpack.c.l.b16 %v1217
    %v3529 = vunpack.c.l.b16 %v1218
    %v3530 = vunpack.c.l.b16 %v1219
    %v3531 = vunpack.c.l.b16 %v1220
    %v3532 = vunpack.c.l.b16 %v1221
    %v3533 = vunpack.c.l.b16 %v1222
    %v3534 = vunpack.c.l.b16 %v1223
    %v3535 = vunpack.c.l.b16 %v1224
    %v3536 = vunpack.c.l.b16 %v1225
    %v3537 = vunpack.c.l.b16 %v1226
    %v3538 = vunpack.c.l.b16 %v1227
    %v3539 = vunpack.c.l.b16 %v1228
    %v3540 = vunpack.c.l.b16 %v1229
    %v3541 = vunpack.c.l.b16 %v1230
    %v3542 = vunpack.c.l.b16 %v1231
    %v3543 = vunpack.c.l.b16 %v1232
    %v3544 = vunpack.c.l.b16 %v1233
    %v3545 = vunpack.c.l.b16 %v1234
    %v3546 = vunpack.c.l.b16 %v1235
    %v3547 = vunpack.c.l.b16 %v1236
    %v3548 = vunpack.c.l.b16 %v1237
    %v3549 = vunpack.c.l.b16 %v1238
    %v3550 = vunpack.c.l.b16 %v1239
    %v3551 = vunpack.c.l.b16 %v1240
    %v3552 = vunpack.c.l.b16 %v1241
    %v3553 = vunpack.c.l.b16 %v1242
    %v3554 = vunpack.c.l.b16 %v1243
    %v3555 = vunpack.c.l.b16 %v1244
    %v3556 = vunpack.c.l.b16 %v1245
    %v3557 = vunpack.c.l.b16 %v1246
    %v3558 = vunpack.c.l.b16 %v1247
    %v3559 = vunpack.c.l.b16 %v1248
    %v3560 = vunpack.c.l.b16 %v1249
    %v3561 = vunpack.c.l.b16 %v1250
    %v3562 = vunpack.c.l.b16 %v1251
    %v3563 = vunpack.c.l.b16 %v1252
    %v3564 = vunpack.c.l.b16 %v1253
    %v3565 = vunpack.c.l.b16 %v1254
    %v3566 = vunpack.c.l.b16 %v1255
    %v3567 = vunpack.c.l.b16 %v1256
    %v3568 = vunpack.c.l.b16 %v1257
    %v3569 = vunpack.c.l.b16 %v1258
    %v3570 = vunpack.c.l.b16 %v1259
    %v3571 = vunpack.c.l.b16 %v1260
    %v3572 = vunpack.c.l.b16 %v1261
    %v3573 = vunpack.c.l.b16 %v1262
    %v3574 = vunpack.c.l.b16 %v1263
    %v3575 = vunpack.c.l.b16 %v1264
    %v3576 = vunpack.c.l.b16 %v1265
    %v3577 = vunpack.c.l.b16 %v1266
    %v3578 = vunpack.c.l.b16 %v1267
    %v3579 = vunpack.c.l.b16 %v1268
    %v3580 = vunpack.c.l.b16 %v1269
    %v3581 = vunpack.c.l.b16 %v1270
    %v3582 = vunpack.c.l.b16 %v1271
    %v3583 = vunpack.c.l.b16 %v1272
    %v3584 = vunpack.c.l.b16 %v1273
    %v3585 = vunpack.c.l.b16 %v1274
    %v3586 = vunpack.c.l.b16 %v1275
    %v3587 = vunpack.c.l.b16 %v1276
    %v3588 = vunpack.c.l.b16 %v1277
    %v3589 = vunpack.c.l.b16 %v1278
    %v3590 = vunpack.c.l.b16 %v1279
    %v3591 = vunpack.c.l.b16 %v1280
    %v3592 = vunpack.c.l.b16 %v1281
    %v3593 = vunpack.c.l.b16 %v1282
    %v3594 = vunpack.c.l.b16 %v1283
    %v3595 = vunpack.c.l.b16 %v1284
    %v3596 = vunpack.c.l.b16 %v1285
    %v3597 = vunpack.c.l.b16 %v1286
    %v3598 = vunpack.c.l.b16 %v1287
    %v3599 = vunpack.c.l.b16 %v1288
    %v3600 = vunpack.c.l.b16 %v1289
    %v3601 = vunpack.c.l.b16 %v1290
    %v3602 = vunpack.c.l.b16 %v1291
    %v3603 = vunpack.c.l.b16 %v1292
    %v3604 = vunpack.c.l.b16 %v1293
    %v3605 = vunpack.c.l.b16 %v1294
    %v3606 = vunpack.c.l.b16 %v1295
    %v3607 = vunpack.c.l.b16 %v1296
    %v3608 = vunpack.c.l.b16 %v1297
    %v3609 = vunpack.c.l.b16 %v1298
    %v3610 = vunpack.c.l.b16 %v1299
    %v3611 = vunpack.c.l.b16 %v1300
    %v3612 = vunpack.c.l.b16 %v1301
    %v3613 = vunpack.c.l.b16 %v1302
    %v3614 = vunpack.c.l.b16 %v1303
    %v3615 = vunpack.c.l.b16 %v1304
    %v3616 = vunpack.c.l.b16 %v1305
    %v3617 = vunpack.c.l.b16 %v1306
    %v3618 = vunpack.c.l.b16 %v1307
    %v3619 = vunpack.c.l.b16 %v1308
    %v3620 = vunpack.c.l.b16 %v1309
    %v3621 = vunpack.c.l.b16 %v1310
    %v3622 = vunpack.c.l.b16 %v1311
    %v3623 = vunpack.c.l.b16 %v1312
    %v3624 = vunpack.c.l.b16 %v1313
    %v3625 = vunpack.c.l.b16 %v1314
    %v3626 = vunpack.c.l.b16 %v1315
    %v3627 = vunpack.c.l.b16 %v1316
    %v3628 = vunpack.c.l.b16 %v1317
    %v3629 = vunpack.c.l.b16 %v1318
    %v3630 = vunpack.c.l.b16 %v1319
    %v3631 = vunpack.c.l.b16 %v1320
    %v3632 = vunpack.c.l.b16 %v1321
    %v3633 = vunpack.c.l.b16 %v1322
    %v3634 = vunpack.c.l.b16 %v1323
    %v3635 = vunpack.c.l.b16 %v1324
    %v3636 = vunpack.c.l.b16 %v1325
    %v3637 = vunpack.c.l.b16 %v1326
    %v3638 = vunpack.c.l.b16 %v1327
    %v3639 = vunpack.c.l.b16 %v1328
    %v3640 = vunpack.c.l.b16 %v1329
    %v3641 = vunpack.c.l.b16 %v1330
    %v3642 = vunpack.c.l.b16 %v1331
    %v3643 = vunpack.c.l.b16 %v1332
    %v3644 = vunpack.c.l.b16 %v1333
    %v3645 = vunpack.c.l.b16 %v1334
    %v3646 = vunpack.c.l.b16 %v1335
    %v3647 = vunpack.c.l.b16 %v1336
    %v3648 = vunpack.c.l.b16 %v1337
    %v3649 = vunpack.c.l.b16 %v1338
    %v3650 = vunpack.c.l.b16 %v1339
    %v3651 = vunpack.c.l.b16 %v1340
    %v3652 = vunpack.c.l.b16 %v1341
    %v3653 = vunpack.c.l.b16 %v1342
    %v3654 = vunpack.c.l.b16 %v1343
    %v3655 = vunpack.c.l.b16 %v1344
    %v3656 = vunpack.c.l.b16 %v1345
    %v3657 = vunpack.c.l.b16 %v1346
    %v3658 = vunpack.c.l.b16 %v1347
    %v3659 = vunpack.c.l.b16 %v1348
    %v3660 = vpack.c.b16 %v2509, %v2508
    %v3661 = vpack.c.b16 %v2511, %v2510
    %v3662 = vpack.c.b16 %v2513, %v2512
    %v3663 = vpack.c.b16 %v2515, %v2514
    %v3664 = vpack.c.b16 %v2517, %v2516
    %v3665 = vpack.c.b16 %v2519, %v2518
    %v3666 = vpack.c.b16 %v2521, %v2520
    %v3667 = vpack.c.b16 %v2523, %v2522
    %v3668 = vpack.c.b16 %v2525, %v2524
    %v3669 = vpack.c.b16 %v2527, %v2526
    %v3670 = vpack.c.b16 %v2529, %v2528
    %v3671 = vpack.c.b16 %v2531, %v2530
    %v3672 = vpack.c.b16 %v2533, %v2532
    %v3673 = vpack.c.b16 %v2535, %v2534
    %v3674 = vpack.c.b16 %v2537, %v2536
    %v3675 = vpack.c.b16 %v2539, %v2538
    %v3676 = vpack.c.b16 %v2541, %v2540
    %v3677 = vpack.c.b16 %v2543, %v2542
    %v3678 = vpack.c.b16 %v2545, %v2544
    %v3679 = vpack.c.b16 %v2547, %v2546
    %v3680 = vpack.c.b16 %v2549, %v2548
    %v3681 = vpack.c.b16 %v2551, %v2550
    %v3682 = vpack.c.b16 %v2553, %v2552
    %v3683 = vpack.c.b16 %v2555, %v2554
    %v3684 = vpack.c.b16 %v2557, %v2556
    %v3685 = vpack.c.b16 %v2559, %v2558
    %v3686 = vpack.c.b16 %v2561, %v2560
    %v3687 = vpack.c.b16 %v2563, %v2562
    %v3688 = vpack.c.b16 %v2565, %v2564
    %v3689 = vpack.c.b16 %v2567, %v2566
    %v3690 = vpack.c.b16 %v2569, %v2568
    %v3691 = vpack.c.b16 %v2571, %v2570
    %v3692 = vpack.c.b16 %v2573, %v2572
    %v3693 = vpack.c.b16 %v2575, %v2574
    %v3694 = vpack.c.b16 %v2577, %v2576
    %v3695 = vpack.c.b16 %v2579, %v2578
    %v3696 = vpack.c.b16 %v2581, %v2580
    %v3697 = vpack.c.b16 %v2583, %v2582
    %v3698 = vpack.c.b16 %v2585, %v2584
    %v3699 = vpack.c.b16 %v2587, %v2586
    %v3700 = vpack.c.b16 %v2589, %v2588
    %v3701 = vpack.c.b16 %v2591, %v2590
    %v3702 = vpack.c.b16 %v2593, %v2592
    %v3703 = vpack.c.b16 %v2595, %v2594
    %v3704 = vpack.c.b16 %v2597, %v2596
    %v3705 = vpack.c.b16 %v2599, %v2598
    %v3706 = vpack.c.b16 %v2601, %v2600
    %v3707 = vpack.c.b16 %v2603, %v2602
    %v3708 = vpack.c.b16 %v2605, %v2604
    %v3709 = vpack.c.b16 %v2607, %v2606
    %v3710 = vpack.c.b16 %v2609, %v2608
    %v3711 = vpack.c.b16 %v2611, %v2610
    %v3712 = vpack.c.b16 %v2613, %v2612
    %v3713 = vpack.c.b16 %v2615, %v2614
    %v3714 = vpack.c.b16 %v2617, %v2616
    %v3715 = vpack.c.b16 %v2619, %v2618
    %v3716 = vpack.c.b16 %v2621, %v2620
    %v3717 = vpack.c.b16 %v2623, %v2622
    %v3718 = vpack.c.b16 %v2625, %v2624
    %v3719 = vpack.c.b16 %v2627, %v2626
    %v3720 = vpack.c.b16 %v2629, %v2628
    %v3721 = vpack.c.b16 %v2631, %v2630
    %v3722 = vpack.c.b16 %v2633, %v2632
    %v3723 = vpack.c.b16 %v2635, %v2634
    %v3724 = vpack.c.b16 %v2637, %v2636
    %v3725 = vpack.c.b16 %v2639, %v2638
    %v3726 = vpack.c.b16 %v2641, %v2640
    %v3727 = vpack.c.b16 %v2643, %v2642
    %v3728 = vpack.c.b16 %v2645, %v2644
    %v3729 = vpack.c.b16 %v2647, %v2646
    %v3730 = vpack.c.b16 %v2649, %v2648
    %v3731 = vpack.c.b16 %v2651, %v2650
    %v3732 = vpack.c.b16 %v2653, %v2652
    %v3733 = vpack.c.b16 %v2655, %v2654
    %v3734 = vpack.c.b16 %v2657, %v2656
    %v3735 = vpack.c.b16 %v2659, %v2658
    %v3736 = vpack.c.b16 %v2661, %v2660
    %v3737 = vpack.c.b16 %v2663, %v2662
    %v3738 = vpack.c.b16 %v2665, %v2664
    %v3739 = vpack.c.b16 %v2667, %v2666
    %v3740 = vpack.c.b16 %v2669, %v2668
    %v3741 = vpack.c.b16 %v2671, %v2670
    %v3742 = vpack.c.b16 %v2673, %v2672
    %v3743 = vpack.c.b16 %v2675, %v2674
    %v3744 = vpack.c.b16 %v2677, %v2676
    %v3745 = vpack.c.b16 %v2679, %v2678
    %v3746 = vpack.c.b16 %v2681, %v2680
    %v3747 = vpack.c.b16 %v2683, %v2682
    %v3748 = vpack.c.b16 %v2685, %v2684
    %v3749 = vpack.c.b16 %v2687, %v2686
    %v3750 = vpack.c.b16 %v2689, %v2688
    %v3751 = vpack.c.b16 %v2691, %v2690
    %v3752 = vpack.c.b16 %v2693, %v2692
    %v3753 = vpack.c.b16 %v2695, %v2694
    %v3754 = vpack.c.b16 %v2697, %v2696
    %v3755 = vpack.c.b16 %v2699, %v2698
    %v3756 = vpack.c.b16 %v2701, %v2700
    %v3757 = vpack.c.b16 %v2703, %v2702
    %v3758 = vpack.c.b16 %v2705, %v2704
    %v3759 = vpack.c.b16 %v2707, %v2706
    %v3760 = vpack.c.b16 %v2709, %v2708
    %v3761 = vpack.c.b16 %v2711, %v2710
    %v3762 = vpack.c.b16 %v2713, %v2712
    %v3763 = vpack.c.b16 %v2715, %v2714
    %v3764 = vpack.c.b16 %v2717, %v2716
    %v3765 = vpack.c.b16 %v2719, %v2718
    %v3766 = vpack.c.b16 %v2721, %v2720
    %v3767 = vpack.c.b16 %v2723, %v2722
    %v3768 = vpack.c.b16 %v2725, %v2724
    %v3769 = vpack.c.b16 %v2727, %v2726
    %v3770 = vpack.c.b16 %v2729, %v2728
    %v3771 = vpack.c.b16 %v2731, %v2730
    %v3772 = vpack.c.b16 %v2733, %v2732
    %v3773 = vpack.c.b16 %v2735, %v2734
    %v3774 = vpack.c.b16 %v2737, %v2736
    %v3775 = vpack.c.b16 %v2739, %v2738
    %v3776 = vpack.c.b16 %v2741, %v2740
    %v3777 = vpack.c.b16 %v2743, %v2742
    %v3778 = vpack.c.b16 %v2745, %v2744
    %v3779 = vpack.c.b16 %v2747, %v2746
    %v3780 = vpack.c.b16 %v2749, %v2748
    %v3781 = vpack.c.b16 %v2751, %v2750
    %v3782 = vpack.c.b16 %v2753, %v2752
    %v3783 = vpack.c.b16 %v2755, %v2754
    %v3784 = vpack.c.b16 %v2757, %v2756
    %v3785 = vpack.c.b16 %v2759, %v2758
    %v3786 = vpack.c.b16 %v2761, %v2760
    %v3787 = vpack.c.b16 %v2763, %v2762
    %v3788 = vpack.c.b16 %v2765, %v2764
    %v3789 = vpack.c.b16 %v2767, %v2766
    %v3790 = vpack.c.b16 %v2769, %v2768
    %v3791 = vpack.c.b16 %v2771, %v2770
    %v3792 = vpack.c.b16 %v2773, %v2772
    %v3793 = vpack.c.b16 %v2775, %v2774
    %v3794 = vpack.c.b16 %v2777, %v2776
    %v3795 = vpack.c.b16 %v2779, %v2778
    %v3796 = vpack.c.b16 %v2781, %v2780
    %v3797 = vpack.c.b16 %v2783, %v2782
    %v3798 = vpack.c.b16 %v2785, %v2784
    %v3799 = vpack.c.b16 %v2787, %v2786
    %v3800 = vpack.c.b16 %v2789, %v2788
    %v3801 = vpack.c.b16 %v2791, %v2790
    %v3802 = vpack.c.b16 %v2793, %v2792
    %v3803 = vpack.c.b16 %v2795, %v2794
    %v3804 = vpack.c.b16 %v2797, %v2796
    %v3805 = vpack.c.b16 %v2799, %v2798
    %v3806 = vpack.c.b16 %v2801, %v2800
    %v3807 = vpack.c.b16 %v2803, %v2802
    %v3808 = vpack.c.b16 %v2805, %v2804
    %v3809 = vpack.c.b16 %v2807, %v2806
    %v3810 = vpack.c.b16 %v2809, %v2808
    %v3811 = vpack.c.b16 %v2811, %v2810
    %v3812 = vpack.c.b16 %v2813, %v2812
    %v3813 = vpack.c.b16 %v2815, %v2814
    %v3814 = vpack.c.b16 %v2817, %v2816
    %v3815 = vpack.c.b16 %v2819, %v2818
    %v3816 = vpack.c.b16 %v2821, %v2820
    %v3817 = vpack.c.b16 %v2823, %v2822
    %v3818 = vpack.c.b16 %v2825, %v2824
    %v3819 = vpack.c.b16 %v2827, %v2826
    %v3820 = vpack.c.b16 %v2829, %v2828
    %v3821 = vpack.c.b16 %v2831, %v2830
    %v3822 = vpack.c.b16 %v2833, %v2832
    %v3823 = vpack.c.b16 %v2835, %v2834
    %v3824 = vpack.c.b16 %v2837, %v2836
    %v3825 = vpack.c.b16 %v2839, %v2838
    %v3826 = vpack.c.b16 %v2841, %v2840
    %v3827 = vpack.c.b16 %v2843, %v2842
    %v3828 = vpack.c.b16 %v2845, %v2844
    %v3829 = vpack.c.b16 %v2847, %v2846
    %v3830 = vpack.c.b16 %v2849, %v2848
    %v3831 = vpack.c.b16 %v2851, %v2850
    %v3832 = vpack.c.b16 %v2853, %v2852
    %v3833 = vpack.c.b16 %v2855, %v2854
    %v3834 = vpack.c.b16 %v2857, %v2856
    %v3835 = vpack.c.b16 %v2859, %v2858
    %v3836 = vpack.c.b16 %v2861, %v2860
    %v3837 = vpack.c.b16 %v2863, %v2862
    %v3838 = vpack.c.b16 %v2865, %v2864
    %v3839 = vpack.c.b16 %v2867, %v2866
    %v3840 = vpack.c.b16 %v2869, %v2868
    %v3841 = vpack.c.b16 %v2871, %v2870
    %v3842 = vpack.c.b16 %v2873, %v2872
    %v3843 = vpack.c.b16 %v2875, %v2874
    %v3844 = vpack.c.b16 %v2877, %v2876
    %v3845 = vpack.c.b16 %v2879, %v2878
    %v3846 = vpack.c.b16 %v2881, %v2880
    %v3847 = vpack.c.b16 %v2883, %v2882
    %v3848 = vpack.c.b16 %v2885, %v2884
    %v3849 = vpack.c.b16 %v2887, %v2886
    %v3850 = vpack.c.b16 %v2889, %v2888
    %v3851 = vpack.c.b16 %v2891, %v2890
    %v3852 = vpack.c.b16 %v2893, %v2892
    %v3853 = vpack.c.b16 %v2895, %v2894
    %v3854 = vpack.c.b16 %v2897, %v2896
    %v3855 = vpack.c.b16 %v2899, %v2898
    %v3856 = vpack.c.b16 %v2901, %v2900
    %v3857 = vpack.c.b16 %v2903, %v2902
    %v3858 = vpack.c.b16 %v2905, %v2904
    %v3859 = vpack.c.b16 %v2907, %v2906
    %v3860 = vpack.c.b16 %v2909, %v2908
    %v3861 = vpack.c.b16 %v2911, %v2910
    %v3862 = vpack.c.b16 %v2913, %v2912
    %v3863 = vpack.c.b16 %v2915, %v2914
    %v3864 = vpack.c.b16 %v2917, %v2916
    %v3865 = vpack.c.b16 %v2919, %v2918
    %v3866 = vpack.c.b16 %v2921, %v2920
    %v3867 = vpack.c.b16 %v2923, %v2922
    %v3868 = vpack.c.b16 %v2925, %v2924
    %v3869 = vpack.c.b16 %v2927, %v2926
    %v3870 = vpack.c.b16 %v2929, %v2928
    %v3871 = vpack.c.b16 %v2931, %v2930
    %v3872 = vpack.c.b16 %v2933, %v2932
    %v3873 = vpack.c.b16 %v2935, %v2934
    %v3874 = vpack.c.b16 %v2937, %v2936
    %v3875 = vpack.c.b16 %v2939, %v2938
    %v3876 = vpack.c.b16 %v2941, %v2940
    %v3877 = vpack.c.b16 %v2943, %v2942
    %v3878 = vpack.c.b16 %v2945, %v2944
    %v3879 = vpack.c.b16 %v2947, %v2946
    %v3880 = vpack.c.b16 %v2949, %v2948
    %v3881 = vpack.c.b16 %v2951, %v2950
    %v3882 = vpack.c.b16 %v2953, %v2952
    %v3883 = vpack.c.b16 %v2955, %v2954
    %v3884 = vpack.c.b16 %v2957, %v2956
    %v3885 = vpack.c.b16 %v2959, %v2958
    %v3886 = vpack.c.b16 %v2961, %v2960
    %v3887 = vpack.c.b16 %v2963, %v2962
    %v3888 = vpack.c.b16 %v2965, %v2964
    %v3889 = vpack.c.b16 %v2967, %v2966
    %v3890 = vpack.c.b16 %v2969, %v2968
    %v3891 = vpack.c.b16 %v2971, %v2970
    %v3892 = vpack.c.b16 %v2973, %v2972
    %v3893 = vpack.c.b16 %v2975, %v2974
    %v3894 = vpack.c.b16 %v2977, %v2976
    %v3895 = vpack.c.b16 %v2979, %v2978
    %v3896 = vpack.c.b16 %v2981, %v2980
    %v3897 = vpack.c.b16 %v2983, %v2982
    %v3898 = vpack.c.b16 %v2985, %v2984
    %v3899 = vpack.c.b16 %v2987, %v2986
    %v3900 = vpack.c.b16 %v2989, %v2988
    %v3901 = vpack.c.b16 %v2991, %v2990
    %v3902 = vpack.c.b16 %v2993, %v2992
    %v3903 = vpack.c.b16 %v2995, %v2994
    %v3904 = vpack.c.b16 %v2997, %v2996
    %v3905 = vpack.c.b16 %v2999, %v2998
    %v3906 = vpack.c.b16 %v3001, %v3000
    %v3907 = vpack.c.b16 %v3003, %v3002
    %v3908 = vpack.c.b16 %v3005, %v3004
    %v3909 = vpack.c.b16 %v3007, %v3006
    %v3910 = vpack.c.b16 %v3009, %v3008
    %v3911 = vpack.c.b16 %v3011, %v3010
    %v3912 = vpack.c.b16 %v3013, %v3012
    %v3913 = vpack.c.b16 %v3015, %v3014
    %v3914 = vpack.c.b16 %v3017, %v3016
    %v3915 = vpack.c.b16 %v3019, %v3018
    %v3916 = vpack.c.b16 %v3021, %v3020
    %v3917 = vpack.c.b16 %v3023, %v3022
    %v3918 = vpack.c.b16 %v3025, %v3024
    %v3919 = vpack.c.b16 %v3027, %v3026
    %v3920 = vpack.c.b16 %v3029, %v3028
    %v3921 = vpack.c.b16 %v3031, %v3030
    %v3922 = vpack.c.b16 %v3033, %v3032
    %v3923 = vpack.c.b16 %v3035, %v3034
    %v3924 = vpack.c.b16 %v3037, %v3036
    %v3925 = vpack.c.b16 %v3039, %v3038
    %v3926 = vpack.c.b16 %v3041, %v3040
    %v3927 = vpack.c.b16 %v3043, %v3042
    %v3928 = vpack.c.b16 %v3045, %v3044
    %v3929 = vpack.c.b16 %v3047, %v3046
    %v3930 = vpack.c.b16 %v3049, %v3048
    %v3931 = vpack.c.b16 %v3051, %v3050
    %v3932 = vpack.c.b16 %v3053, %v3052
    %v3933 = vpack.c.b16 %v3055, %v3054
    %v3934 = vpack.c.b16 %v3057, %v3056
    %v3935 = vpack.c.b16 %v3059, %v3058
    %v3936 = vpack.c.b16 %v3061, %v3060
    %v3937 = vpack.c.b16 %v3063, %v3062
    %v3938 = vpack.c.b16 %v3065, %v3064
    %v3939 = vpack.c.b16 %v3067, %v3066
    %v3940 = vpack.c.b16 %v3069, %v3068
    %v3941 = vpack.c.b16 %v3071, %v3070
    %v3942 = vpack.c.b16 %v3073, %v3072
    %v3943 = vpack.c.b16 %v3075, %v3074
    %v3944 = vpack.c.b16 %v3077, %v3076
    %v3945 = vpack.c.b16 %v3079, %v3078
    %v3946 = vpack.c.b16 %v3081, %v3080
    %v3947 = vpack.c.b16 %v3083, %v3082
    %v3948 = vpack.c.b16 %v3085, %v3084
    %v3949 = vpack.c.b16 %v3087, %v3086
    %v3950 = vpack.c.b16 %v3089, %v3088
    %v3951 = vpack.c.b16 %v3091, %v3090
    %v3952 = vpack.c.b16 %v3093, %v3092
    %v3953 = vpack.c.b16 %v3095, %v3094
    %v3954 = vpack.c.b16 %v3097, %v3096
    %v3955 = vpack.c.b16 %v3099, %v3098
    %v3956 = vpack.c.b16 %v3101, %v3100
    %v3957 = vpack.c.b16 %v3103, %v3102
    %v3958 = vpack.c.b16 %v3105, %v3104
    %v3959 = vpack.c.b16 %v3107, %v3106
    %v3960 = vpack.c.b16 %v3109, %v3108
    %v3961 = vpack.c.b16 %v3111, %v3110
    %v3962 = vpack.c.b16 %v3113, %v3112
    %v3963 = vpack.c.b16 %v3115, %v3114
    %v3964 = vpack.c.b16 %v3117, %v3116
    %v3965 = vpack.c.b16 %v3119, %v3118
    %v3966 = vpack.c.b16 %v3121, %v3120
    %v3967 = vpack.c.b16 %v3123, %v3122
    %v3968 = vpack.c.b16 %v3125, %v3124
    %v3969 = vpack.c.b16 %v3127, %v3126
    %v3970 = vpack.c.b16 %v3129, %v3128
    %v3971 = vpack.c.b16 %v3131, %v3130
    %v3972 = vpack.c.b16 %v3133, %v3132
    %v3973 = vpack.c.b16 %v3135, %v3134
    %v3974 = vpack.c.b16 %v3137, %v3136
    %v3975 = vpack.c.b16 %v3139, %v3138
    %v3976 = vpack.c.b16 %v3141, %v3140
    %v3977 = vpack.c.b16 %v3143, %v3142
    %v3978 = vpack.c.b16 %v3145, %v3144
    %v3979 = vpack.c.b16 %v3147, %v3146
    %v3980 = vpack.c.b16 %v3149, %v3148
    %v3981 = vpack.c.b16 %v3151, %v3150
    %v3982 = vpack.c.b16 %v3153, %v3152
    %v3983 = vpack.c.b16 %v3155, %v3154
    %v3984 = vpack.c.b16 %v3157, %v3156
    %v3985 = vpack.c.b16 %v3159, %v3158
    %v3986 = vpack.c.b16 %v3161, %v3160
    %v3987 = vpack.c.b16 %v3163, %v3162
    %v3988 = vpack.c.b16 %v3165, %v3164
    %v3989 = vpack.c.b16 %v3167, %v3166
    %v3990 = vpack.c.b16 %v3169, %v3168
    %v3991 = vpack.c.b16 %v3171, %v3170
    %v3992 = vpack.c.b16 %v3173, %v3172
    %v3993 = vpack.c.b16 %v3175, %v3174
    %v3994 = vpack.c.b16 %v3177, %v3176
    %v3995 = vpack.c.b16 %v3179, %v3178
    %v3996 = vpack.c.b16 %v3181, %v3180
    %v3997 = vpack.c.b16 %v3183, %v3182
    %v3998 = vpack.c.b16 %v3185, %v3184
    %v3999 = vpack.c.b16 %v3187, %v3186
    %v4000 = vpack.c.b16 %v3189, %v3188
    %v4001 = vpack.c.b16 %v3191, %v3190
    %v4002 = vpack.c.b16 %v3193, %v3192
    %v4003 = vpack.c.b16 %v3195, %v3194
    %v4004 = vpack.c.b16 %v3197, %v3196
    %v4005 = vpack.c.b16 %v3199, %v3198
    %v4006 = vpack.c.b16 %v3201, %v3200
    %v4007 = vpack.c.b16 %v3203, %v3202
    %v4008 = vpack.c.b16 %v3205, %v3204
    %v4009 = vpack.c.b16 %v3207, %v3206
    %v4010 = vpack.c.b16 %v3209, %v3208
    %v4011 = vpack.c.b16 %v3211, %v3210
    %v4012 = vpack.c.b16 %v3213, %v3212
    %v4013 = vpack.c.b16 %v3215, %v3214
    %v4014 = vpack.c.b16 %v3217, %v3216
    %v4015 = vpack.c.b16 %v3219, %v3218
    %v4016 = vpack.c.b16 %v3221, %v3220
    %v4017 = vpack.c.b16 %v3223, %v3222
    %v4018 = vpack.c.b16 %v3225, %v3224
    %v4019 = vpack.c.b16 %v3227, %v3226
    %v4020 = vpack.c.b16 %v3229, %v3228
    %v4021 = vpack.c.b16 %v3231, %v3230
    %v4022 = vpack.c.b16 %v3233, %v3232
    %v4023 = vpack.c.b16 %v3235, %v3234
    %v4024 = vpack.c.b16 %v3237, %v3236
    %v4025 = vpack.c.b16 %v3239, %v3238
    %v4026 = vpack.c.b16 %v3241, %v3240
    %v4027 = vpack.c.b16 %v3243, %v3242
    %v4028 = vpack.c.b16 %v3245, %v3244
    %v4029 = vpack.c.b16 %v3247, %v3246
    %v4030 = vpack.c.b16 %v3249, %v3248
    %v4031 = vpack.c.b16 %v3251, %v3250
    %v4032 = vpack.c.b16 %v3253, %v3252
    %v4033 = vpack.c.b16 %v3255, %v3254
    %v4034 = vpack.c.b16 %v3257, %v3256
    %v4035 = vpack.c.b16 %v3259, %v3258
    %v4036 = vpack.c.b16 %v3261, %v3260
    %v4037 = vpack.c.b16 %v3263, %v3262
    %v4038 = vpack.c.b16 %v3265, %v3264
    %v4039 = vpack.c.b16 %v3267, %v3266
    %v4040 = vpack.c.b16 %v3269, %v3268
    %v4041 = vpack.c.b16 %v3271, %v3270
    %v4042 = vpack.c.b16 %v3273, %v3272
    %v4043 = vpack.c.b16 %v3275, %v3274
    %v4044 = vpack.c.b16 %v3277, %v3276
    %v4045 = vpack.c.b16 %v3279, %v3278
    %v4046 = vpack.c.b16 %v3281, %v3280
    %v4047 = vpack.c.b16 %v3283, %v3282
    %v4048 = vpack.c.b16 %v3285, %v3284
    %v4049 = vpack.c.b16 %v3287, %v3286
    %v4050 = vpack.c.b16 %v3289, %v3288
    %v4051 = vpack.c.b16 %v3291, %v3290
    %v4052 = vpack.c.b16 %v3293, %v3292
    %v4053 = vpack.c.b16 %v3295, %v3294
    %v4054 = vpack.c.b16 %v3297, %v3296
    %v4055 = vpack.c.b16 %v3299, %v3298
    %v4056 = vpack.c.b16 %v3301, %v3300
    %v4057 = vpack.c.b16 %v3303, %v3302
    %v4058 = vpack.c.b16 %v3305, %v3304
    %v4059 = vpack.c.b16 %v3307, %v3306
    %v4060 = vpack.c.b16 %v3309, %v3308
    %v4061 = vpack.c.b16 %v3311, %v3310
    %v4062 = vpack.c.b16 %v3313, %v3312
    %v4063 = vpack.c.b16 %v3315, %v3314
    %v4064 = vpack.c.b16 %v3317, %v3316
    %v4065 = vpack.c.b16 %v3319, %v3318
    %v4066 = vpack.c.b16 %v3321, %v3320
    %v4067 = vpack.c.b16 %v3323, %v3322
    %v4068 = vpack.c.b16 %v3325, %v3324
    %v4069 = vpack.c.b16 %v3327, %v3326
    %v4070 = vpack.c.b16 %v3329, %v3328
    %v4071 = vpack.c.b16 %v3331, %v3330
    %v4072 = vpack.c.b16 %v3333, %v3332
    %v4073 = vpack.c.b16 %v3335, %v3334
    %v4074 = vpack.c.b16 %v3337, %v3336
    %v4075 = vpack.c.b16 %v3339, %v3338
    %v4076 = vpack.c.b16 %v3341, %v3340
    %v4077 = vpack.c.b16 %v3343, %v3342
    %v4078 = vpack.c.b16 %v3345, %v3344
    %v4079 = vpack.c.b16 %v3347, %v3346
    %v4080 = vpack.c.b16 %v3349, %v3348
    %v4081 = vpack.c.b16 %v3351, %v3350
    %v4082 = vpack.c.b16 %v3353, %v3352
    %v4083 = vpack.c.b16 %v3355, %v3354
    %v4084 = vpack.c.b16 %v3357, %v3356
    %v4085 = vpack.c.b16 %v3359, %v3358
    %v4086 = vpack.c.b16 %v3361, %v3360
    %v4087 = vpack.c.b16 %v3363, %v3362
    %v4088 = vpack.c.b16 %v3365, %v3364
    %v4089 = vpack.c.b16 %v3367, %v3366
    %v4090 = vpack.c.b16 %v3369, %v3368
    %v4091 = vpack.c.b16 %v3371, %v3370
    %v4092 = vpack.c.b16 %v3373, %v3372
    %v4093 = vpack.c.b16 %v3375, %v3374
    %v4094 = vpack.c.b16 %v3377, %v3376
    %v4095 = vpack.c.b16 %v3379, %v3378
    %v4096 = vpack.c.b16 %v3381, %v3380
    %v4097 = vpack.c.b16 %v3383, %v3382
    %v4098 = vpack.c.b16 %v3385, %v3384
    %v4099 = vpack.c.b16 %v3387, %v3386
    %v4100 = vpack.c.b16 %v3389, %v3388
    %v4101 = vpack.c.b16 %v3391, %v3390
    %v4102 = vpack.c.b16 %v3393, %v3392
    %v4103 = vpack.c.b16 %v3395, %v3394
    %v4104 = vpack.c.b16 %v3397, %v3396
    %v4105 = vpack.c.b16 %v3399, %v3398
    %v4106 = vpack.c.b16 %v3401, %v3400
    %v4107 = vpack.c.b16 %v3403, %v3402
    %v4108 = vpack.c.b16 %v3405, %v3404
    %v4109 = vpack.c.b16 %v3407, %v3406
    %v4110 = vpack.c.b16 %v3409, %v3408
    %v4111 = vpack.c.b16 %v3411, %v3410
    %v4112 = vpack.c.b16 %v3413, %v3412
    %v4113 = vpack.c.b16 %v3415, %v3414
    %v4114 = vpack.c.b16 %v3417, %v3416
    %v4115 = vpack.c.b16 %v3419, %v3418
    %v4116 = vpack.c.b16 %v3421, %v3420
    %v4117 = vpack.c.b16 %v3423, %v3422
    %v4118 = vpack.c.b16 %v3425, %v3424
    %v4119 = vpack.c.b16 %v3427, %v3426
    %v4120 = vpack.c.b16 %v3429, %v3428
    %v4121 = vpack.c.b16 %v3431, %v3430
    %v4122 = vpack.c.b16 %v3433, %v3432
    %v4123 = vpack.c.b16 %v3435, %v3434
    %v4124 = vpack.c.b16 %v3437, %v3436
    %v4125 = vpack.c.b16 %v3439, %v3438
    %v4126 = vpack.c.b16 %v3441, %v3440
    %v4127 = vpack.c.b16 %v3443, %v3442
    %v4128 = vpack.c.b16 %v3445, %v3444
    %v4129 = vpack.c.b16 %v3447, %v3446
    %v4130 = vpack.c.b16 %v3449, %v3448
    %v4131 = vpack.c.b16 %v3451, %v3450
    %v4132 = vpack.c.b16 %v3453, %v3452
    %v4133 = vpack.c.b16 %v3455, %v3454
    %v4134 = vpack.c.b16 %v3457, %v3456
    %v4135 = vpack.c.b16 %v3459, %v3458
    %v4136 = vpack.c.b16 %v3461, %v3460
    %v4137 = vpack.c.b16 %v3463, %v3462
    %v4138 = vpack.c.b16 %v3465, %v3464
    %v4139 = vpack.c.b16 %v3467, %v3466
    %v4140 = vpack.c.b16 %v3469, %v3468
    %v4141 = vpack.c.b16 %v3471, %v3470
    %v4142 = vpack.c.b16 %v3473, %v3472
    %v4143 = vpack.c.b16 %v3475, %v3474
    %v4144 = vpack.c.b16 %v3477, %v3476
    %v4145 = vpack.c.b16 %v3479, %v3478
    %v4146 = vpack.c.b16 %v3481, %v3480
    %v4147 = vpack.c.b16 %v3483, %v3482
    %v4148 = vpack.c.b16 %v3485, %v3484
    %v4149 = vpack.c.b16 %v3487, %v3486
    %v4150 = vpack.c.b16 %v3489, %v3488
    %v4151 = vpack.c.b16 %v3491, %v3490
    %v4152 = vpack.c.b16 %v3493, %v3492
    %v4153 = vpack.c.b16 %v3495, %v3494
    %v4154 = vpack.c.b16 %v3497, %v3496
    %v4155 = vpack.c.b16 %v3499, %v3498
    %v4156 = vpack.c.b16 %v3501, %v3500
    %v4157 = vpack.c.b16 %v3503, %v3502
    %v4158 = vpack.c.b16 %v3505, %v3504
    %v4159 = vpack.c.b16 %v3507, %v3506
    %v4160 = vpack.c.b16 %v3509, %v3508
    %v4161 = vpack.c.b16 %v3511, %v3510
    %v4162 = vpack.c.b16 %v3513, %v3512
    %v4163 = vpack.c.b16 %v3515, %v3514
    %v4164 = vpack.c.b16 %v3517, %v3516
    %v4165 = vpack.c.b16 %v3519, %v3518
    %v4166 = vpack.c.b16 %v3521, %v3520
    %v4167 = vpack.c.b16 %v3523, %v3522
    %v4168 = vpack.c.b16 %v3525, %v3524
    %v4169 = vpack.c.b16 %v3527, %v3526
    %v4170 = vpack.c.b16 %v3529, %v3528
    %v4171 = vpack.c.b16 %v3531, %v3530
    %v4172 = vpack.c.b16 %v3533, %v3532
    %v4173 = vpack.c.b16 %v3535, %v3534
    %v4174 = vpack.c.b16 %v3537, %v3536
    %v4175 = vpack.c.b16 %v3539, %v3538
    %v4176 = vpack.c.b16 %v3541, %v3540
    %v4177 = vpack.c.b16 %v3543, %v3542
    %v4178 = vpack.c.b16 %v3545, %v3544
    %v4179 = vpack.c.b16 %v3547, %v3546
    %v4180 = vpack.c.b16 %v3549, %v3548
    %v4181 = vpack.c.b16 %v3551, %v3550
    %v4182 = vpack.c.b16 %v3553, %v3552
    %v4183 = vpack.c.b16 %v3555, %v3554
    %v4184 = vpack.c.b16 %v3557, %v3556
    %v4185 = vpack.c.b16 %v3559, %v3558
    %v4186 = vpack.c.b16 %v3561, %v3560
    %v4187 = vpack.c.b16 %v3563, %v3562
    %v4188 = vpack.c.b16 %v3565, %v3564
    %v4189 = vpack.c.b16 %v3567, %v3566
    %v4190 = vpack.c.b16 %v3569, %v3568
    %v4191 = vpack.c.b16 %v3571, %v3570
    %v4192 = vpack.c.b16 %v3573, %v3572
    %v4193 = vpack.c.b16 %v3575, %v3574
    %v4194 = vpack.c.b16 %v3577, %v3576
    %v4195 = vpack.c.b16 %v3579, %v3578
    %v4196 = vpack.c.b16 %v3581, %v3580
    %v4197 = vpack.c.b16 %v3583, %v3582
    %v4198 = vpack.c.b16 %v3585, %v3584
    %v4199 = vpack.c.b16 %v3587, %v3586
    %v4200 = vpack.c.b16 %v3589, %v3588
    %v4201 = vpack.c.b16 %v3591, %v3590
    %v4202 = vpack.c.b16 %v3593, %v3592
    %v4203 = vpack.c.b16 %v3595, %v3594
    %v4204 = vpack.c.b16 %v3597, %v3596
    %v4205 = vpack.c.b16 %v3599, %v3598
    %v4206 = vpack.c.b16 %v3601, %v3600
    %v4207 = vpack.c.b16 %v3603, %v3602
    %v4208 = vpack.c.b16 %v3605, %v3604
    %v4209 = vpack.c.b16 %v3607, %v3606
    %v4210 = vpack.c.b16 %v3609, %v3608
    %v4211 = vpack.c.b16 %v3611, %v3610
    %v4212 = vpack.c.b16 %v3613, %v3612
    %v4213 = vpack.c.b16 %v3615, %v3614
    %v4214 = vpack.c.b16 %v3617, %v3616
    %v4215 = vpack.c.b16 %v3619, %v3618
    %v4216 = vpack.c.b16 %v3621, %v3620
    %v4217 = vpack.c.b16 %v3623, %v3622
    %v4218 = vpack.c.b16 %v3625, %v3624
    %v4219 = vpack.c.b16 %v3627, %v3626
    %v4220 = vpack.c.b16 %v3629, %v3628
    %v4221 = vpack.c.b16 %v3631, %v3630
    %v4222 = vpack.c.b16 %v3633, %v3632
    %v4223 = vpack.c.b16 %v3635, %v3634
    %v4224 = vpack.c.b16 %v3637, %v3636
    %v4225 = vpack.c.b16 %v3639, %v3638
    %v4226 = vpack.c.b16 %v3641, %v3640
    %v4227 = vpack.c.b16 %v3643, %v3642
    %v4228 = vpack.c.b16 %v3645, %v3644
    %v4229 = vpack.c.b16 %v3647, %v3646
    %v4230 = vpack.c.b16 %v3649, %v3648
    %v4231 = vpack.c.b16 %v3651, %v3650
    %v4232 = vpack.c.b16 %v3653, %v3652
    %v4233 = vpack.c.b16 %v3655, %v3654
    %v4234 = vpack.c.b16 %v3657, %v3656
    %v4235 = vpack.c.b16 %v3659, %v3658
    %4812 = vmatprep.subr.bf16.mxu0 0
    %4813 = vmatpush1.bf16.msra.mxu0 %v3667
    %4814 = vmatprep.subr.bf16.mxu0 0
    %4815 = vmatpush1.bf16.msra.mxu0 %v3666
    %4816 = vmatprep.subr.bf16.mxu0 0
    %4817 = vmatpush1.bf16.msra.mxu0 %v3665
    %4818 = vmatprep.subr.bf16.mxu0 0
    %4819 = vmatpush1.bf16.msra.mxu0 %v3664
    %4820 = vmatprep.subr.bf16.mxu0 0
    %4821 = vmatpush1.bf16.msra.mxu0 %v3663
    %4822 = vmatprep.subr.bf16.mxu0 0
    %4823 = vmatpush1.bf16.msra.mxu0 %v3662
    %4824 = vmatprep.subr.bf16.mxu0 0
    %4825 = vmatpush1.bf16.msra.mxu0 %v3661
    %4826 = vmatprep.subr.bf16.mxu0 0
    %4827 = vmatpush1.bf16.msra.mxu0 %v3660
    %4828 = vmatprep.subr.bf16.mxu0 0
    %4829 = vmatpush2.bf16.msra.mxu0 %v3675
    %4830 = vmatprep.subr.bf16.mxu0 0
    %4831 = vmatpush2.bf16.msra.mxu0 %v3674
    %4832 = vmatprep.subr.bf16.mxu0 0
    %4833 = vmatpush2.bf16.msra.mxu0 %v3673
    %4834 = vmatprep.subr.bf16.mxu0 0
    %4835 = vmatpush2.bf16.msra.mxu0 %v3672
    %4836 = vmatprep.subr.bf16.mxu0 0
    %4837 = vmatpush2.bf16.msra.mxu0 %v3671
    %4838 = vmatprep.subr.bf16.mxu0 0
    %4839 = vmatpush2.bf16.msra.mxu0 %v3670
    %4840 = vmatprep.subr.bf16.mxu0 0
    %4841 = vmatpush2.bf16.msra.mxu0 %v3669
    %4842 = vmatprep.subr.bf16.mxu0 0
    %4843 = vmatpush2.bf16.msra.mxu0 %v3668
    %4844 = vmatprep.mubr.bf16.mxu0 %v126
    %4845 = vmatmul.mubr.bf16.gmra.mxu0 %v125
    %v4846 = vpop.f32.mrf.mxu0
    %v4847 = vadd.f32 %v1354, %v4846
    %v4848 = vpop.f32.mrf.mxu0
    %v4849 = vpop.f32.mrf.mxu0
    %v4850 = vpop.f32.mrf.mxu0
    %4851 = vdwg.mxu0
    %4852 = vmatprep.subr.bf16.mxu0 0
    %4853 = vmatpush1.bf16.msra.mxu0 %v3683
    %4854 = vmatprep.subr.bf16.mxu0 0
    %4855 = vmatpush1.bf16.msra.mxu0 %v3682
    %4856 = vmatprep.subr.bf16.mxu0 0
    %4857 = vmatpush1.bf16.msra.mxu0 %v3681
    %4858 = vmatprep.subr.bf16.mxu0 0
    %4859 = vmatpush1.bf16.msra.mxu0 %v3680
    %4860 = vmatprep.subr.bf16.mxu0 0
    %4861 = vmatpush1.bf16.msra.mxu0 %v3679
    %4862 = vmatprep.subr.bf16.mxu0 0
    %4863 = vmatpush1.bf16.msra.mxu0 %v3678
    %4864 = vmatprep.subr.bf16.mxu0 0
    %4865 = vmatpush1.bf16.msra.mxu0 %v3677
    %4866 = vmatprep.subr.bf16.mxu0 0
    %4867 = vmatpush1.bf16.msra.mxu0 %v3676
    %4868 = vmatprep.subr.bf16.mxu0 0
    %4869 = vmatpush2.bf16.msra.mxu0 %v3691
    %4870 = vmatprep.subr.bf16.mxu0 0
    %4871 = vmatpush2.bf16.msra.mxu0 %v3690
    %4872 = vmatprep.subr.bf16.mxu0 0
    %4873 = vmatpush2.bf16.msra.mxu0 %v3689
    %4874 = vmatprep.subr.bf16.mxu0 0
    %4875 = vmatpush2.bf16.msra.mxu0 %v3688
    %4876 = vmatprep.subr.bf16.mxu0 0
    %4877 = vmatpush2.bf16.msra.mxu0 %v3687
    %4878 = vmatprep.subr.bf16.mxu0 0
    %4879 = vmatpush2.bf16.msra.mxu0 %v3686
    %4880 = vmatprep.subr.bf16.mxu0 0
    %4881 = vmatpush2.bf16.msra.mxu0 %v3685
    %4882 = vmatprep.subr.bf16.mxu0 0
    %4883 = vmatpush2.bf16.msra.mxu0 %v3684
    %4884 = vmatprep.mubr.bf16.mxu0 %v128
    %4885 = vmatmul.mubr.bf16.gmra.mxu0 %v127
    %v4886 = vpop.f32.mrf.mxu0
    %v4887 = vadd.f32 %v4847, %v4886
    %v4888 = vpop.f32.mrf.mxu0
    %v4889 = vpop.f32.mrf.mxu0
    %v4890 = vpop.f32.mrf.mxu0
    %4891 = vdwg.mxu0
    %4892 = vmatprep.subr.bf16.mxu0 0
    %4893 = vmatpush1.bf16.msra.mxu0 %v3699
    %4894 = vmatprep.subr.bf16.mxu0 0
    %4895 = vmatpush1.bf16.msra.mxu0 %v3698
    %4896 = vmatprep.subr.bf16.mxu0 0
    %4897 = vmatpush1.bf16.msra.mxu0 %v3697
    %4898 = vmatprep.subr.bf16.mxu0 0
    %4899 = vmatpush1.bf16.msra.mxu0 %v3696
    %4900 = vmatprep.subr.bf16.mxu0 0
    %4901 = vmatpush1.bf16.msra.mxu0 %v3695
    %4902 = vmatprep.subr.bf16.mxu0 0
    %4903 = vmatpush1.bf16.msra.mxu0 %v3694
    %4904 = vmatprep.subr.bf16.mxu0 0
    %4905 = vmatpush1.bf16.msra.mxu0 %v3693
    %4906 = vmatprep.subr.bf16.mxu0 0
    %4907 = vmatpush1.bf16.msra.mxu0 %v3692
    %4908 = vmatprep.subr.bf16.mxu0 0
    %4909 = vmatpush2.bf16.msra.mxu0 %v3707
    %4910 = vmatprep.subr.bf16.mxu0 0
    %4911 = vmatpush2.bf16.msra.mxu0 %v3706
    %4912 = vmatprep.subr.bf16.mxu0 0
    %4913 = vmatpush2.bf16.msra.mxu0 %v3705
    %4914 = vmatprep.subr.bf16.mxu0 0
    %4915 = vmatpush2.bf16.msra.mxu0 %v3704
    %4916 = vmatprep.subr.bf16.mxu0 0
    %4917 = vmatpush2.bf16.msra.mxu0 %v3703
    %4918 = vmatprep.subr.bf16.mxu0 0
    %4919 = vmatpush2.bf16.msra.mxu0 %v3702
    %4920 = vmatprep.subr.bf16.mxu0 0
    %4921 = vmatpush2.bf16.msra.mxu0 %v3701
    %4922 = vmatprep.subr.bf16.mxu0 0
    %4923 = vmatpush2.bf16.msra.mxu0 %v3700
    %4924 = vmatprep.mubr.bf16.mxu0 %v130
    %4925 = vmatmul.mubr.bf16.gmra.mxu0 %v129
    %v4926 = vpop.f32.mrf.mxu0
    %v4927 = vadd.f32 %v4887, %v4926
    %v4928 = vpop.f32.mrf.mxu0
    %v4929 = vpop.f32.mrf.mxu0
    %v4930 = vpop.f32.mrf.mxu0
    %4931 = vdwg.mxu0
    %4932 = vmatprep.subr.bf16.mxu0 0
    %4933 = vmatpush1.bf16.msra.mxu0 %v3715
    %4934 = vmatprep.subr.bf16.mxu0 0
    %4935 = vmatpush1.bf16.msra.mxu0 %v3714
    %4936 = vmatprep.subr.bf16.mxu0 0
    %4937 = vmatpush1.bf16.msra.mxu0 %v3713
    %4938 = vmatprep.subr.bf16.mxu0 0
    %4939 = vmatpush1.bf16.msra.mxu0 %v3712
    %4940 = vmatprep.subr.bf16.mxu0 0
    %4941 = vmatpush1.bf16.msra.mxu0 %v3711
    %4942 = vmatprep.subr.bf16.mxu0 0
    %4943 = vmatpush1.bf16.msra.mxu0 %v3710
    %4944 = vmatprep.subr.bf16.mxu0 0
    %4945 = vmatpush1.bf16.msra.mxu0 %v3709
    %4946 = vmatprep.subr.bf16.mxu0 0
    %4947 = vmatpush1.bf16.msra.mxu0 %v3708
    %4948 = vmatprep.subr.bf16.mxu0 0
    %4949 = vmatpush2.bf16.msra.mxu0 %v3723
    %4950 = vmatprep.subr.bf16.mxu0 0
    %4951 = vmatpush2.bf16.msra.mxu0 %v3722
    %4952 = vmatprep.subr.bf16.mxu0 0
    %4953 = vmatpush2.bf16.msra.mxu0 %v3721
    %4954 = vmatprep.subr.bf16.mxu0 0
    %4955 = vmatpush2.bf16.msra.mxu0 %v3720
    %4956 = vmatprep.subr.bf16.mxu0 0
    %4957 = vmatpush2.bf16.msra.mxu0 %v3719
    %4958 = vmatprep.subr.bf16.mxu0 0
    %4959 = vmatpush2.bf16.msra.mxu0 %v3718
    %4960 = vmatprep.subr.bf16.mxu0 0
    %4961 = vmatpush2.bf16.msra.mxu0 %v3717
    %4962 = vmatprep.subr.bf16.mxu0 0
    %4963 = vmatpush2.bf16.msra.mxu0 %v3716
    %4964 = vmatprep.mubr.bf16.mxu0 %v132
    %4965 = vmatmul.mubr.bf16.gmra.mxu0 %v131
    %v4966 = vpop.f32.mrf.mxu0
    %v4967 = vadd.f32 %v4927, %v4966
    %v4968 = vpop.f32.mrf.mxu0
    %v4969 = vpop.f32.mrf.mxu0
    %v4970 = vpop.f32.mrf.mxu0
    %4971 = vdwg.mxu0
    %4972 = vmatprep.subr.bf16.mxu0 0
    %4973 = vmatpush1.bf16.msra.mxu0 %v3731
    %4974 = vmatprep.subr.bf16.mxu0 0
    %4975 = vmatpush1.bf16.msra.mxu0 %v3730
    %4976 = vmatprep.subr.bf16.mxu0 0
    %4977 = vmatpush1.bf16.msra.mxu0 %v3729
    %4978 = vmatprep.subr.bf16.mxu0 0
    %4979 = vmatpush1.bf16.msra.mxu0 %v3728
    %4980 = vmatprep.subr.bf16.mxu0 0
    %4981 = vmatpush1.bf16.msra.mxu0 %v3727
    %4982 = vmatprep.subr.bf16.mxu0 0
    %4983 = vmatpush1.bf16.msra.mxu0 %v3726
    %4984 = vmatprep.subr.bf16.mxu0 0
    %4985 = vmatpush1.bf16.msra.mxu0 %v3725
    %4986 = vmatprep.subr.bf16.mxu0 0
    %4987 = vmatpush1.bf16.msra.mxu0 %v3724
    %4988 = vmatprep.subr.bf16.mxu0 0
    %4989 = vmatpush2.bf16.msra.mxu0 %v3739
    %4990 = vmatprep.subr.bf16.mxu0 0
    %4991 = vmatpush2.bf16.msra.mxu0 %v3738
    %4992 = vmatprep.subr.bf16.mxu0 0
    %4993 = vmatpush2.bf16.msra.mxu0 %v3737
    %4994 = vmatprep.subr.bf16.mxu0 0
    %4995 = vmatpush2.bf16.msra.mxu0 %v3736
    %4996 = vmatprep.subr.bf16.mxu0 0
    %4997 = vmatpush2.bf16.msra.mxu0 %v3735
    %4998 = vmatprep.subr.bf16.mxu0 0
    %4999 = vmatpush2.bf16.msra.mxu0 %v3734
    %5000 = vmatprep.subr.bf16.mxu0 0
    %5001 = vmatpush2.bf16.msra.mxu0 %v3733
    %5002 = vmatprep.subr.bf16.mxu0 0
    %5003 = vmatpush2.bf16.msra.mxu0 %v3732
    %5004 = vmatprep.mubr.bf16.mxu0 %v134
    %5005 = vmatmul.mubr.bf16.gmra.mxu0 %v133
    %v5006 = vpop.f32.mrf.mxu0
    %v5007 = vadd.f32 %v4967, %v5006
    %v5008 = vpop.f32.mrf.mxu0
    %v5009 = vpop.f32.mrf.mxu0
    %v5010 = vpop.f32.mrf.mxu0
    %5011 = vdwg.mxu0
    %5012 = vmatprep.subr.bf16.mxu0 0
    %5013 = vmatpush1.bf16.msra.mxu0 %v3747
    %5014 = vmatprep.subr.bf16.mxu0 0
    %5015 = vmatpush1.bf16.msra.mxu0 %v3746
    %5016 = vmatprep.subr.bf16.mxu0 0
    %5017 = vmatpush1.bf16.msra.mxu0 %v3745
    %5018 = vmatprep.subr.bf16.mxu0 0
    %5019 = vmatpush1.bf16.msra.mxu0 %v3744
    %5020 = vmatprep.subr.bf16.mxu0 0
    %5021 = vmatpush1.bf16.msra.mxu0 %v3743
    %5022 = vmatprep.subr.bf16.mxu0 0
    %5023 = vmatpush1.bf16.msra.mxu0 %v3742
    %5024 = vmatprep.subr.bf16.mxu0 0
    %5025 = vmatpush1.bf16.msra.mxu0 %v3741
    %5026 = vmatprep.subr.bf16.mxu0 0
    %5027 = vmatpush1.bf16.msra.mxu0 %v3740
    %5028 = vmatprep.subr.bf16.mxu0 0
    %5029 = vmatpush2.bf16.msra.mxu0 %v3755
    %5030 = vmatprep.subr.bf16.mxu0 0
    %5031 = vmatpush2.bf16.msra.mxu0 %v3754
    %5032 = vmatprep.subr.bf16.mxu0 0
    %5033 = vmatpush2.bf16.msra.mxu0 %v3753
    %5034 = vmatprep.subr.bf16.mxu0 0
    %5035 = vmatpush2.bf16.msra.mxu0 %v3752
    %5036 = vmatprep.subr.bf16.mxu0 0
    %5037 = vmatpush2.bf16.msra.mxu0 %v3751
    %5038 = vmatprep.subr.bf16.mxu0 0
    %5039 = vmatpush2.bf16.msra.mxu0 %v3750
    %5040 = vmatprep.subr.bf16.mxu0 0
    %5041 = vmatpush2.bf16.msra.mxu0 %v3749
    %5042 = vmatprep.subr.bf16.mxu0 0
    %5043 = vmatpush2.bf16.msra.mxu0 %v3748
    %5044 = vmatprep.mubr.bf16.mxu0 %v136
    %5045 = vmatmul.mubr.bf16.gmra.mxu0 %v135
    %v5046 = vpop.f32.mrf.mxu0
    %v5047 = vadd.f32 %v5007, %v5046
    %v5048 = vpop.f32.mrf.mxu0
    %v5049 = vpop.f32.mrf.mxu0
    %v5050 = vpop.f32.mrf.mxu0
    %5051 = vdwg.mxu0
    %5052 = vmatprep.subr.bf16.mxu0 0
    %5053 = vmatpush1.bf16.msra.mxu0 %v3763
    %5054 = vmatprep.subr.bf16.mxu0 0
    %5055 = vmatpush1.bf16.msra.mxu0 %v3762
    %5056 = vmatprep.subr.bf16.mxu0 0
    %5057 = vmatpush1.bf16.msra.mxu0 %v3761
    %5058 = vmatprep.subr.bf16.mxu0 0
    %5059 = vmatpush1.bf16.msra.mxu0 %v3760
    %5060 = vmatprep.subr.bf16.mxu0 0
    %5061 = vmatpush1.bf16.msra.mxu0 %v3759
    %5062 = vmatprep.subr.bf16.mxu0 0
    %5063 = vmatpush1.bf16.msra.mxu0 %v3758
    %5064 = vmatprep.subr.bf16.mxu0 0
    %5065 = vmatpush1.bf16.msra.mxu0 %v3757
    %5066 = vmatprep.subr.bf16.mxu0 0
    %5067 = vmatpush1.bf16.msra.mxu0 %v3756
    %5068 = vmatprep.subr.bf16.mxu0 0
    %5069 = vmatpush2.bf16.msra.mxu0 %v3771
    %5070 = vmatprep.subr.bf16.mxu0 0
    %5071 = vmatpush2.bf16.msra.mxu0 %v3770
    %5072 = vmatprep.subr.bf16.mxu0 0
    %5073 = vmatpush2.bf16.msra.mxu0 %v3769
    %5074 = vmatprep.subr.bf16.mxu0 0
    %5075 = vmatpush2.bf16.msra.mxu0 %v3768
    %5076 = vmatprep.subr.bf16.mxu0 0
    %5077 = vmatpush2.bf16.msra.mxu0 %v3767
    %5078 = vmatprep.subr.bf16.mxu0 0
    %5079 = vmatpush2.bf16.msra.mxu0 %v3766
    %5080 = vmatprep.subr.bf16.mxu0 0
    %5081 = vmatpush2.bf16.msra.mxu0 %v3765
    %5082 = vmatprep.subr.bf16.mxu0 0
    %5083 = vmatpush2.bf16.msra.mxu0 %v3764
    %5084 = vmatprep.mubr.bf16.mxu0 %v138
    %5085 = vmatmul.mubr.bf16.gmra.mxu0 %v137
    %v5086 = vpop.f32.mrf.mxu0
    %v5087 = vadd.f32 %v5047, %v5086
    %v5088 = vpop.f32.mrf.mxu0
    %v5089 = vpop.f32.mrf.mxu0
    %v5090 = vpop.f32.mrf.mxu0
    %5091 = vdwg.mxu0
    %5092 = vmatprep.subr.bf16.mxu0 0
    %5093 = vmatpush1.bf16.msra.mxu0 %v3779
    %5094 = vmatprep.subr.bf16.mxu0 0
    %5095 = vmatpush1.bf16.msra.mxu0 %v3778
    %5096 = vmatprep.subr.bf16.mxu0 0
    %5097 = vmatpush1.bf16.msra.mxu0 %v3777
    %5098 = vmatprep.subr.bf16.mxu0 0
    %5099 = vmatpush1.bf16.msra.mxu0 %v3776
    %5100 = vmatprep.subr.bf16.mxu0 0
    %5101 = vmatpush1.bf16.msra.mxu0 %v3775
    %5102 = vmatprep.subr.bf16.mxu0 0
    %5103 = vmatpush1.bf16.msra.mxu0 %v3774
    %5104 = vmatprep.subr.bf16.mxu0 0
    %5105 = vmatpush1.bf16.msra.mxu0 %v3773
    %5106 = vmatprep.subr.bf16.mxu0 0
    %5107 = vmatpush1.bf16.msra.mxu0 %v3772
    %5108 = vmatprep.subr.bf16.mxu0 0
    %5109 = vmatpush2.bf16.msra.mxu0 %v3787
    %5110 = vmatprep.subr.bf16.mxu0 0
    %5111 = vmatpush2.bf16.msra.mxu0 %v3786
    %5112 = vmatprep.subr.bf16.mxu0 0
    %5113 = vmatpush2.bf16.msra.mxu0 %v3785
    %5114 = vmatprep.subr.bf16.mxu0 0
    %5115 = vmatpush2.bf16.msra.mxu0 %v3784
    %5116 = vmatprep.subr.bf16.mxu0 0
    %5117 = vmatpush2.bf16.msra.mxu0 %v3783
    %5118 = vmatprep.subr.bf16.mxu0 0
    %5119 = vmatpush2.bf16.msra.mxu0 %v3782
    %5120 = vmatprep.subr.bf16.mxu0 0
    %5121 = vmatpush2.bf16.msra.mxu0 %v3781
    %5122 = vmatprep.subr.bf16.mxu0 0
    %5123 = vmatpush2.bf16.msra.mxu0 %v3780
    %5124 = vmatprep.mubr.bf16.mxu0 %v140
    %5125 = vmatmul.mubr.bf16.gmra.mxu0 %v139
    %v5126 = vpop.f32.mrf.mxu0
    %v5127 = vadd.f32 %v5087, %v5126
    %v5128 = vpop.f32.mrf.mxu0
    %v5129 = vpop.f32.mrf.mxu0
    %v5130 = vpop.f32.mrf.mxu0
    %5131 = vdwg.mxu0
    %5132 = vmatprep.subr.bf16.mxu0 0
    %5133 = vmatpush1.bf16.msra.mxu0 %v3795
    %5134 = vmatprep.subr.bf16.mxu0 0
    %5135 = vmatpush1.bf16.msra.mxu0 %v3794
    %5136 = vmatprep.subr.bf16.mxu0 0
    %5137 = vmatpush1.bf16.msra.mxu0 %v3793
    %5138 = vmatprep.subr.bf16.mxu0 0
    %5139 = vmatpush1.bf16.msra.mxu0 %v3792
    %5140 = vmatprep.subr.bf16.mxu0 0
    %5141 = vmatpush1.bf16.msra.mxu0 %v3791
    %5142 = vmatprep.subr.bf16.mxu0 0
    %5143 = vmatpush1.bf16.msra.mxu0 %v3790
    %5144 = vmatprep.subr.bf16.mxu0 0
    %5145 = vmatpush1.bf16.msra.mxu0 %v3789
    %5146 = vmatprep.subr.bf16.mxu0 0
    %5147 = vmatpush1.bf16.msra.mxu0 %v3788
    %5148 = vmatprep.subr.bf16.mxu0 0
    %5149 = vmatpush2.bf16.msra.mxu0 %v3803
    %5150 = vmatprep.subr.bf16.mxu0 0
    %5151 = vmatpush2.bf16.msra.mxu0 %v3802
    %5152 = vmatprep.subr.bf16.mxu0 0
    %5153 = vmatpush2.bf16.msra.mxu0 %v3801
    %5154 = vmatprep.subr.bf16.mxu0 0
    %5155 = vmatpush2.bf16.msra.mxu0 %v3800
    %5156 = vmatprep.subr.bf16.mxu0 0
    %5157 = vmatpush2.bf16.msra.mxu0 %v3799
    %5158 = vmatprep.subr.bf16.mxu0 0
    %5159 = vmatpush2.bf16.msra.mxu0 %v3798
    %5160 = vmatprep.subr.bf16.mxu0 0
    %5161 = vmatpush2.bf16.msra.mxu0 %v3797
    %5162 = vmatprep.subr.bf16.mxu0 0
    %5163 = vmatpush2.bf16.msra.mxu0 %v3796
    %5164 = vmatprep.mubr.bf16.mxu0 %v142
    %5165 = vmatmul.mubr.bf16.gmra.mxu0 %v141
    %v5166 = vpop.f32.mrf.mxu0
    %v5167 = vadd.f32 %v5127, %v5166
    %v5168 = vpop.f32.mrf.mxu0
    %v5169 = vpop.f32.mrf.mxu0
    %v5170 = vpop.f32.mrf.mxu0
    %5171 = vdwg.mxu0
    %5172 = vmatprep.subr.bf16.mxu0 0
    %5173 = vmatpush1.bf16.msra.mxu0 %v3811
    %5174 = vmatprep.subr.bf16.mxu0 0
    %5175 = vmatpush1.bf16.msra.mxu0 %v3810
    %5176 = vmatprep.subr.bf16.mxu0 0
    %5177 = vmatpush1.bf16.msra.mxu0 %v3809
    %5178 = vmatprep.subr.bf16.mxu0 0
    %5179 = vmatpush1.bf16.msra.mxu0 %v3808
    %5180 = vmatprep.subr.bf16.mxu0 0
    %5181 = vmatpush1.bf16.msra.mxu0 %v3807
    %5182 = vmatprep.subr.bf16.mxu0 0
    %5183 = vmatpush1.bf16.msra.mxu0 %v3806
    %5184 = vmatprep.subr.bf16.mxu0 0
    %5185 = vmatpush1.bf16.msra.mxu0 %v3805
    %5186 = vmatprep.subr.bf16.mxu0 0
    %5187 = vmatpush1.bf16.msra.mxu0 %v3804
    %5188 = vmatprep.subr.bf16.mxu0 0
    %5189 = vmatpush2.bf16.msra.mxu0 %v3819
    %5190 = vmatprep.subr.bf16.mxu0 0
    %5191 = vmatpush2.bf16.msra.mxu0 %v3818
    %5192 = vmatprep.subr.bf16.mxu0 0
    %5193 = vmatpush2.bf16.msra.mxu0 %v3817
    %5194 = vmatprep.subr.bf16.mxu0 0
    %5195 = vmatpush2.bf16.msra.mxu0 %v3816
    %5196 = vmatprep.subr.bf16.mxu0 0
    %5197 = vmatpush2.bf16.msra.mxu0 %v3815
    %5198 = vmatprep.subr.bf16.mxu0 0
    %5199 = vmatpush2.bf16.msra.mxu0 %v3814
    %5200 = vmatprep.subr.bf16.mxu0 0
    %5201 = vmatpush2.bf16.msra.mxu0 %v3813
    %5202 = vmatprep.subr.bf16.mxu0 0
    %5203 = vmatpush2.bf16.msra.mxu0 %v3812
    %5204 = vmatprep.mubr.bf16.mxu0 %v144
    %5205 = vmatmul.mubr.bf16.gmra.mxu0 %v143
    %v5206 = vpop.f32.mrf.mxu0
    %v5207 = vadd.f32 %v5167, %v5206
    %v5208 = vpop.f32.mrf.mxu0
    %v5209 = vpop.f32.mrf.mxu0
    %v5210 = vpop.f32.mrf.mxu0
    %5211 = vdwg.mxu0
    %5212 = vmatprep.subr.bf16.mxu0 0
    %5213 = vmatpush1.bf16.msra.mxu0 %v3827
    %5214 = vmatprep.subr.bf16.mxu0 0
    %5215 = vmatpush1.bf16.msra.mxu0 %v3826
    %5216 = vmatprep.subr.bf16.mxu0 0
    %5217 = vmatpush1.bf16.msra.mxu0 %v3825
    %5218 = vmatprep.subr.bf16.mxu0 0
    %5219 = vmatpush1.bf16.msra.mxu0 %v3824
    %5220 = vmatprep.subr.bf16.mxu0 0
    %5221 = vmatpush1.bf16.msra.mxu0 %v3823
    %5222 = vmatprep.subr.bf16.mxu0 0
    %5223 = vmatpush1.bf16.msra.mxu0 %v3822
    %5224 = vmatprep.subr.bf16.mxu0 0
    %5225 = vmatpush1.bf16.msra.mxu0 %v3821
    %5226 = vmatprep.subr.bf16.mxu0 0
    %5227 = vmatpush1.bf16.msra.mxu0 %v3820
    %5228 = vmatprep.subr.bf16.mxu0 0
    %5229 = vmatpush2.bf16.msra.mxu0 %v3835
    %5230 = vmatprep.subr.bf16.mxu0 0
    %5231 = vmatpush2.bf16.msra.mxu0 %v3834
    %5232 = vmatprep.subr.bf16.mxu0 0
    %5233 = vmatpush2.bf16.msra.mxu0 %v3833
    %5234 = vmatprep.subr.bf16.mxu0 0
    %5235 = vmatpush2.bf16.msra.mxu0 %v3832
    %5236 = vmatprep.subr.bf16.mxu0 0
    %5237 = vmatpush2.bf16.msra.mxu0 %v3831
    %5238 = vmatprep.subr.bf16.mxu0 0
    %5239 = vmatpush2.bf16.msra.mxu0 %v3830
    %5240 = vmatprep.subr.bf16.mxu0 0
    %5241 = vmatpush2.bf16.msra.mxu0 %v3829
    %5242 = vmatprep.subr.bf16.mxu0 0
    %5243 = vmatpush2.bf16.msra.mxu0 %v3828
    %5244 = vmatprep.mubr.bf16.mxu0 %v146
    %5245 = vmatmul.mubr.bf16.gmra.mxu0 %v145
    %v5246 = vpop.f32.mrf.mxu0
    %v5247 = vadd.f32 %v5207, %v5246
    %v5248 = vpop.f32.mrf.mxu0
    %v5249 = vpop.f32.mrf.mxu0
    %v5250 = vpop.f32.mrf.mxu0
    %5251 = vdwg.mxu0
    %5252 = vmatprep.subr.bf16.mxu0 0
    %5253 = vmatpush1.bf16.msra.mxu0 %v3843
    %5254 = vmatprep.subr.bf16.mxu0 0
    %5255 = vmatpush1.bf16.msra.mxu0 %v3842
    %5256 = vmatprep.subr.bf16.mxu0 0
    %5257 = vmatpush1.bf16.msra.mxu0 %v3841
    %5258 = vmatprep.subr.bf16.mxu0 0
    %5259 = vmatpush1.bf16.msra.mxu0 %v3840
    %5260 = vmatprep.subr.bf16.mxu0 0
    %5261 = vmatpush1.bf16.msra.mxu0 %v3839
    %5262 = vmatprep.subr.bf16.mxu0 0
    %5263 = vmatpush1.bf16.msra.mxu0 %v3838
    %5264 = vmatprep.subr.bf16.mxu0 0
    %5265 = vmatpush1.bf16.msra.mxu0 %v3837
    %5266 = vmatprep.subr.bf16.mxu0 0
    %5267 = vmatpush1.bf16.msra.mxu0 %v3836
    %5268 = vmatprep.subr.bf16.mxu0 0
    %5269 = vmatpush2.bf16.msra.mxu0 %v3851
    %5270 = vmatprep.subr.bf16.mxu0 0
    %5271 = vmatpush2.bf16.msra.mxu0 %v3850
    %5272 = vmatprep.subr.bf16.mxu0 0
    %5273 = vmatpush2.bf16.msra.mxu0 %v3849
    %5274 = vmatprep.subr.bf16.mxu0 0
    %5275 = vmatpush2.bf16.msra.mxu0 %v3848
    %5276 = vmatprep.subr.bf16.mxu0 0
    %5277 = vmatpush2.bf16.msra.mxu0 %v3847
    %5278 = vmatprep.subr.bf16.mxu0 0
    %5279 = vmatpush2.bf16.msra.mxu0 %v3846
    %5280 = vmatprep.subr.bf16.mxu0 0
    %5281 = vmatpush2.bf16.msra.mxu0 %v3845
    %5282 = vmatprep.subr.bf16.mxu0 0
    %5283 = vmatpush2.bf16.msra.mxu0 %v3844
    %5284 = vmatprep.mubr.bf16.mxu0 %v148
    %5285 = vmatmul.mubr.bf16.gmra.mxu0 %v147
    %v5286 = vpop.f32.mrf.mxu0
    %v5287 = vadd.f32 %v5247, %v5286
    %v5288 = vpop.f32.mrf.mxu0
    %v5289 = vpop.f32.mrf.mxu0
    %v5290 = vpop.f32.mrf.mxu0
    %5291 = vdwg.mxu0
    %5292 = vmatprep.subr.bf16.mxu0 0
    %5293 = vmatpush1.bf16.msra.mxu0 %v3859
    %5294 = vmatprep.subr.bf16.mxu0 0
    %5295 = vmatpush1.bf16.msra.mxu0 %v3858
    %5296 = vmatprep.subr.bf16.mxu0 0
    %5297 = vmatpush1.bf16.msra.mxu0 %v3857
    %5298 = vmatprep.subr.bf16.mxu0 0
    %5299 = vmatpush1.bf16.msra.mxu0 %v3856
    %5300 = vmatprep.subr.bf16.mxu0 0
    %5301 = vmatpush1.bf16.msra.mxu0 %v3855
    %5302 = vmatprep.subr.bf16.mxu0 0
    %5303 = vmatpush1.bf16.msra.mxu0 %v3854
    %5304 = vmatprep.subr.bf16.mxu0 0
    %5305 = vmatpush1.bf16.msra.mxu0 %v3853
    %5306 = vmatprep.subr.bf16.mxu0 0
    %5307 = vmatpush1.bf16.msra.mxu0 %v3852
    %5308 = vmatprep.subr.bf16.mxu0 0
    %5309 = vmatpush2.bf16.msra.mxu0 %v3867
    %5310 = vmatprep.subr.bf16.mxu0 0
    %5311 = vmatpush2.bf16.msra.mxu0 %v3866
    %5312 = vmatprep.subr.bf16.mxu0 0
    %5313 = vmatpush2.bf16.msra.mxu0 %v3865
    %5314 = vmatprep.subr.bf16.mxu0 0
    %5315 = vmatpush2.bf16.msra.mxu0 %v3864
    %5316 = vmatprep.subr.bf16.mxu0 0
    %5317 = vmatpush2.bf16.msra.mxu0 %v3863
    %5318 = vmatprep.subr.bf16.mxu0 0
    %5319 = vmatpush2.bf16.msra.mxu0 %v3862
    %5320 = vmatprep.subr.bf16.mxu0 0
    %5321 = vmatpush2.bf16.msra.mxu0 %v3861
    %5322 = vmatprep.subr.bf16.mxu0 0
    %5323 = vmatpush2.bf16.msra.mxu0 %v3860
    %5324 = vmatprep.mubr.bf16.mxu0 %v150
    %5325 = vmatmul.mubr.bf16.gmra.mxu0 %v149
    %v5326 = vpop.f32.mrf.mxu0
    %v5327 = vadd.f32 %v5287, %v5326
    %v5328 = vpop.f32.mrf.mxu0
    %v5329 = vpop.f32.mrf.mxu0
    %v5330 = vpop.f32.mrf.mxu0
    %5331 = vdwg.mxu0
    %5332 = vmatprep.subr.bf16.mxu0 0
    %5333 = vmatpush1.bf16.msra.mxu0 %v3875
    %5334 = vmatprep.subr.bf16.mxu0 0
    %5335 = vmatpush1.bf16.msra.mxu0 %v3874
    %5336 = vmatprep.subr.bf16.mxu0 0
    %5337 = vmatpush1.bf16.msra.mxu0 %v3873
    %5338 = vmatprep.subr.bf16.mxu0 0
    %5339 = vmatpush1.bf16.msra.mxu0 %v3872
    %5340 = vmatprep.subr.bf16.mxu0 0
    %5341 = vmatpush1.bf16.msra.mxu0 %v3871
    %5342 = vmatprep.subr.bf16.mxu0 0
    %5343 = vmatpush1.bf16.msra.mxu0 %v3870
    %5344 = vmatprep.subr.bf16.mxu0 0
    %5345 = vmatpush1.bf16.msra.mxu0 %v3869
    %5346 = vmatprep.subr.bf16.mxu0 0
    %5347 = vmatpush1.bf16.msra.mxu0 %v3868
    %5348 = vmatprep.subr.bf16.mxu0 0
    %5349 = vmatpush2.bf16.msra.mxu0 %v3883
    %5350 = vmatprep.subr.bf16.mxu0 0
    %5351 = vmatpush2.bf16.msra.mxu0 %v3882
    %5352 = vmatprep.subr.bf16.mxu0 0
    %5353 = vmatpush2.bf16.msra.mxu0 %v3881
    %5354 = vmatprep.subr.bf16.mxu0 0
    %5355 = vmatpush2.bf16.msra.mxu0 %v3880
    %5356 = vmatprep.subr.bf16.mxu0 0
    %5357 = vmatpush2.bf16.msra.mxu0 %v3879
    %5358 = vmatprep.subr.bf16.mxu0 0
    %5359 = vmatpush2.bf16.msra.mxu0 %v3878
    %5360 = vmatprep.subr.bf16.mxu0 0
    %5361 = vmatpush2.bf16.msra.mxu0 %v3877
    %5362 = vmatprep.subr.bf16.mxu0 0
    %5363 = vmatpush2.bf16.msra.mxu0 %v3876
    %5364 = vmatprep.mubr.bf16.mxu0 %v152
    %5365 = vmatmul.mubr.bf16.gmra.mxu0 %v151
    %v5366 = vpop.f32.mrf.mxu0
    %v5367 = vadd.f32 %v5327, %v5366
    %v5368 = vpop.f32.mrf.mxu0
    %v5369 = vpop.f32.mrf.mxu0
    %v5370 = vpop.f32.mrf.mxu0
    %5371 = vdwg.mxu0
    %5372 = vmatprep.subr.bf16.mxu0 0
    %5373 = vmatpush1.bf16.msra.mxu0 %v3891
    %5374 = vmatprep.subr.bf16.mxu0 0
    %5375 = vmatpush1.bf16.msra.mxu0 %v3890
    %5376 = vmatprep.subr.bf16.mxu0 0
    %5377 = vmatpush1.bf16.msra.mxu0 %v3889
    %5378 = vmatprep.subr.bf16.mxu0 0
    %5379 = vmatpush1.bf16.msra.mxu0 %v3888
    %5380 = vmatprep.subr.bf16.mxu0 0
    %5381 = vmatpush1.bf16.msra.mxu0 %v3887
    %5382 = vmatprep.subr.bf16.mxu0 0
    %5383 = vmatpush1.bf16.msra.mxu0 %v3886
    %5384 = vmatprep.subr.bf16.mxu0 0
    %5385 = vmatpush1.bf16.msra.mxu0 %v3885
    %5386 = vmatprep.subr.bf16.mxu0 0
    %5387 = vmatpush1.bf16.msra.mxu0 %v3884
    %5388 = vmatprep.subr.bf16.mxu0 0
    %5389 = vmatpush2.bf16.msra.mxu0 %v3899
    %5390 = vmatprep.subr.bf16.mxu0 0
    %5391 = vmatpush2.bf16.msra.mxu0 %v3898
    %5392 = vmatprep.subr.bf16.mxu0 0
    %5393 = vmatpush2.bf16.msra.mxu0 %v3897
    %5394 = vmatprep.subr.bf16.mxu0 0
    %5395 = vmatpush2.bf16.msra.mxu0 %v3896
    %5396 = vmatprep.subr.bf16.mxu0 0
    %5397 = vmatpush2.bf16.msra.mxu0 %v3895
    %5398 = vmatprep.subr.bf16.mxu0 0
    %5399 = vmatpush2.bf16.msra.mxu0 %v3894
    %5400 = vmatprep.subr.bf16.mxu0 0
    %5401 = vmatpush2.bf16.msra.mxu0 %v3893
    %5402 = vmatprep.subr.bf16.mxu0 0
    %5403 = vmatpush2.bf16.msra.mxu0 %v3892
    %5404 = vmatprep.mubr.bf16.mxu0 %v154
    %5405 = vmatmul.mubr.bf16.gmra.mxu0 %v153
    %v5406 = vpop.f32.mrf.mxu0
    %v5407 = vadd.f32 %v5367, %v5406
    %v5408 = vpop.f32.mrf.mxu0
    %v5409 = vpop.f32.mrf.mxu0
    %v5410 = vpop.f32.mrf.mxu0
    %5411 = vdwg.mxu0
    %5412 = vmatprep.subr.bf16.mxu0 0
    %5413 = vmatpush1.bf16.msra.mxu0 %v3907
    %5414 = vmatprep.subr.bf16.mxu0 0
    %5415 = vmatpush1.bf16.msra.mxu0 %v3906
    %5416 = vmatprep.subr.bf16.mxu0 0
    %5417 = vmatpush1.bf16.msra.mxu0 %v3905
    %5418 = vmatprep.subr.bf16.mxu0 0
    %5419 = vmatpush1.bf16.msra.mxu0 %v3904
    %5420 = vmatprep.subr.bf16.mxu0 0
    %5421 = vmatpush1.bf16.msra.mxu0 %v3903
    %5422 = vmatprep.subr.bf16.mxu0 0
    %5423 = vmatpush1.bf16.msra.mxu0 %v3902
    %5424 = vmatprep.subr.bf16.mxu0 0
    %5425 = vmatpush1.bf16.msra.mxu0 %v3901
    %5426 = vmatprep.subr.bf16.mxu0 0
    %5427 = vmatpush1.bf16.msra.mxu0 %v3900
    %5428 = vmatprep.subr.bf16.mxu0 0
    %5429 = vmatpush2.bf16.msra.mxu0 %v3915
    %5430 = vmatprep.subr.bf16.mxu0 0
    %5431 = vmatpush2.bf16.msra.mxu0 %v3914
    %5432 = vmatprep.subr.bf16.mxu0 0
    %5433 = vmatpush2.bf16.msra.mxu0 %v3913
    %5434 = vmatprep.subr.bf16.mxu0 0
    %5435 = vmatpush2.bf16.msra.mxu0 %v3912
    %5436 = vmatprep.subr.bf16.mxu0 0
    %5437 = vmatpush2.bf16.msra.mxu0 %v3911
    %5438 = vmatprep.subr.bf16.mxu0 0
    %5439 = vmatpush2.bf16.msra.mxu0 %v3910
    %5440 = vmatprep.subr.bf16.mxu0 0
    %5441 = vmatpush2.bf16.msra.mxu0 %v3909
    %5442 = vmatprep.subr.bf16.mxu0 0
    %5443 = vmatpush2.bf16.msra.mxu0 %v3908
    %5444 = vmatprep.mubr.bf16.mxu0 %v156
    %5445 = vmatmul.mubr.bf16.gmra.mxu0 %v155
    %v5446 = vpop.f32.mrf.mxu0
    %v5447 = vadd.f32 %v5407, %v5446
    %v5448 = vpop.f32.mrf.mxu0
    %v5449 = vpop.f32.mrf.mxu0
    %v5450 = vpop.f32.mrf.mxu0
    %5451 = vdwg.mxu0
    %5452 = vmatprep.subr.bf16.mxu0 0
    %5453 = vmatpush1.bf16.msra.mxu0 %v3923
    %5454 = vmatprep.subr.bf16.mxu0 0
    %5455 = vmatpush1.bf16.msra.mxu0 %v3922
    %5456 = vmatprep.subr.bf16.mxu0 0
    %5457 = vmatpush1.bf16.msra.mxu0 %v3921
    %5458 = vmatprep.subr.bf16.mxu0 0
    %5459 = vmatpush1.bf16.msra.mxu0 %v3920
    %5460 = vmatprep.subr.bf16.mxu0 0
    %5461 = vmatpush1.bf16.msra.mxu0 %v3919
    %5462 = vmatprep.subr.bf16.mxu0 0
    %5463 = vmatpush1.bf16.msra.mxu0 %v3918
    %5464 = vmatprep.subr.bf16.mxu0 0
    %5465 = vmatpush1.bf16.msra.mxu0 %v3917
    %5466 = vmatprep.subr.bf16.mxu0 0
    %5467 = vmatpush1.bf16.msra.mxu0 %v3916
    %5468 = vmatprep.subr.bf16.mxu0 0
    %5469 = vmatpush2.bf16.msra.mxu0 %v3931
    %5470 = vmatprep.subr.bf16.mxu0 0
    %5471 = vmatpush2.bf16.msra.mxu0 %v3930
    %5472 = vmatprep.subr.bf16.mxu0 0
    %5473 = vmatpush2.bf16.msra.mxu0 %v3929
    %5474 = vmatprep.subr.bf16.mxu0 0
    %5475 = vmatpush2.bf16.msra.mxu0 %v3928
    %5476 = vmatprep.subr.bf16.mxu0 0
    %5477 = vmatpush2.bf16.msra.mxu0 %v3927
    %5478 = vmatprep.subr.bf16.mxu0 0
    %5479 = vmatpush2.bf16.msra.mxu0 %v3926
    %5480 = vmatprep.subr.bf16.mxu0 0
    %5481 = vmatpush2.bf16.msra.mxu0 %v3925
    %5482 = vmatprep.subr.bf16.mxu0 0
    %5483 = vmatpush2.bf16.msra.mxu0 %v3924
    %5484 = vmatprep.mubr.bf16.mxu0 %v158
    %5485 = vmatmul.mubr.bf16.gmra.mxu0 %v157
    %v5486 = vpop.f32.mrf.mxu0
    %v5487 = vadd.f32 %v5447, %v5486
    %v5488 = vpop.f32.mrf.mxu0
    %v5489 = vpop.f32.mrf.mxu0
    %v5490 = vpop.f32.mrf.mxu0
    %5491 = vdwg.mxu0
    %5492 = vmatprep.subr.bf16.mxu0 0
    %5493 = vmatpush1.bf16.msra.mxu0 %v3939
    %5494 = vmatprep.subr.bf16.mxu0 0
    %5495 = vmatpush1.bf16.msra.mxu0 %v3938
    %5496 = vmatprep.subr.bf16.mxu0 0
    %5497 = vmatpush1.bf16.msra.mxu0 %v3937
    %5498 = vmatprep.subr.bf16.mxu0 0
    %5499 = vmatpush1.bf16.msra.mxu0 %v3936
    %5500 = vmatprep.subr.bf16.mxu0 0
    %5501 = vmatpush1.bf16.msra.mxu0 %v3935
    %5502 = vmatprep.subr.bf16.mxu0 0
    %5503 = vmatpush1.bf16.msra.mxu0 %v3934
    %5504 = vmatprep.subr.bf16.mxu0 0
    %5505 = vmatpush1.bf16.msra.mxu0 %v3933
    %5506 = vmatprep.subr.bf16.mxu0 0
    %5507 = vmatpush1.bf16.msra.mxu0 %v3932
    %5508 = vmatprep.subr.bf16.mxu0 0
    %5509 = vmatpush2.bf16.msra.mxu0 %v3947
    %5510 = vmatprep.subr.bf16.mxu0 0
    %5511 = vmatpush2.bf16.msra.mxu0 %v3946
    %5512 = vmatprep.subr.bf16.mxu0 0
    %5513 = vmatpush2.bf16.msra.mxu0 %v3945
    %5514 = vmatprep.subr.bf16.mxu0 0
    %5515 = vmatpush2.bf16.msra.mxu0 %v3944
    %5516 = vmatprep.subr.bf16.mxu0 0
    %5517 = vmatpush2.bf16.msra.mxu0 %v3943
    %5518 = vmatprep.subr.bf16.mxu0 0
    %5519 = vmatpush2.bf16.msra.mxu0 %v3942
    %5520 = vmatprep.subr.bf16.mxu0 0
    %5521 = vmatpush2.bf16.msra.mxu0 %v3941
    %5522 = vmatprep.subr.bf16.mxu0 0
    %5523 = vmatpush2.bf16.msra.mxu0 %v3940
    %5524 = vmatprep.mubr.bf16.mxu0 %v160
    %5525 = vmatmul.mubr.bf16.gmra.mxu0 %v159
    %v5526 = vpop.f32.mrf.mxu0
    %v5527 = vadd.f32 %v5487, %v5526
    %v5528 = vpop.f32.mrf.mxu0
    %v5529 = vpop.f32.mrf.mxu0
    %v5530 = vpop.f32.mrf.mxu0
    %5531 = vdwg.mxu0
    %5532 = vmatprep.subr.bf16.mxu0 0
    %5533 = vmatpush1.bf16.msra.mxu0 %v3955
    %5534 = vmatprep.subr.bf16.mxu0 0
    %5535 = vmatpush1.bf16.msra.mxu0 %v3954
    %5536 = vmatprep.subr.bf16.mxu0 0
    %5537 = vmatpush1.bf16.msra.mxu0 %v3953
    %5538 = vmatprep.subr.bf16.mxu0 0
    %5539 = vmatpush1.bf16.msra.mxu0 %v3952
    %5540 = vmatprep.subr.bf16.mxu0 0
    %5541 = vmatpush1.bf16.msra.mxu0 %v3951
    %5542 = vmatprep.subr.bf16.mxu0 0
    %5543 = vmatpush1.bf16.msra.mxu0 %v3950
    %5544 = vmatprep.subr.bf16.mxu0 0
    %5545 = vmatpush1.bf16.msra.mxu0 %v3949
    %5546 = vmatprep.subr.bf16.mxu0 0
    %5547 = vmatpush1.bf16.msra.mxu0 %v3948
    %5548 = vmatprep.subr.bf16.mxu0 0
    %5549 = vmatpush2.bf16.msra.mxu0 %v3963
    %5550 = vmatprep.subr.bf16.mxu0 0
    %5551 = vmatpush2.bf16.msra.mxu0 %v3962
    %5552 = vmatprep.subr.bf16.mxu0 0
    %5553 = vmatpush2.bf16.msra.mxu0 %v3961
    %5554 = vmatprep.subr.bf16.mxu0 0
    %5555 = vmatpush2.bf16.msra.mxu0 %v3960
    %5556 = vmatprep.subr.bf16.mxu0 0
    %5557 = vmatpush2.bf16.msra.mxu0 %v3959
    %5558 = vmatprep.subr.bf16.mxu0 0
    %5559 = vmatpush2.bf16.msra.mxu0 %v3958
    %5560 = vmatprep.subr.bf16.mxu0 0
    %5561 = vmatpush2.bf16.msra.mxu0 %v3957
    %5562 = vmatprep.subr.bf16.mxu0 0
    %5563 = vmatpush2.bf16.msra.mxu0 %v3956
    %5564 = vmatprep.mubr.bf16.mxu0 %v162
    %5565 = vmatmul.mubr.bf16.gmra.mxu0 %v161
    %v5566 = vpop.f32.mrf.mxu0
    %v5567 = vadd.f32 %v5527, %v5566
    %v5568 = vpop.f32.mrf.mxu0
    %v5569 = vpop.f32.mrf.mxu0
    %v5570 = vpop.f32.mrf.mxu0
    %5571 = vdwg.mxu0
    %5572 = vmatprep.subr.bf16.mxu0 0
    %5573 = vmatpush1.bf16.msra.mxu0 %v3971
    %5574 = vmatprep.subr.bf16.mxu0 0
    %5575 = vmatpush1.bf16.msra.mxu0 %v3970
    %5576 = vmatprep.subr.bf16.mxu0 0
    %5577 = vmatpush1.bf16.msra.mxu0 %v3969
    %5578 = vmatprep.subr.bf16.mxu0 0
    %5579 = vmatpush1.bf16.msra.mxu0 %v3968
    %5580 = vmatprep.subr.bf16.mxu0 0
    %5581 = vmatpush1.bf16.msra.mxu0 %v3967
    %5582 = vmatprep.subr.bf16.mxu0 0
    %5583 = vmatpush1.bf16.msra.mxu0 %v3966
    %5584 = vmatprep.subr.bf16.mxu0 0
    %5585 = vmatpush1.bf16.msra.mxu0 %v3965
    %5586 = vmatprep.subr.bf16.mxu0 0
    %5587 = vmatpush1.bf16.msra.mxu0 %v3964
    %5588 = vmatprep.subr.bf16.mxu0 0
    %5589 = vmatpush2.bf16.msra.mxu0 %v3979
    %5590 = vmatprep.subr.bf16.mxu0 0
    %5591 = vmatpush2.bf16.msra.mxu0 %v3978
    %5592 = vmatprep.subr.bf16.mxu0 0
    %5593 = vmatpush2.bf16.msra.mxu0 %v3977
    %5594 = vmatprep.subr.bf16.mxu0 0
    %5595 = vmatpush2.bf16.msra.mxu0 %v3976
    %5596 = vmatprep.subr.bf16.mxu0 0
    %5597 = vmatpush2.bf16.msra.mxu0 %v3975
    %5598 = vmatprep.subr.bf16.mxu0 0
    %5599 = vmatpush2.bf16.msra.mxu0 %v3974
    %5600 = vmatprep.subr.bf16.mxu0 0
    %5601 = vmatpush2.bf16.msra.mxu0 %v3973
    %5602 = vmatprep.subr.bf16.mxu0 0
    %5603 = vmatpush2.bf16.msra.mxu0 %v3972
    %5604 = vmatprep.mubr.bf16.mxu0 %v164
    %5605 = vmatmul.mubr.bf16.gmra.mxu0 %v163
    %v5606 = vpop.f32.mrf.mxu0
    %v5607 = vadd.f32 %v5567, %v5606
    %v5608 = vpop.f32.mrf.mxu0
    %v5609 = vpop.f32.mrf.mxu0
    %v5610 = vpop.f32.mrf.mxu0
    %5611 = vdwg.mxu0
    %5612 = vmatprep.subr.bf16.mxu0 0
    %5613 = vmatpush1.bf16.msra.mxu0 %v3987
    %5614 = vmatprep.subr.bf16.mxu0 0
    %5615 = vmatpush1.bf16.msra.mxu0 %v3986
    %5616 = vmatprep.subr.bf16.mxu0 0
    %5617 = vmatpush1.bf16.msra.mxu0 %v3985
    %5618 = vmatprep.subr.bf16.mxu0 0
    %5619 = vmatpush1.bf16.msra.mxu0 %v3984
    %5620 = vmatprep.subr.bf16.mxu0 0
    %5621 = vmatpush1.bf16.msra.mxu0 %v3983
    %5622 = vmatprep.subr.bf16.mxu0 0
    %5623 = vmatpush1.bf16.msra.mxu0 %v3982
    %5624 = vmatprep.subr.bf16.mxu0 0
    %5625 = vmatpush1.bf16.msra.mxu0 %v3981
    %5626 = vmatprep.subr.bf16.mxu0 0
    %5627 = vmatpush1.bf16.msra.mxu0 %v3980
    %5628 = vmatprep.subr.bf16.mxu0 0
    %5629 = vmatpush2.bf16.msra.mxu0 %v3995
    %5630 = vmatprep.subr.bf16.mxu0 0
    %5631 = vmatpush2.bf16.msra.mxu0 %v3994
    %5632 = vmatprep.subr.bf16.mxu0 0
    %5633 = vmatpush2.bf16.msra.mxu0 %v3993
    %5634 = vmatprep.subr.bf16.mxu0 0
    %5635 = vmatpush2.bf16.msra.mxu0 %v3992
    %5636 = vmatprep.subr.bf16.mxu0 0
    %5637 = vmatpush2.bf16.msra.mxu0 %v3991
    %5638 = vmatprep.subr.bf16.mxu0 0
    %5639 = vmatpush2.bf16.msra.mxu0 %v3990
    %5640 = vmatprep.subr.bf16.mxu0 0
    %5641 = vmatpush2.bf16.msra.mxu0 %v3989
    %5642 = vmatprep.subr.bf16.mxu0 0
    %5643 = vmatpush2.bf16.msra.mxu0 %v3988
    %5644 = vmatprep.mubr.bf16.mxu0 %v166
    %5645 = vmatmul.mubr.bf16.gmra.mxu0 %v165
    %v5646 = vpop.f32.mrf.mxu0
    %v5647 = vadd.f32 %v5607, %v5646
    %v5648 = vpop.f32.mrf.mxu0
    %v5649 = vpop.f32.mrf.mxu0
    %v5650 = vpop.f32.mrf.mxu0
    %5651 = vdwg.mxu0
    %5652 = vmatprep.subr.bf16.mxu0 0
    %5653 = vmatpush1.bf16.msra.mxu0 %v4003
    %5654 = vmatprep.subr.bf16.mxu0 0
    %5655 = vmatpush1.bf16.msra.mxu0 %v4002
    %5656 = vmatprep.subr.bf16.mxu0 0
    %5657 = vmatpush1.bf16.msra.mxu0 %v4001
    %5658 = vmatprep.subr.bf16.mxu0 0
    %5659 = vmatpush1.bf16.msra.mxu0 %v4000
    %5660 = vmatprep.subr.bf16.mxu0 0
    %5661 = vmatpush1.bf16.msra.mxu0 %v3999
    %5662 = vmatprep.subr.bf16.mxu0 0
    %5663 = vmatpush1.bf16.msra.mxu0 %v3998
    %5664 = vmatprep.subr.bf16.mxu0 0
    %5665 = vmatpush1.bf16.msra.mxu0 %v3997
    %5666 = vmatprep.subr.bf16.mxu0 0
    %5667 = vmatpush1.bf16.msra.mxu0 %v3996
    %5668 = vmatprep.subr.bf16.mxu0 0
    %5669 = vmatpush2.bf16.msra.mxu0 %v4011
    %5670 = vmatprep.subr.bf16.mxu0 0
    %5671 = vmatpush2.bf16.msra.mxu0 %v4010
    %5672 = vmatprep.subr.bf16.mxu0 0
    %5673 = vmatpush2.bf16.msra.mxu0 %v4009
    %5674 = vmatprep.subr.bf16.mxu0 0
    %5675 = vmatpush2.bf16.msra.mxu0 %v4008
    %5676 = vmatprep.subr.bf16.mxu0 0
    %5677 = vmatpush2.bf16.msra.mxu0 %v4007
    %5678 = vmatprep.subr.bf16.mxu0 0
    %5679 = vmatpush2.bf16.msra.mxu0 %v4006
    %5680 = vmatprep.subr.bf16.mxu0 0
    %5681 = vmatpush2.bf16.msra.mxu0 %v4005
    %5682 = vmatprep.subr.bf16.mxu0 0
    %5683 = vmatpush2.bf16.msra.mxu0 %v4004
    %5684 = vmatprep.mubr.bf16.mxu0 %v168
    %5685 = vmatmul.mubr.bf16.gmra.mxu0 %v167
    %v5686 = vpop.f32.mrf.mxu0
    %v5687 = vadd.f32 %v5647, %v5686
    %v5688 = vpop.f32.mrf.mxu0
    %v5689 = vpop.f32.mrf.mxu0
    %v5690 = vpop.f32.mrf.mxu0
    %5691 = vdwg.mxu0
    %5692 = vmatprep.subr.bf16.mxu0 0
    %5693 = vmatpush1.bf16.msra.mxu0 %v4019
    %5694 = vmatprep.subr.bf16.mxu0 0
    %5695 = vmatpush1.bf16.msra.mxu0 %v4018
    %5696 = vmatprep.subr.bf16.mxu0 0
    %5697 = vmatpush1.bf16.msra.mxu0 %v4017
    %5698 = vmatprep.subr.bf16.mxu0 0
    %5699 = vmatpush1.bf16.msra.mxu0 %v4016
    %5700 = vmatprep.subr.bf16.mxu0 0
    %5701 = vmatpush1.bf16.msra.mxu0 %v4015
    %5702 = vmatprep.subr.bf16.mxu0 0
    %5703 = vmatpush1.bf16.msra.mxu0 %v4014
    %5704 = vmatprep.subr.bf16.mxu0 0
    %5705 = vmatpush1.bf16.msra.mxu0 %v4013
    %5706 = vmatprep.subr.bf16.mxu0 0
    %5707 = vmatpush1.bf16.msra.mxu0 %v4012
    %5708 = vmatprep.subr.bf16.mxu0 0
    %5709 = vmatpush2.bf16.msra.mxu0 %v4027
    %5710 = vmatprep.subr.bf16.mxu0 0
    %5711 = vmatpush2.bf16.msra.mxu0 %v4026
    %5712 = vmatprep.subr.bf16.mxu0 0
    %5713 = vmatpush2.bf16.msra.mxu0 %v4025
    %5714 = vmatprep.subr.bf16.mxu0 0
    %5715 = vmatpush2.bf16.msra.mxu0 %v4024
    %5716 = vmatprep.subr.bf16.mxu0 0
    %5717 = vmatpush2.bf16.msra.mxu0 %v4023
    %5718 = vmatprep.subr.bf16.mxu0 0
    %5719 = vmatpush2.bf16.msra.mxu0 %v4022
    %5720 = vmatprep.subr.bf16.mxu0 0
    %5721 = vmatpush2.bf16.msra.mxu0 %v4021
    %5722 = vmatprep.subr.bf16.mxu0 0
    %5723 = vmatpush2.bf16.msra.mxu0 %v4020
    %5724 = vmatprep.mubr.bf16.mxu0 %v170
    %5725 = vmatmul.mubr.bf16.gmra.mxu0 %v169
    %v5726 = vpop.f32.mrf.mxu0
    %v5727 = vadd.f32 %v5687, %v5726
    %v5728 = vpop.f32.mrf.mxu0
    %v5729 = vpop.f32.mrf.mxu0
    %v5730 = vpop.f32.mrf.mxu0
    %5731 = vdwg.mxu0
    %5732 = vmatprep.subr.bf16.mxu0 0
    %5733 = vmatpush1.bf16.msra.mxu0 %v4035
    %5734 = vmatprep.subr.bf16.mxu0 0
    %5735 = vmatpush1.bf16.msra.mxu0 %v4034
    %5736 = vmatprep.subr.bf16.mxu0 0
    %5737 = vmatpush1.bf16.msra.mxu0 %v4033
    %5738 = vmatprep.subr.bf16.mxu0 0
    %5739 = vmatpush1.bf16.msra.mxu0 %v4032
    %5740 = vmatprep.subr.bf16.mxu0 0
    %5741 = vmatpush1.bf16.msra.mxu0 %v4031
    %5742 = vmatprep.subr.bf16.mxu0 0
    %5743 = vmatpush1.bf16.msra.mxu0 %v4030
    %5744 = vmatprep.subr.bf16.mxu0 0
    %5745 = vmatpush1.bf16.msra.mxu0 %v4029
    %5746 = vmatprep.subr.bf16.mxu0 0
    %5747 = vmatpush1.bf16.msra.mxu0 %v4028
    %5748 = vmatprep.subr.bf16.mxu0 0
    %5749 = vmatpush2.bf16.msra.mxu0 %v4043
    %5750 = vmatprep.subr.bf16.mxu0 0
    %5751 = vmatpush2.bf16.msra.mxu0 %v4042
    %5752 = vmatprep.subr.bf16.mxu0 0
    %5753 = vmatpush2.bf16.msra.mxu0 %v4041
    %5754 = vmatprep.subr.bf16.mxu0 0
    %5755 = vmatpush2.bf16.msra.mxu0 %v4040
    %5756 = vmatprep.subr.bf16.mxu0 0
    %5757 = vmatpush2.bf16.msra.mxu0 %v4039
    %5758 = vmatprep.subr.bf16.mxu0 0
    %5759 = vmatpush2.bf16.msra.mxu0 %v4038
    %5760 = vmatprep.subr.bf16.mxu0 0
    %5761 = vmatpush2.bf16.msra.mxu0 %v4037
    %5762 = vmatprep.subr.bf16.mxu0 0
    %5763 = vmatpush2.bf16.msra.mxu0 %v4036
    %5764 = vmatprep.mubr.bf16.mxu0 %v172
    %5765 = vmatmul.mubr.bf16.gmra.mxu0 %v171
    %v5766 = vpop.f32.mrf.mxu0
    %v5767 = vadd.f32 %v5727, %v5766
    %v5768 = vpop.f32.mrf.mxu0
    %v5769 = vpop.f32.mrf.mxu0
    %v5770 = vpop.f32.mrf.mxu0
    %5771 = vdwg.mxu0
    %5772 = vmatprep.subr.bf16.mxu0 0
    %5773 = vmatpush1.bf16.msra.mxu0 %v4051
    %5774 = vmatprep.subr.bf16.mxu0 0
    %5775 = vmatpush1.bf16.msra.mxu0 %v4050
    %5776 = vmatprep.subr.bf16.mxu0 0
    %5777 = vmatpush1.bf16.msra.mxu0 %v4049
    %5778 = vmatprep.subr.bf16.mxu0 0
    %5779 = vmatpush1.bf16.msra.mxu0 %v4048
    %5780 = vmatprep.subr.bf16.mxu0 0
    %5781 = vmatpush1.bf16.msra.mxu0 %v4047
    %5782 = vmatprep.subr.bf16.mxu0 0
    %5783 = vmatpush1.bf16.msra.mxu0 %v4046
    %5784 = vmatprep.subr.bf16.mxu0 0
    %5785 = vmatpush1.bf16.msra.mxu0 %v4045
    %5786 = vmatprep.subr.bf16.mxu0 0
    %5787 = vmatpush1.bf16.msra.mxu0 %v4044
    %5788 = vmatprep.subr.bf16.mxu0 0
    %5789 = vmatpush2.bf16.msra.mxu0 %v4059
    %5790 = vmatprep.subr.bf16.mxu0 0
    %5791 = vmatpush2.bf16.msra.mxu0 %v4058
    %5792 = vmatprep.subr.bf16.mxu0 0
    %5793 = vmatpush2.bf16.msra.mxu0 %v4057
    %5794 = vmatprep.subr.bf16.mxu0 0
    %5795 = vmatpush2.bf16.msra.mxu0 %v4056
    %5796 = vmatprep.subr.bf16.mxu0 0
    %5797 = vmatpush2.bf16.msra.mxu0 %v4055
    %5798 = vmatprep.subr.bf16.mxu0 0
    %5799 = vmatpush2.bf16.msra.mxu0 %v4054
    %5800 = vmatprep.subr.bf16.mxu0 0
    %5801 = vmatpush2.bf16.msra.mxu0 %v4053
    %5802 = vmatprep.subr.bf16.mxu0 0
    %5803 = vmatpush2.bf16.msra.mxu0 %v4052
    %5804 = vmatprep.mubr.bf16.mxu0 %v174
    %5805 = vmatmul.mubr.bf16.gmra.mxu0 %v173
    %v5806 = vpop.f32.mrf.mxu0
    %v5807 = vadd.f32 %v5767, %v5806
    %v5808 = vpop.f32.mrf.mxu0
    %v5809 = vpop.f32.mrf.mxu0
    %v5810 = vpop.f32.mrf.mxu0
    %5811 = vdwg.mxu0
    %5812 = vmatprep.subr.bf16.mxu0 0
    %5813 = vmatpush1.bf16.msra.mxu0 %v4067
    %5814 = vmatprep.subr.bf16.mxu0 0
    %5815 = vmatpush1.bf16.msra.mxu0 %v4066
    %5816 = vmatprep.subr.bf16.mxu0 0
    %5817 = vmatpush1.bf16.msra.mxu0 %v4065
    %5818 = vmatprep.subr.bf16.mxu0 0
    %5819 = vmatpush1.bf16.msra.mxu0 %v4064
    %5820 = vmatprep.subr.bf16.mxu0 0
    %5821 = vmatpush1.bf16.msra.mxu0 %v4063
    %5822 = vmatprep.subr.bf16.mxu0 0
    %5823 = vmatpush1.bf16.msra.mxu0 %v4062
    %5824 = vmatprep.subr.bf16.mxu0 0
    %5825 = vmatpush1.bf16.msra.mxu0 %v4061
    %5826 = vmatprep.subr.bf16.mxu0 0
    %5827 = vmatpush1.bf16.msra.mxu0 %v4060
    %5828 = vmatprep.subr.bf16.mxu0 0
    %5829 = vmatpush2.bf16.msra.mxu0 %v4075
    %5830 = vmatprep.subr.bf16.mxu0 0
    %5831 = vmatpush2.bf16.msra.mxu0 %v4074
    %5832 = vmatprep.subr.bf16.mxu0 0
    %5833 = vmatpush2.bf16.msra.mxu0 %v4073
    %5834 = vmatprep.subr.bf16.mxu0 0
    %5835 = vmatpush2.bf16.msra.mxu0 %v4072
    %5836 = vmatprep.subr.bf16.mxu0 0
    %5837 = vmatpush2.bf16.msra.mxu0 %v4071
    %5838 = vmatprep.subr.bf16.mxu0 0
    %5839 = vmatpush2.bf16.msra.mxu0 %v4070
    %5840 = vmatprep.subr.bf16.mxu0 0
    %5841 = vmatpush2.bf16.msra.mxu0 %v4069
    %5842 = vmatprep.subr.bf16.mxu0 0
    %5843 = vmatpush2.bf16.msra.mxu0 %v4068
    %5844 = vmatprep.mubr.bf16.mxu0 %v176
    %5845 = vmatmul.mubr.bf16.gmra.mxu0 %v175
    %v5846 = vpop.f32.mrf.mxu0
    %v5847 = vadd.f32 %v5807, %v5846
    %v5848 = vpop.f32.mrf.mxu0
    %v5849 = vpop.f32.mrf.mxu0
    %v5850 = vpop.f32.mrf.mxu0
    %5851 = vdwg.mxu0
    %5852 = vmatprep.subr.bf16.mxu0 0
    %5853 = vmatpush1.bf16.msra.mxu0 %v4083
    %5854 = vmatprep.subr.bf16.mxu0 0
    %5855 = vmatpush1.bf16.msra.mxu0 %v4082
    %5856 = vmatprep.subr.bf16.mxu0 0
    %5857 = vmatpush1.bf16.msra.mxu0 %v4081
    %5858 = vmatprep.subr.bf16.mxu0 0
    %5859 = vmatpush1.bf16.msra.mxu0 %v4080
    %5860 = vmatprep.subr.bf16.mxu0 0
    %5861 = vmatpush1.bf16.msra.mxu0 %v4079
    %5862 = vmatprep.subr.bf16.mxu0 0
    %5863 = vmatpush1.bf16.msra.mxu0 %v4078
    %5864 = vmatprep.subr.bf16.mxu0 0
    %5865 = vmatpush1.bf16.msra.mxu0 %v4077
    %5866 = vmatprep.subr.bf16.mxu0 0
    %5867 = vmatpush1.bf16.msra.mxu0 %v4076
    %5868 = vmatprep.subr.bf16.mxu0 0
    %5869 = vmatpush2.bf16.msra.mxu0 %v4091
    %5870 = vmatprep.subr.bf16.mxu0 0
    %5871 = vmatpush2.bf16.msra.mxu0 %v4090
    %5872 = vmatprep.subr.bf16.mxu0 0
    %5873 = vmatpush2.bf16.msra.mxu0 %v4089
    %5874 = vmatprep.subr.bf16.mxu0 0
    %5875 = vmatpush2.bf16.msra.mxu0 %v4088
    %5876 = vmatprep.subr.bf16.mxu0 0
    %5877 = vmatpush2.bf16.msra.mxu0 %v4087
    %5878 = vmatprep.subr.bf16.mxu0 0
    %5879 = vmatpush2.bf16.msra.mxu0 %v4086
    %5880 = vmatprep.subr.bf16.mxu0 0
    %5881 = vmatpush2.bf16.msra.mxu0 %v4085
    %5882 = vmatprep.subr.bf16.mxu0 0
    %5883 = vmatpush2.bf16.msra.mxu0 %v4084
    %5884 = vmatprep.mubr.bf16.mxu0 %v178
    %5885 = vmatmul.mubr.bf16.gmra.mxu0 %v177
    %v5886 = vpop.f32.mrf.mxu0
    %v5887 = vadd.f32 %v5847, %v5886
    %v5888 = vpop.f32.mrf.mxu0
    %v5889 = vpop.f32.mrf.mxu0
    %v5890 = vpop.f32.mrf.mxu0
    %5891 = vdwg.mxu0
    %5892 = vmatprep.subr.bf16.mxu0 0
    %5893 = vmatpush1.bf16.msra.mxu0 %v4099
    %5894 = vmatprep.subr.bf16.mxu0 0
    %5895 = vmatpush1.bf16.msra.mxu0 %v4098
    %5896 = vmatprep.subr.bf16.mxu0 0
    %5897 = vmatpush1.bf16.msra.mxu0 %v4097
    %5898 = vmatprep.subr.bf16.mxu0 0
    %5899 = vmatpush1.bf16.msra.mxu0 %v4096
    %5900 = vmatprep.subr.bf16.mxu0 0
    %5901 = vmatpush1.bf16.msra.mxu0 %v4095
    %5902 = vmatprep.subr.bf16.mxu0 0
    %5903 = vmatpush1.bf16.msra.mxu0 %v4094
    %5904 = vmatprep.subr.bf16.mxu0 0
    %5905 = vmatpush1.bf16.msra.mxu0 %v4093
    %5906 = vmatprep.subr.bf16.mxu0 0
    %5907 = vmatpush1.bf16.msra.mxu0 %v4092
    %5908 = vmatprep.subr.bf16.mxu0 0
    %5909 = vmatpush2.bf16.msra.mxu0 %v4107
    %5910 = vmatprep.subr.bf16.mxu0 0
    %5911 = vmatpush2.bf16.msra.mxu0 %v4106
    %5912 = vmatprep.subr.bf16.mxu0 0
    %5913 = vmatpush2.bf16.msra.mxu0 %v4105
    %5914 = vmatprep.subr.bf16.mxu0 0
    %5915 = vmatpush2.bf16.msra.mxu0 %v4104
    %5916 = vmatprep.subr.bf16.mxu0 0
    %5917 = vmatpush2.bf16.msra.mxu0 %v4103
    %5918 = vmatprep.subr.bf16.mxu0 0
    %5919 = vmatpush2.bf16.msra.mxu0 %v4102
    %5920 = vmatprep.subr.bf16.mxu0 0
    %5921 = vmatpush2.bf16.msra.mxu0 %v4101
    %5922 = vmatprep.subr.bf16.mxu0 0
    %5923 = vmatpush2.bf16.msra.mxu0 %v4100
    %5924 = vmatprep.mubr.bf16.mxu0 %v180
    %5925 = vmatmul.mubr.bf16.gmra.mxu0 %v179
    %v5926 = vpop.f32.mrf.mxu0
    %v5927 = vadd.f32 %v5887, %v5926
    %v5928 = vpop.f32.mrf.mxu0
    %v5929 = vpop.f32.mrf.mxu0
    %v5930 = vpop.f32.mrf.mxu0
    %5931 = vdwg.mxu0
    %5932 = vmatprep.subr.bf16.mxu0 0
    %5933 = vmatpush1.bf16.msra.mxu0 %v4115
    %5934 = vmatprep.subr.bf16.mxu0 0
    %5935 = vmatpush1.bf16.msra.mxu0 %v4114
    %5936 = vmatprep.subr.bf16.mxu0 0
    %5937 = vmatpush1.bf16.msra.mxu0 %v4113
    %5938 = vmatprep.subr.bf16.mxu0 0
    %5939 = vmatpush1.bf16.msra.mxu0 %v4112
    %5940 = vmatprep.subr.bf16.mxu0 0
    %5941 = vmatpush1.bf16.msra.mxu0 %v4111
    %5942 = vmatprep.subr.bf16.mxu0 0
    %5943 = vmatpush1.bf16.msra.mxu0 %v4110
    %5944 = vmatprep.subr.bf16.mxu0 0
    %5945 = vmatpush1.bf16.msra.mxu0 %v4109
    %5946 = vmatprep.subr.bf16.mxu0 0
    %5947 = vmatpush1.bf16.msra.mxu0 %v4108
    %5948 = vmatprep.subr.bf16.mxu0 0
    %5949 = vmatpush2.bf16.msra.mxu0 %v4123
    %5950 = vmatprep.subr.bf16.mxu0 0
    %5951 = vmatpush2.bf16.msra.mxu0 %v4122
    %5952 = vmatprep.subr.bf16.mxu0 0
    %5953 = vmatpush2.bf16.msra.mxu0 %v4121
    %5954 = vmatprep.subr.bf16.mxu0 0
    %5955 = vmatpush2.bf16.msra.mxu0 %v4120
    %5956 = vmatprep.subr.bf16.mxu0 0
    %5957 = vmatpush2.bf16.msra.mxu0 %v4119
    %5958 = vmatprep.subr.bf16.mxu0 0
    %5959 = vmatpush2.bf16.msra.mxu0 %v4118
    %5960 = vmatprep.subr.bf16.mxu0 0
    %5961 = vmatpush2.bf16.msra.mxu0 %v4117
    %5962 = vmatprep.subr.bf16.mxu0 0
    %5963 = vmatpush2.bf16.msra.mxu0 %v4116
    %5964 = vmatprep.mubr.bf16.mxu0 %v182
    %5965 = vmatmul.mubr.bf16.gmra.mxu0 %v181
    %v5966 = vpop.f32.mrf.mxu0
    %v5967 = vadd.f32 %v5927, %v5966
    %v5968 = vpop.f32.mrf.mxu0
    %v5969 = vpop.f32.mrf.mxu0
    %v5970 = vpop.f32.mrf.mxu0
    %5971 = vdwg.mxu0
    %5972 = vmatprep.subr.bf16.mxu0 0
    %5973 = vmatpush1.bf16.msra.mxu0 %v4131
    %5974 = vmatprep.subr.bf16.mxu0 0
    %5975 = vmatpush1.bf16.msra.mxu0 %v4130
    %5976 = vmatprep.subr.bf16.mxu0 0
    %5977 = vmatpush1.bf16.msra.mxu0 %v4129
    %5978 = vmatprep.subr.bf16.mxu0 0
    %5979 = vmatpush1.bf16.msra.mxu0 %v4128
    %5980 = vmatprep.subr.bf16.mxu0 0
    %5981 = vmatpush1.bf16.msra.mxu0 %v4127
    %5982 = vmatprep.subr.bf16.mxu0 0
    %5983 = vmatpush1.bf16.msra.mxu0 %v4126
    %5984 = vmatprep.subr.bf16.mxu0 0
    %5985 = vmatpush1.bf16.msra.mxu0 %v4125
    %5986 = vmatprep.subr.bf16.mxu0 0
    %5987 = vmatpush1.bf16.msra.mxu0 %v4124
    %5988 = vmatprep.subr.bf16.mxu0 0
    %5989 = vmatpush2.bf16.msra.mxu0 %v4139
    %5990 = vmatprep.subr.bf16.mxu0 0
    %5991 = vmatpush2.bf16.msra.mxu0 %v4138
    %5992 = vmatprep.subr.bf16.mxu0 0
    %5993 = vmatpush2.bf16.msra.mxu0 %v4137
    %5994 = vmatprep.subr.bf16.mxu0 0
    %5995 = vmatpush2.bf16.msra.mxu0 %v4136
    %5996 = vmatprep.subr.bf16.mxu0 0
    %5997 = vmatpush2.bf16.msra.mxu0 %v4135
    %5998 = vmatprep.subr.bf16.mxu0 0
    %5999 = vmatpush2.bf16.msra.mxu0 %v4134
    %6000 = vmatprep.subr.bf16.mxu0 0
    %6001 = vmatpush2.bf16.msra.mxu0 %v4133
    %6002 = vmatprep.subr.bf16.mxu0 0
    %6003 = vmatpush2.bf16.msra.mxu0 %v4132
    %6004 = vmatprep.mubr.bf16.mxu0 %v184
    %6005 = vmatmul.mubr.bf16.gmra.mxu0 %v183
    %v6006 = vpop.f32.mrf.mxu0
    %v6007 = vadd.f32 %v5967, %v6006
    %v6008 = vpop.f32.mrf.mxu0
    %v6009 = vpop.f32.mrf.mxu0
    %v6010 = vpop.f32.mrf.mxu0
    %6011 = vdwg.mxu0
    %6012 = vmatprep.subr.bf16.mxu0 0
    %6013 = vmatpush1.bf16.msra.mxu0 %v4147
    %6014 = vmatprep.subr.bf16.mxu0 0
    %6015 = vmatpush1.bf16.msra.mxu0 %v4146
    %6016 = vmatprep.subr.bf16.mxu0 0
    %6017 = vmatpush1.bf16.msra.mxu0 %v4145
    %6018 = vmatprep.subr.bf16.mxu0 0
    %6019 = vmatpush1.bf16.msra.mxu0 %v4144
    %6020 = vmatprep.subr.bf16.mxu0 0
    %6021 = vmatpush1.bf16.msra.mxu0 %v4143
    %6022 = vmatprep.subr.bf16.mxu0 0
    %6023 = vmatpush1.bf16.msra.mxu0 %v4142
    %6024 = vmatprep.subr.bf16.mxu0 0
    %6025 = vmatpush1.bf16.msra.mxu0 %v4141
    %6026 = vmatprep.subr.bf16.mxu0 0
    %6027 = vmatpush1.bf16.msra.mxu0 %v4140
    %6028 = vmatprep.subr.bf16.mxu0 0
    %6029 = vmatpush2.bf16.msra.mxu0 %v4155
    %6030 = vmatprep.subr.bf16.mxu0 0
    %6031 = vmatpush2.bf16.msra.mxu0 %v4154
    %6032 = vmatprep.subr.bf16.mxu0 0
    %6033 = vmatpush2.bf16.msra.mxu0 %v4153
    %6034 = vmatprep.subr.bf16.mxu0 0
    %6035 = vmatpush2.bf16.msra.mxu0 %v4152
    %6036 = vmatprep.subr.bf16.mxu0 0
    %6037 = vmatpush2.bf16.msra.mxu0 %v4151
    %6038 = vmatprep.subr.bf16.mxu0 0
    %6039 = vmatpush2.bf16.msra.mxu0 %v4150
    %6040 = vmatprep.subr.bf16.mxu0 0
    %6041 = vmatpush2.bf16.msra.mxu0 %v4149
    %6042 = vmatprep.subr.bf16.mxu0 0
    %6043 = vmatpush2.bf16.msra.mxu0 %v4148
    %6044 = vmatprep.mubr.bf16.mxu0 %v186
    %6045 = vmatmul.mubr.bf16.gmra.mxu0 %v185
    %v6046 = vpop.f32.mrf.mxu0
    %v6047 = vadd.f32 %v6007, %v6046
    %v6048 = vpop.f32.mrf.mxu0
    %v6049 = vpop.f32.mrf.mxu0
    %v6050 = vpop.f32.mrf.mxu0
    %6051 = vdwg.mxu0
    %6052 = vmatprep.subr.bf16.mxu0 0
    %6053 = vmatpush1.bf16.msra.mxu0 %v4163
    %6054 = vmatprep.subr.bf16.mxu0 0
    %6055 = vmatpush1.bf16.msra.mxu0 %v4162
    %6056 = vmatprep.subr.bf16.mxu0 0
    %6057 = vmatpush1.bf16.msra.mxu0 %v4161
    %6058 = vmatprep.subr.bf16.mxu0 0
    %6059 = vmatpush1.bf16.msra.mxu0 %v4160
    %6060 = vmatprep.subr.bf16.mxu0 0
    %6061 = vmatpush1.bf16.msra.mxu0 %v4159
    %6062 = vmatprep.subr.bf16.mxu0 0
    %6063 = vmatpush1.bf16.msra.mxu0 %v4158
    %6064 = vmatprep.subr.bf16.mxu0 0
    %6065 = vmatpush1.bf16.msra.mxu0 %v4157
    %6066 = vmatprep.subr.bf16.mxu0 0
    %6067 = vmatpush1.bf16.msra.mxu0 %v4156
    %6068 = vmatprep.subr.bf16.mxu0 0
    %6069 = vmatpush2.bf16.msra.mxu0 %v4171
    %6070 = vmatprep.subr.bf16.mxu0 0
    %6071 = vmatpush2.bf16.msra.mxu0 %v4170
    %6072 = vmatprep.subr.bf16.mxu0 0
    %6073 = vmatpush2.bf16.msra.mxu0 %v4169
    %6074 = vmatprep.subr.bf16.mxu0 0
    %6075 = vmatpush2.bf16.msra.mxu0 %v4168
    %6076 = vmatprep.subr.bf16.mxu0 0
    %6077 = vmatpush2.bf16.msra.mxu0 %v4167
    %6078 = vmatprep.subr.bf16.mxu0 0
    %6079 = vmatpush2.bf16.msra.mxu0 %v4166
    %6080 = vmatprep.subr.bf16.mxu0 0
    %6081 = vmatpush2.bf16.msra.mxu0 %v4165
    %6082 = vmatprep.subr.bf16.mxu0 0
    %6083 = vmatpush2.bf16.msra.mxu0 %v4164
    %6084 = vmatprep.mubr.bf16.mxu0 %v188
    %6085 = vmatmul.mubr.bf16.gmra.mxu0 %v187
    %v6086 = vpop.f32.mrf.mxu0
    %v6087 = vadd.f32 %v6047, %v6086
    %v6088 = vpop.f32.mrf.mxu0
    %v6089 = vpop.f32.mrf.mxu0
    %v6090 = vpop.f32.mrf.mxu0
    %6091 = vdwg.mxu0
    %6092 = vmatprep.subr.bf16.mxu0 0
    %6093 = vmatpush1.bf16.msra.mxu0 %v4179
    %6094 = vmatprep.subr.bf16.mxu0 0
    %6095 = vmatpush1.bf16.msra.mxu0 %v4178
    %6096 = vmatprep.subr.bf16.mxu0 0
    %6097 = vmatpush1.bf16.msra.mxu0 %v4177
    %6098 = vmatprep.subr.bf16.mxu0 0
    %6099 = vmatpush1.bf16.msra.mxu0 %v4176
    %6100 = vmatprep.subr.bf16.mxu0 0
    %6101 = vmatpush1.bf16.msra.mxu0 %v4175
    %6102 = vmatprep.subr.bf16.mxu0 0
    %6103 = vmatpush1.bf16.msra.mxu0 %v4174
    %6104 = vmatprep.subr.bf16.mxu0 0
    %6105 = vmatpush1.bf16.msra.mxu0 %v4173
    %6106 = vmatprep.subr.bf16.mxu0 0
    %6107 = vmatpush1.bf16.msra.mxu0 %v4172
    %6108 = vmatprep.subr.bf16.mxu0 0
    %6109 = vmatpush2.bf16.msra.mxu0 %v4187
    %6110 = vmatprep.subr.bf16.mxu0 0
    %6111 = vmatpush2.bf16.msra.mxu0 %v4186
    %6112 = vmatprep.subr.bf16.mxu0 0
    %6113 = vmatpush2.bf16.msra.mxu0 %v4185
    %6114 = vmatprep.subr.bf16.mxu0 0
    %6115 = vmatpush2.bf16.msra.mxu0 %v4184
    %6116 = vmatprep.subr.bf16.mxu0 0
    %6117 = vmatpush2.bf16.msra.mxu0 %v4183
    %6118 = vmatprep.subr.bf16.mxu0 0
    %6119 = vmatpush2.bf16.msra.mxu0 %v4182
    %6120 = vmatprep.subr.bf16.mxu0 0
    %6121 = vmatpush2.bf16.msra.mxu0 %v4181
    %6122 = vmatprep.subr.bf16.mxu0 0
    %6123 = vmatpush2.bf16.msra.mxu0 %v4180
    %6124 = vmatprep.mubr.bf16.mxu0 %v190
    %6125 = vmatmul.mubr.bf16.gmra.mxu0 %v189
    %v6126 = vpop.f32.mrf.mxu0
    %v6127 = vadd.f32 %v6087, %v6126
    %v6128 = vpop.f32.mrf.mxu0
    %v6129 = vpop.f32.mrf.mxu0
    %v6130 = vpop.f32.mrf.mxu0
    %6131 = vdwg.mxu0
    %6132 = vmatprep.subr.bf16.mxu0 0
    %6133 = vmatpush1.bf16.msra.mxu0 %v4195
    %6134 = vmatprep.subr.bf16.mxu0 0
    %6135 = vmatpush1.bf16.msra.mxu0 %v4194
    %6136 = vmatprep.subr.bf16.mxu0 0
    %6137 = vmatpush1.bf16.msra.mxu0 %v4193
    %6138 = vmatprep.subr.bf16.mxu0 0
    %6139 = vmatpush1.bf16.msra.mxu0 %v4192
    %6140 = vmatprep.subr.bf16.mxu0 0
    %6141 = vmatpush1.bf16.msra.mxu0 %v4191
    %6142 = vmatprep.subr.bf16.mxu0 0
    %6143 = vmatpush1.bf16.msra.mxu0 %v4190
    %6144 = vmatprep.subr.bf16.mxu0 0
    %6145 = vmatpush1.bf16.msra.mxu0 %v4189
    %6146 = vmatprep.subr.bf16.mxu0 0
    %6147 = vmatpush1.bf16.msra.mxu0 %v4188
    %6148 = vmatprep.subr.bf16.mxu0 0
    %6149 = vmatpush2.bf16.msra.mxu0 %v4203
    %6150 = vmatprep.subr.bf16.mxu0 0
    %6151 = vmatpush2.bf16.msra.mxu0 %v4202
    %6152 = vmatprep.subr.bf16.mxu0 0
    %6153 = vmatpush2.bf16.msra.mxu0 %v4201
    %6154 = vmatprep.subr.bf16.mxu0 0
    %6155 = vmatpush2.bf16.msra.mxu0 %v4200
    %6156 = vmatprep.subr.bf16.mxu0 0
    %6157 = vmatpush2.bf16.msra.mxu0 %v4199
    %6158 = vmatprep.subr.bf16.mxu0 0
    %6159 = vmatpush2.bf16.msra.mxu0 %v4198
    %6160 = vmatprep.subr.bf16.mxu0 0
    %6161 = vmatpush2.bf16.msra.mxu0 %v4197
    %6162 = vmatprep.subr.bf16.mxu0 0
    %6163 = vmatpush2.bf16.msra.mxu0 %v4196
    %6164 = vmatprep.mubr.bf16.mxu0 %v192
    %6165 = vmatmul.mubr.bf16.gmra.mxu0 %v191
    %v6166 = vpop.f32.mrf.mxu0
    %v6167 = vadd.f32 %v6127, %v6166
    %v6168 = vpop.f32.mrf.mxu0
    %v6169 = vpop.f32.mrf.mxu0
    %v6170 = vpop.f32.mrf.mxu0
    %6171 = vdwg.mxu0
    %6172 = vmatprep.subr.bf16.mxu0 0
    %6173 = vmatpush1.bf16.msra.mxu0 %v4211
    %6174 = vmatprep.subr.bf16.mxu0 0
    %6175 = vmatpush1.bf16.msra.mxu0 %v4210
    %6176 = vmatprep.subr.bf16.mxu0 0
    %6177 = vmatpush1.bf16.msra.mxu0 %v4209
    %6178 = vmatprep.subr.bf16.mxu0 0
    %6179 = vmatpush1.bf16.msra.mxu0 %v4208
    %6180 = vmatprep.subr.bf16.mxu0 0
    %6181 = vmatpush1.bf16.msra.mxu0 %v4207
    %6182 = vmatprep.subr.bf16.mxu0 0
    %6183 = vmatpush1.bf16.msra.mxu0 %v4206
    %6184 = vmatprep.subr.bf16.mxu0 0
    %6185 = vmatpush1.bf16.msra.mxu0 %v4205
    %6186 = vmatprep.subr.bf16.mxu0 0
    %6187 = vmatpush1.bf16.msra.mxu0 %v4204
    %6188 = vmatprep.subr.bf16.mxu0 0
    %6189 = vmatpush2.bf16.msra.mxu0 %v4219
    %6190 = vmatprep.subr.bf16.mxu0 0
    %6191 = vmatpush2.bf16.msra.mxu0 %v4218
    %6192 = vmatprep.subr.bf16.mxu0 0
    %6193 = vmatpush2.bf16.msra.mxu0 %v4217
    %6194 = vmatprep.subr.bf16.mxu0 0
    %6195 = vmatpush2.bf16.msra.mxu0 %v4216
    %6196 = vmatprep.subr.bf16.mxu0 0
    %6197 = vmatpush2.bf16.msra.mxu0 %v4215
    %6198 = vmatprep.subr.bf16.mxu0 0
    %6199 = vmatpush2.bf16.msra.mxu0 %v4214
    %6200 = vmatprep.subr.bf16.mxu0 0
    %6201 = vmatpush2.bf16.msra.mxu0 %v4213
    %6202 = vmatprep.subr.bf16.mxu0 0
    %6203 = vmatpush2.bf16.msra.mxu0 %v4212
    %6204 = vmatprep.mubr.bf16.mxu0 %v194
    %6205 = vmatmul.mubr.bf16.gmra.mxu0 %v193
    %v6206 = vpop.f32.mrf.mxu0
    %v6207 = vadd.f32 %v6167, %v6206
    %v6208 = vpop.f32.mrf.mxu0
    %v6209 = vpop.f32.mrf.mxu0
    %v6210 = vpop.f32.mrf.mxu0
    %6211 = vdwg.mxu0
    %6212 = vmatprep.subr.bf16.mxu0 0
    %6213 = vmatpush1.bf16.msra.mxu0 %v4227
    %6214 = vmatprep.subr.bf16.mxu0 0
    %6215 = vmatpush1.bf16.msra.mxu0 %v4226
    %6216 = vmatprep.subr.bf16.mxu0 0
    %6217 = vmatpush1.bf16.msra.mxu0 %v4225
    %6218 = vmatprep.subr.bf16.mxu0 0
    %6219 = vmatpush1.bf16.msra.mxu0 %v4224
    %6220 = vmatprep.subr.bf16.mxu0 0
    %6221 = vmatpush1.bf16.msra.mxu0 %v4223
    %6222 = vmatprep.subr.bf16.mxu0 0
    %6223 = vmatpush1.bf16.msra.mxu0 %v4222
    %6224 = vmatprep.subr.bf16.mxu0 0
    %6225 = vmatpush1.bf16.msra.mxu0 %v4221
    %6226 = vmatprep.subr.bf16.mxu0 0
    %6227 = vmatpush1.bf16.msra.mxu0 %v4220
    %6228 = vmatprep.subr.bf16.mxu0 0
    %6229 = vmatpush2.bf16.msra.mxu0 %v4235
    %6230 = vmatprep.subr.bf16.mxu0 0
    %6231 = vmatpush2.bf16.msra.mxu0 %v4234
    %6232 = vmatprep.subr.bf16.mxu0 0
    %6233 = vmatpush2.bf16.msra.mxu0 %v4233
    %6234 = vmatprep.subr.bf16.mxu0 0
    %6235 = vmatpush2.bf16.msra.mxu0 %v4232
    %6236 = vmatprep.subr.bf16.mxu0 0
    %6237 = vmatpush2.bf16.msra.mxu0 %v4231
    %6238 = vmatprep.subr.bf16.mxu0 0
    %6239 = vmatpush2.bf16.msra.mxu0 %v4230
    %6240 = vmatprep.subr.bf16.mxu0 0
    %6241 = vmatpush2.bf16.msra.mxu0 %v4229
    %6242 = vmatprep.subr.bf16.mxu0 0
    %6243 = vmatpush2.bf16.msra.mxu0 %v4228
    %6244 = vmatprep.mubr.bf16.mxu0 %v196
    %6245 = vmatmul.mubr.bf16.gmra.mxu0 %v195
    %v6246 = vpop.f32.mrf.mxu0
    %v6247 = vadd.f32 %v6207, %v6246
    %v6248 = vpop.f32.mrf.mxu0
    %v6249 = vpop.f32.mrf.mxu0
    %v6250 = vpop.f32.mrf.mxu0
    %6251 = vdwg.mxu0
    %v6252 = vmax.f32 %v6247, 0.0
    %6253 = vst [vmem:[#allocation8] sm:$0xff] %v6252
    // Predicated region
    $region26: #{net2_forward.1} parent=1 // pred_check
      _
    $region27: #{net2_forward.1} parent=1 // pred_check_branch
      %6255 = sbr.rel (0) target = $region29
    $region28: #{net2_forward.1} parent=1 // pred_region
      %s6257 = ssub.s32 128, 128
      %6258 = vsyncadd [#allocation4], %s6257
      %s6260 = sshll.u32 [#allocation8], 4
      %s6261 = int_to_ptr.vmem [resolvable:$true] %s6260
      %6263 = dma.vmem_to_hbm [thread:$0]  %s6261, 128, %s3, [#allocation4]
    $region29: #{net2_forward.1} parent=1 // pred_fallthru
      _
    // Predicated region
    $region30: #{net2_forward.1} parent=1 // pred_check
      _
    $region31: #{net2_forward.1} parent=1 // pred_check_branch
      %6265 = sbr.rel (0) target = $region33
    $region32: #{net2_forward.1} parent=1 // pred_region
      %6266 = dma.done [#allocation4], 128
    $region33: #{net2_forward.1} parent=1 // pred_fallthru
      _
    %6267 = vsyncpa [#allocation3], 1
    %6268 = vsyncpa [#allocation6], 1
    %6269 = vsyncpa [#allocation4], 1

</llo_original>
